<compile_context>
chip_gen: v5e
topology: v5e:2x2
jax: 0.10.0
libtpu: 0.0.40
codegen_flags: <defaults>
</compile_context>

<pallas_src>
import functools

import jax
import jax.numpy as jnp
from jax import lax
from jax.experimental import pallas as pl
from jax.experimental.pallas import tpu as pltpu


def _round_up(v, m):
    return ((v + m - 1) // m) * m


def _pick_row_tile(H, pad, nb):
    """Divisor of H used as the per-grid-step output row tile."""
    divs = [d for d in range(1, H + 1) if H % d == 0]
    ok = [d for d in divs if d >= max(pad, 4)]
    if not ok:
        return H
    if nb == 1:
        sub = [d for d in ok if d < H]
        if sub:
            ok = sub                 # force >=2 row tiles so both TCs get work

    def score(d):
        # prefer ~8..32-row tiles: big enough to amortize the 2*pad halo restage,
        # small enough to bound scratch / vreg pressure
        return abs(d - 16) if d >= 8 else 1000 - d

    return min(ok, key=score)


def xunit_kernel(x_ref, w_ref, b_ref, o_ref, sh_ref, *, K, pad, TH, RC, Wp, SR):
    """One (packed-image, row-tile) grid step.

    x_ref : (1, H, W, C)           full packed image (resident across the h axis)
    w_ref : (K*K, 1, C)            depthwise taps, row t = dy*K + dx
    b_ref : (1, 1, C)              conv bias
    o_ref : (1, TH, W, C)          output row tile
    sh_ref: (K, TH + 2*pad, W, C)  f32 scratch: sh_ref[dx, p, w, :] =
            relu(x)[row0 - pad + p, w + dx - pad] (zeros outside the image).
    """
    h = pl.program_id(1)
    n_h = pl.num_programs(1)
    W = x_ref.shape[2]
    C = x_ref.shape[3]
    f32 = jnp.float32
    row0 = pl.multiple_of(h * TH, TH)            # first output row of this tile

    # ---- stage relu(x): column-padded + pre-shifted for all K horizontal taps ----
    def stage_block(src_row, n_rows, dst_row):
        xr = jnp.maximum(x_ref[0, pl.ds(src_row, n_rows)], 0.0).astype(f32)  # (n,W,C)
        if Wp > W:
            wide = jnp.concatenate(
                [xr, jnp.zeros((n_rows, Wp - W, C), f32)], axis=1)           # (n,Wp,C)
        else:
            wide = xr
        for dx in range(K):
            s = (pad - dx) % Wp
            shifted = pltpu.roll(wide, s, axis=1) if s else wide
            # aligned offset-0 slice after the XLU roll; zeros land outside [0, W)
            sh_ref[dx, pl.ds(dst_row, n_rows)] = shifted[:, :W, :]

    def stage(src_row, n_rows, dst_row):
        done = 0
        while done < n_rows:                     # static trace-time loop
            nr = min(SR, n_rows - done)
            stage_block(src_row + done, nr, dst_row + done)
            done += nr

    stage(row0, TH, pad)                         # the tile's own rows

    if pad > 0:
        zhalo = jnp.zeros((pad, W, C), f32)

        @pl.when(h == 0)
        def _():                                 # top image border -> zeros
            for dx in range(K):
                sh_ref[dx, pl.ds(0, pad)] = zhalo

        @pl.when(h > 0)
        def _():                                 # top halo from previous rows
            stage(row0 - pad, pad, 0)

        @pl.when(h == n_h - 1)
        def _():                                 # bottom image border -> zeros
            for dx in range(K):
                sh_ref[dx, pl.ds(pad + TH, pad)] = zhalo

        @pl.when(h < n_h - 1)
        def _():                                 # bottom halo from next rows
            stage(row0 + TH, pad, pad + TH)

    # ---- depthwise KxK conv + sigmoid gate + multiply, RC output rows at a time ----
    bvec = b_ref[...]                            # (1, 1, C), hoisted

    def chunk_body(ci, carry):
        c0 = ci * RC
        if not isinstance(c0, int):
            c0 = pl.multiple_of(c0, RC)
        acc = jnp.broadcast_to(bvec, (RC, W, C)).astype(jnp.float32)  # bias folded in
        for dy in range(K):
            for dx in range(K):
                sh = sh_ref[dx, pl.ds(c0 + dy, RC)]       # aligned (RC, W, C) load
                acc = acc + sh * w_ref[dy * K + dx]       # (1, C) lane-aligned tap
        gate = jax.nn.sigmoid(acc)                        # (RC, W, C)
        xrows = x_ref[0, pl.ds(row0 + c0, RC)].astype(jnp.float32)
        o_ref[0, pl.ds(c0, RC)] = (xrows * gate).astype(o_ref.dtype)
        return carry

    n_chunks = TH // RC
    if n_chunks == 1:
        chunk_body(0, 0)
    else:
        lax.fori_loop(0, n_chunks, chunk_body, 0, unroll=n_chunks <= 4)


def xunit_forward(x_nchw, weight_oihw, bias):
    """xUnit forward pass.

    x_nchw      : (N, C, H, W)  float32   (PyTorch NCHW convention)
    weight_oihw : (C, 1, K, K)  float32   (PyTorch depthwise Conv2d weight)
    bias        : (C,)          float32
    """
    N, C, H, W = x_nchw.shape
    K = weight_oihw.shape[-1]
    pad = K // 2

    x_nhwc = jnp.transpose(x_nchw, (0, 2, 3, 1))                        # (N, H, W, C)
    w_flat = jnp.transpose(weight_oihw[:, 0, :, :], (1, 2, 0)).reshape(K * K, 1, C)

    # Lane packing: fold G batch images into channels so the lane axis is 128-dense.
    LANES = 128
    if C % LANES != 0 and LANES % C == 0 and N % (LANES // C) == 0:
        G = LANES // C
    else:
        G = 1
    if G == 1:                                  # already lane-dense (or unpackable)
        Nb, Cp = N, C
        x_pack = x_nhwc
        w_pack = w_flat
        b_pack = bias.reshape(1, 1, C)
    else:
        Nb, Cp = N // G, C * G
        x_pack = (x_nhwc.reshape(Nb, G, H, W, C)
                  .transpose(0, 2, 3, 1, 4)
                  .reshape(Nb, H, W, Cp))
        w_pack = jnp.tile(w_flat, (1, 1, G))                            # (K*K, 1, Cp)
        b_pack = jnp.tile(bias, (G,)).reshape(1, 1, Cp)

    TH = _pick_row_tile(H, pad, Nb)             # output row tile (divides H)
    n_h = H // TH
    Wp = W if pad == 0 else _round_up(W + pad, 8)          # roll width, no wraparound
    rc_cap = max(1, min(8, (8 * 128 * 128) // max(W * Cp, 1)))   # acc <= ~16 vregs
    RC = max(d for d in range(1, TH + 1) if TH % d == 0 and d <= rc_cap)
    SR = max(1, min(8, (16 * 1024) // max(Wp * Cp, 1)))          # staging sub-rows

    # VMEM budget: double-buffered full-image input + row-tile output + shifted scratch.
    blk_in = H * W * Cp * 4
    blk_out = TH * W * Cp * 4
    scratch_bytes = K * (TH + 2 * pad) * W * Cp * 4
    param_bytes = (K * K + 1) * Cp * 4
    vmem_need = 2 * blk_in + 2 * blk_out + scratch_bytes + 2 * param_bytes
    try:
        vmem_cap = pltpu.get_tpu_info().vmem_capacity_bytes
    except Exception:
        vmem_cap = 64 << 20
    vmem_limit = int(min(max(vmem_need + (4 << 20), 32 << 20),
                         max(vmem_cap - (16 << 20), 32 << 20)))

    out_pack = pl.pallas_call(
        functools.partial(xunit_kernel, K=K, pad=pad, TH=TH, RC=RC, Wp=Wp, SR=SR),
        out_shape=jax.ShapeDtypeStruct((Nb, H, W, Cp), x_pack.dtype),
        grid_spec=pltpu.PrefetchScalarGridSpec(
            num_scalar_prefetch=0,
            grid=(Nb, n_h),
            in_specs=[
                pl.BlockSpec((1, H, W, Cp), lambda n, h: (n, 0, 0, 0)),
                pl.BlockSpec((K * K, 1, Cp), lambda n, h: (0, 0, 0)),
                pl.BlockSpec((1, 1, Cp), lambda n, h: (0, 0, 0)),
            ],
            out_specs=pl.BlockSpec((1, TH, W, Cp), lambda n, h: (n, h, 0, 0)),
            scratch_shapes=[pltpu.VMEM((K, TH + 2 * pad, W, Cp), jnp.float32)],
        ),
        compiler_params=pltpu.CompilerParams(
            dimension_semantics=("parallel", "parallel"),
            vmem_limit_bytes=vmem_limit,
        ),
    )(x_pack, w_pack, b_pack)

    if G == 1:
        out_nhwc = out_pack
    else:
        out_nhwc = (out_pack.reshape(Nb, H, W, G, C)
                    .transpose(0, 3, 1, 2, 4)
                    .reshape(N, H, W, C))
    return jnp.transpose(out_nhwc, (0, 3, 1, 2))                        # back to NCHW


def xunit_reference(x_nchw, weight_oihw, bias):
    """Pure-JAX reference (mirrors the PyTorch module exactly, batch_norm=False)."""
    C = x_nchw.shape[1]
    K = weight_oihw.shape[-1]
    p = K // 2
    xr = jnp.maximum(x_nchw, 0.0)
    conv = jax.lax.conv_general_dilated(
        xr, weight_oihw,
        window_strides=(1, 1),
        padding=((p, p), (p, p)),
        dimension_numbers=("NCHW", "OIHW", "NCHW"),
        feature_group_count=C,
    )
    a = jax.nn.sigmoid(conv + bias[None, :, None, None])
    return x_nchw * a


if __name__ == "__main__":
    # Deterministic setup consistent with xUnit(num_features=64, kernel_size=7).
    N, C, H, W = 2, 64, 16, 16
    K = 7

    key = jax.random.PRNGKey(0)
    kx, kw, kb = jax.random.split(key, 3)
    x = jax.random.normal(kx, (N, C, H, W), dtype=jnp.float32)
    weight = 0.1 * jax.random.normal(kw, (C, 1, K, K), dtype=jnp.float32)
    bias = 0.1 * jax.random.normal(kb, (C,), dtype=jnp.float32)

    y = xunit_forward(x, weight, bias)
    y = jax.block_until_ready(y)

    y_ref = jax.block_until_ready(xunit_reference(x, weight, bias))
    assert y.shape == (N, C, H, W)
    assert jnp.allclose(y, y_ref, atol=1e-5, rtol=1e-5), "mismatch vs reference"

    print("KERNEL_OK")
</pallas_src>

<mosaic_0001>
module attributes {stable_mosaic.version = 11 : i64} {
  func.func @xunit_kernel(%arg0: i32, %arg1: i32, %arg2: memref<1x16x16x128xf32, #tpu.memory_space<vmem>>, %arg3: memref<49x1x128xf32, #tpu.memory_space<vmem>>, %arg4: memref<1x1x128xf32, #tpu.memory_space<vmem>>, %arg5: memref<1x8x16x128xf32, #tpu.memory_space<vmem>>, %arg6: memref<7x14x16x128xf32, #tpu.memory_space<vmem>>) attributes {dimension_semantics = [#tpu.dimension_semantics<parallel>, #tpu.dimension_semantics<parallel>], iteration_bounds = array<i64: 1, 2>, scalar_prefetch = 0 : i64, scratch_operands = 1 : i64, tpu.core_type = #tpu.core_type<tc>, window_params = [{transform_indices = @transform_0, window_bounds = array<i64: 1, 16, 16, 128>}, {pipeline_mode = #tpu.pipeline_mode<synchronous>, transform_indices = @transform_1, window_bounds = array<i64: 49, 1, 128>}, {pipeline_mode = #tpu.pipeline_mode<synchronous>, transform_indices = @transform_2, window_bounds = array<i64: 1, 1, 128>}, {transform_indices = @transform_3, window_bounds = array<i64: 1, 8, 16, 128>}]} {
    %c8_i32 = arith.constant 8 : i32
    %0 = arith.muli %arg1, %c8_i32 : i32
    %1 = tpu.assume_multiple %0, 8 : i32
    %c0_i32 = arith.constant 0 : i32
    %2 = arith.addi %1, %c0_i32 : i32
    %c0 = arith.constant 0 : index
    %3 = arith.index_cast %2 : i32 to index
    %c0_0 = arith.constant 0 : index
    %c0_1 = arith.constant 0 : index
    %4 = vector.load %arg2[%c0, %3, %c0_0, %c0_1] : memref<1x16x16x128xf32, #tpu.memory_space<vmem>>, vector<1x5x16x128xf32>
    %5 = vector.shape_cast %4 : vector<1x5x16x128xf32> to vector<5x16x128xf32>
    %cst = arith.constant 0.000000e+00 : f32
    %6 = vector.broadcast %cst : f32 to vector<5x16x128xf32>
    %7 = arith.maximumf %5, %6 : vector<5x16x128xf32>
    %cst_2 = arith.constant 0.000000e+00 : f32
    %8 = vector.broadcast %cst_2 : f32 to vector<5x8x128xf32>
    %9 = tpu.concatenate %7, %8 in 1 : vector<5x16x128xf32>, vector<5x8x128xf32> -> vector<5x24x128xf32>
    %c3_i32 = arith.constant 3 : i32
    %10 = tpu.dynamic_rotate %9 by %c3_i32 dim 1 : vector<5x24x128xf32>, i32 -> vector<5x24x128xf32>
    %11 = vector.extract_strided_slice %10 {offsets = [0, 0, 0], sizes = [5, 16, 128], strides = [1, 1, 1]} : vector<5x24x128xf32> to vector<5x16x128xf32>
    %c0_3 = arith.constant 0 : index
    %c3 = arith.constant 3 : index
    %c0_4 = arith.constant 0 : index
    %c0_5 = arith.constant 0 : index
    %12 = vector.load %arg6[%c0_3, %c3, %c0_4, %c0_5] : memref<7x14x16x128xf32, #tpu.memory_space<vmem>>, vector<1x5x16x128xf32>
    %13 = vector.shape_cast %12 : vector<1x5x16x128xf32> to vector<5x16x128xf32>
    %14 = vector.shape_cast %11 : vector<5x16x128xf32> to vector<1x5x16x128xf32>
    tpu.vector_store %arg6[%c0_3, %c3, %c0_4, %c0_5], %14 {strides = array<i32>} : memref<7x14x16x128xf32, #tpu.memory_space<vmem>>, vector<1x5x16x128xf32>,
    %c2_i32 = arith.constant 2 : i32
    %15 = tpu.dynamic_rotate %9 by %c2_i32 dim 1 : vector<5x24x128xf32>, i32 -> vector<5x24x128xf32>
    %16 = vector.extract_strided_slice %15 {offsets = [0, 0, 0], sizes = [5, 16, 128], strides = [1, 1, 1]} : vector<5x24x128xf32> to vector<5x16x128xf32>
    %c1 = arith.constant 1 : index
    %c3_6 = arith.constant 3 : index
    %c0_7 = arith.constant 0 : index
    %c0_8 = arith.constant 0 : index
    %17 = vector.load %arg6[%c1, %c3_6, %c0_7, %c0_8] : memref<7x14x16x128xf32, #tpu.memory_space<vmem>>, vector<1x5x16x128xf32>
    %18 = vector.shape_cast %17 : vector<1x5x16x128xf32> to vector<5x16x128xf32>
    %19 = vector.shape_cast %16 : vector<5x16x128xf32> to vector<1x5x16x128xf32>
    tpu.vector_store %arg6[%c1, %c3_6, %c0_7, %c0_8], %19 {strides = array<i32>} : memref<7x14x16x128xf32, #tpu.memory_space<vmem>>, vector<1x5x16x128xf32>,
    %c1_i32 = arith.constant 1 : i32
    %20 = tpu.dynamic_rotate %9 by %c1_i32 dim 1 : vector<5x24x128xf32>, i32 -> vector<5x24x128xf32>
    %21 = vector.extract_strided_slice %20 {offsets = [0, 0, 0], sizes = [5, 16, 128], strides = [1, 1, 1]} : vector<5x24x128xf32> to vector<5x16x128xf32>
    %c2 = arith.constant 2 : index
    %c3_9 = arith.constant 3 : index
    %c0_10 = arith.constant 0 : index
    %c0_11 = arith.constant 0 : index
    %22 = vector.load %arg6[%c2, %c3_9, %c0_10, %c0_11] : memref<7x14x16x128xf32, #tpu.memory_space<vmem>>, vector<1x5x16x128xf32>
    %23 = vector.shape_cast %22 : vector<1x5x16x128xf32> to vector<5x16x128xf32>
    %24 = vector.shape_cast %21 : vector<5x16x128xf32> to vector<1x5x16x128xf32>
    tpu.vector_store %arg6[%c2, %c3_9, %c0_10, %c0_11], %24 {strides = array<i32>} : memref<7x14x16x128xf32, #tpu.memory_space<vmem>>, vector<1x5x16x128xf32>,
    %25 = vector.extract_strided_slice %9 {offsets = [0, 0, 0], sizes = [5, 16, 128], strides = [1, 1, 1]} : vector<5x24x128xf32> to vector<5x16x128xf32>
    %c3_12 = arith.constant 3 : index
    %c3_13 = arith.constant 3 : index
    %c0_14 = arith.constant 0 : index
    %c0_15 = arith.constant 0 : index
    %26 = vector.load %arg6[%c3_12, %c3_13, %c0_14, %c0_15] : memref<7x14x16x128xf32, #tpu.memory_space<vmem>>, vector<1x5x16x128xf32>
    %27 = vector.shape_cast %26 : vector<1x5x16x128xf32> to vector<5x16x128xf32>
    %28 = vector.shape_cast %25 : vector<5x16x128xf32> to vector<1x5x16x128xf32>
    tpu.vector_store %arg6[%c3_12, %c3_13, %c0_14, %c0_15], %28 {strides = array<i32>} : memref<7x14x16x128xf32, #tpu.memory_space<vmem>>, vector<1x5x16x128xf32>,
    %c23_i32 = arith.constant 23 : i32
    %29 = tpu.dynamic_rotate %9 by %c23_i32 dim 1 : vector<5x24x128xf32>, i32 -> vector<5x24x128xf32>
    %30 = vector.extract_strided_slice %29 {offsets = [0, 0, 0], sizes = [5, 16, 128], strides = [1, 1, 1]} : vector<5x24x128xf32> to vector<5x16x128xf32>
    %c4 = arith.constant 4 : index
    %c3_16 = arith.constant 3 : index
    %c0_17 = arith.constant 0 : index
    %c0_18 = arith.constant 0 : index
    %31 = vector.load %arg6[%c4, %c3_16, %c0_17, %c0_18] : memref<7x14x16x128xf32, #tpu.memory_space<vmem>>, vector<1x5x16x128xf32>
    %32 = vector.shape_cast %31 : vector<1x5x16x128xf32> to vector<5x16x128xf32>
    %33 = vector.shape_cast %30 : vector<5x16x128xf32> to vector<1x5x16x128xf32>
    tpu.vector_store %arg6[%c4, %c3_16, %c0_17, %c0_18], %33 {strides = array<i32>} : memref<7x14x16x128xf32, #tpu.memory_space<vmem>>, vector<1x5x16x128xf32>,
    %c22_i32 = arith.constant 22 : i32
    %34 = tpu.dynamic_rotate %9 by %c22_i32 dim 1 : vector<5x24x128xf32>, i32 -> vector<5x24x128xf32>
    %35 = vector.extract_strided_slice %34 {offsets = [0, 0, 0], sizes = [5, 16, 128], strides = [1, 1, 1]} : vector<5x24x128xf32> to vector<5x16x128xf32>
    %c5 = arith.constant 5 : index
    %c3_19 = arith.constant 3 : index
    %c0_20 = arith.constant 0 : index
    %c0_21 = arith.constant 0 : index
    %36 = vector.load %arg6[%c5, %c3_19, %c0_20, %c0_21] : memref<7x14x16x128xf32, #tpu.memory_space<vmem>>, vector<1x5x16x128xf32>
    %37 = vector.shape_cast %36 : vector<1x5x16x128xf32> to vector<5x16x128xf32>
    %38 = vector.shape_cast %35 : vector<5x16x128xf32> to vector<1x5x16x128xf32>
    tpu.vector_store %arg6[%c5, %c3_19, %c0_20, %c0_21], %38 {strides = array<i32>} : memref<7x14x16x128xf32, #tpu.memory_space<vmem>>, vector<1x5x16x128xf32>,
    %c21_i32 = arith.constant 21 : i32
    %39 = tpu.dynamic_rotate %9 by %c21_i32 dim 1 : vector<5x24x128xf32>, i32 -> vector<5x24x128xf32>
    %40 = vector.extract_strided_slice %39 {offsets = [0, 0, 0], sizes = [5, 16, 128], strides = [1, 1, 1]} : vector<5x24x128xf32> to vector<5x16x128xf32>
    %c6 = arith.constant 6 : index
    %c3_22 = arith.constant 3 : index
    %c0_23 = arith.constant 0 : index
    %c0_24 = arith.constant 0 : index
    %41 = vector.load %arg6[%c6, %c3_22, %c0_23, %c0_24] : memref<7x14x16x128xf32, #tpu.memory_space<vmem>>, vector<1x5x16x128xf32>
    %42 = vector.shape_cast %41 : vector<1x5x16x128xf32> to vector<5x16x128xf32>
    %43 = vector.shape_cast %40 : vector<5x16x128xf32> to vector<1x5x16x128xf32>
    tpu.vector_store %arg6[%c6, %c3_22, %c0_23, %c0_24], %43 {strides = array<i32>} : memref<7x14x16x128xf32, #tpu.memory_space<vmem>>, vector<1x5x16x128xf32>,
    %c5_i32 = arith.constant 5 : i32
    %44 = arith.addi %1, %c5_i32 : i32
    %c0_25 = arith.constant 0 : index
    %45 = arith.index_cast %44 : i32 to index
    %c0_26 = arith.constant 0 : index
    %c0_27 = arith.constant 0 : index
    %46 = vector.load %arg2[%c0_25, %45, %c0_26, %c0_27] : memref<1x16x16x128xf32, #tpu.memory_space<vmem>>, vector<1x3x16x128xf32>
    %47 = vector.shape_cast %46 : vector<1x3x16x128xf32> to vector<3x16x128xf32>
    %cst_28 = arith.constant 0.000000e+00 : f32
    %48 = vector.broadcast %cst_28 : f32 to vector<3x16x128xf32>
    %49 = arith.maximumf %47, %48 : vector<3x16x128xf32>
    %cst_29 = arith.constant 0.000000e+00 : f32
    %50 = vector.broadcast %cst_29 : f32 to vector<3x8x128xf32>
    %51 = tpu.concatenate %49, %50 in 1 : vector<3x16x128xf32>, vector<3x8x128xf32> -> vector<3x24x128xf32>
    %c3_i32_30 = arith.constant 3 : i32
    %52 = tpu.dynamic_rotate %51 by %c3_i32_30 dim 1 : vector<3x24x128xf32>, i32 -> vector<3x24x128xf32>
    %53 = vector.extract_strided_slice %52 {offsets = [0, 0, 0], sizes = [3, 16, 128], strides = [1, 1, 1]} : vector<3x24x128xf32> to vector<3x16x128xf32>
    %c0_31 = arith.constant 0 : index
    %c8 = arith.constant 8 : index
    %c0_32 = arith.constant 0 : index
    %c0_33 = arith.constant 0 : index
    %54 = vector.load %arg6[%c0_31, %c8, %c0_32, %c0_33] : memref<7x14x16x128xf32, #tpu.memory_space<vmem>>, vector<1x3x16x128xf32>
    %55 = vector.shape_cast %54 : vector<1x3x16x128xf32> to vector<3x16x128xf32>
    %56 = vector.shape_cast %53 : vector<3x16x128xf32> to vector<1x3x16x128xf32>
    tpu.vector_store %arg6[%c0_31, %c8, %c0_32, %c0_33], %56 {strides = array<i32>} : memref<7x14x16x128xf32, #tpu.memory_space<vmem>>, vector<1x3x16x128xf32>,
    %c2_i32_34 = arith.constant 2 : i32
    %57 = tpu.dynamic_rotate %51 by %c2_i32_34 dim 1 : vector<3x24x128xf32>, i32 -> vector<3x24x128xf32>
    %58 = vector.extract_strided_slice %57 {offsets = [0, 0, 0], sizes = [3, 16, 128], strides = [1, 1, 1]} : vector<3x24x128xf32> to vector<3x16x128xf32>
    %c1_35 = arith.constant 1 : index
    %c8_36 = arith.constant 8 : index
    %c0_37 = arith.constant 0 : index
    %c0_38 = arith.constant 0 : index
    %59 = vector.load %arg6[%c1_35, %c8_36, %c0_37, %c0_38] : memref<7x14x16x128xf32, #tpu.memory_space<vmem>>, vector<1x3x16x128xf32>
    %60 = vector.shape_cast %59 : vector<1x3x16x128xf32> to vector<3x16x128xf32>
    %61 = vector.shape_cast %58 : vector<3x16x128xf32> to vector<1x3x16x128xf32>
    tpu.vector_store %arg6[%c1_35, %c8_36, %c0_37, %c0_38], %61 {strides = array<i32>} : memref<7x14x16x128xf32, #tpu.memory_space<vmem>>, vector<1x3x16x128xf32>,
    %c1_i32_39 = arith.constant 1 : i32
    %62 = tpu.dynamic_rotate %51 by %c1_i32_39 dim 1 : vector<3x24x128xf32>, i32 -> vector<3x24x128xf32>
    %63 = vector.extract_strided_slice %62 {offsets = [0, 0, 0], sizes = [3, 16, 128], strides = [1, 1, 1]} : vector<3x24x128xf32> to vector<3x16x128xf32>
    %c2_40 = arith.constant 2 : index
    %c8_41 = arith.constant 8 : index
    %c0_42 = arith.constant 0 : index
    %c0_43 = arith.constant 0 : index
    %64 = vector.load %arg6[%c2_40, %c8_41, %c0_42, %c0_43] : memref<7x14x16x128xf32, #tpu.memory_space<vmem>>, vector<1x3x16x128xf32>
    %65 = vector.shape_cast %64 : vector<1x3x16x128xf32> to vector<3x16x128xf32>
    %66 = vector.shape_cast %63 : vector<3x16x128xf32> to vector<1x3x16x128xf32>
    tpu.vector_store %arg6[%c2_40, %c8_41, %c0_42, %c0_43], %66 {strides = array<i32>} : memref<7x14x16x128xf32, #tpu.memory_space<vmem>>, vector<1x3x16x128xf32>,
    %67 = vector.extract_strided_slice %51 {offsets = [0, 0, 0], sizes = [3, 16, 128], strides = [1, 1, 1]} : vector<3x24x128xf32> to vector<3x16x128xf32>
    %c3_44 = arith.constant 3 : index
    %c8_45 = arith.constant 8 : index
    %c0_46 = arith.constant 0 : index
    %c0_47 = arith.constant 0 : index
    %68 = vector.load %arg6[%c3_44, %c8_45, %c0_46, %c0_47] : memref<7x14x16x128xf32, #tpu.memory_space<vmem>>, vector<1x3x16x128xf32>
    %69 = vector.shape_cast %68 : vector<1x3x16x128xf32> to vector<3x16x128xf32>
    %70 = vector.shape_cast %67 : vector<3x16x128xf32> to vector<1x3x16x128xf32>
    tpu.vector_store %arg6[%c3_44, %c8_45, %c0_46, %c0_47], %70 {strides = array<i32>} : memref<7x14x16x128xf32, #tpu.memory_space<vmem>>, vector<1x3x16x128xf32>,
    %c23_i32_48 = arith.constant 23 : i32
    %71 = tpu.dynamic_rotate %51 by %c23_i32_48 dim 1 : vector<3x24x128xf32>, i32 -> vector<3x24x128xf32>
    %72 = vector.extract_strided_slice %71 {offsets = [0, 0, 0], sizes = [3, 16, 128], strides = [1, 1, 1]} : vector<3x24x128xf32> to vector<3x16x128xf32>
    %c4_49 = arith.constant 4 : index
    %c8_50 = arith.constant 8 : index
    %c0_51 = arith.constant 0 : index
    %c0_52 = arith.constant 0 : index
    %73 = vector.load %arg6[%c4_49, %c8_50, %c0_51, %c0_52] : memref<7x14x16x128xf32, #tpu.memory_space<vmem>>, vector<1x3x16x128xf32>
    %74 = vector.shape_cast %73 : vector<1x3x16x128xf32> to vector<3x16x128xf32>
    %75 = vector.shape_cast %72 : vector<3x16x128xf32> to vector<1x3x16x128xf32>
    tpu.vector_store %arg6[%c4_49, %c8_50, %c0_51, %c0_52], %75 {strides = array<i32>} : memref<7x14x16x128xf32, #tpu.memory_space<vmem>>, vector<1x3x16x128xf32>,
    %c22_i32_53 = arith.constant 22 : i32
    %76 = tpu.dynamic_rotate %51 by %c22_i32_53 dim 1 : vector<3x24x128xf32>, i32 -> vector<3x24x128xf32>
    %77 = vector.extract_strided_slice %76 {offsets = [0, 0, 0], sizes = [3, 16, 128], strides = [1, 1, 1]} : vector<3x24x128xf32> to vector<3x16x128xf32>
    %c5_54 = arith.constant 5 : index
    %c8_55 = arith.constant 8 : index
    %c0_56 = arith.constant 0 : index
    %c0_57 = arith.constant 0 : index
    %78 = vector.load %arg6[%c5_54, %c8_55, %c0_56, %c0_57] : memref<7x14x16x128xf32, #tpu.memory_space<vmem>>, vector<1x3x16x128xf32>
    %79 = vector.shape_cast %78 : vector<1x3x16x128xf32> to vector<3x16x128xf32>
    %80 = vector.shape_cast %77 : vector<3x16x128xf32> to vector<1x3x16x128xf32>
    tpu.vector_store %arg6[%c5_54, %c8_55, %c0_56, %c0_57], %80 {strides = array<i32>} : memref<7x14x16x128xf32, #tpu.memory_space<vmem>>, vector<1x3x16x128xf32>,
    %c21_i32_58 = arith.constant 21 : i32
    %81 = tpu.dynamic_rotate %51 by %c21_i32_58 dim 1 : vector<3x24x128xf32>, i32 -> vector<3x24x128xf32>
    %82 = vector.extract_strided_slice %81 {offsets = [0, 0, 0], sizes = [3, 16, 128], strides = [1, 1, 1]} : vector<3x24x128xf32> to vector<3x16x128xf32>
    %c6_59 = arith.constant 6 : index
    %c8_60 = arith.constant 8 : index
    %c0_61 = arith.constant 0 : index
    %c0_62 = arith.constant 0 : index
    %83 = vector.load %arg6[%c6_59, %c8_60, %c0_61, %c0_62] : memref<7x14x16x128xf32, #tpu.memory_space<vmem>>, vector<1x3x16x128xf32>
    %84 = vector.shape_cast %83 : vector<1x3x16x128xf32> to vector<3x16x128xf32>
    %85 = vector.shape_cast %82 : vector<3x16x128xf32> to vector<1x3x16x128xf32>
    tpu.vector_store %arg6[%c6_59, %c8_60, %c0_61, %c0_62], %85 {strides = array<i32>} : memref<7x14x16x128xf32, #tpu.memory_space<vmem>>, vector<1x3x16x128xf32>,
    %cst_63 = arith.constant 0.000000e+00 : f32
    %86 = vector.broadcast %cst_63 : f32 to vector<3x16x128xf32>
    %c0_i32_64 = arith.constant 0 : i32
    %87 = arith.cmpi eq, %arg1, %c0_i32_64 : i32
    %88 = arith.extui %87 : i1 to i32
    %c0_i32_65 = arith.constant 0 : i32
    %89 = arith.cmpi ne, %88, %c0_i32_65 : i32
    scf.if %89 {
      %c0_386 = arith.constant 0 : index
      %c0_387 = arith.constant 0 : index
      %c0_388 = arith.constant 0 : index
      %c0_389 = arith.constant 0 : index
      %507 = vector.load %arg6[%c0_386, %c0_387, %c0_388, %c0_389] : memref<7x14x16x128xf32, #tpu.memory_space<vmem>>, vector<1x3x16x128xf32>
      %508 = vector.shape_cast %507 : vector<1x3x16x128xf32> to vector<3x16x128xf32>
      %509 = vector.shape_cast %86 : vector<3x16x128xf32> to vector<1x3x16x128xf32>
      tpu.vector_store %arg6[%c0_386, %c0_387, %c0_388, %c0_389], %509 {strides = array<i32>} : memref<7x14x16x128xf32, #tpu.memory_space<vmem>>, vector<1x3x16x128xf32>,
      %c1_390 = arith.constant 1 : index
      %c0_391 = arith.constant 0 : index
      %c0_392 = arith.constant 0 : index
      %c0_393 = arith.constant 0 : index
      %510 = vector.load %arg6[%c1_390, %c0_391, %c0_392, %c0_393] : memref<7x14x16x128xf32, #tpu.memory_space<vmem>>, vector<1x3x16x128xf32>
      %511 = vector.shape_cast %510 : vector<1x3x16x128xf32> to vector<3x16x128xf32>
      %512 = vector.shape_cast %86 : vector<3x16x128xf32> to vector<1x3x16x128xf32>
      tpu.vector_store %arg6[%c1_390, %c0_391, %c0_392, %c0_393], %512 {strides = array<i32>} : memref<7x14x16x128xf32, #tpu.memory_space<vmem>>, vector<1x3x16x128xf32>,
      %c2_394 = arith.constant 2 : index
      %c0_395 = arith.constant 0 : index
      %c0_396 = arith.constant 0 : index
      %c0_397 = arith.constant 0 : index
      %513 = vector.load %arg6[%c2_394, %c0_395, %c0_396, %c0_397] : memref<7x14x16x128xf32, #tpu.memory_space<vmem>>, vector<1x3x16x128xf32>
      %514 = vector.shape_cast %513 : vector<1x3x16x128xf32> to vector<3x16x128xf32>
      %515 = vector.shape_cast %86 : vector<3x16x128xf32> to vector<1x3x16x128xf32>
      tpu.vector_store %arg6[%c2_394, %c0_395, %c0_396, %c0_397], %515 {strides = array<i32>} : memref<7x14x16x128xf32, #tpu.memory_space<vmem>>, vector<1x3x16x128xf32>,
      %c3_398 = arith.constant 3 : index
      %c0_399 = arith.constant 0 : index
      %c0_400 = arith.constant 0 : index
      %c0_401 = arith.constant 0 : index
      %516 = vector.load %arg6[%c3_398, %c0_399, %c0_400, %c0_401] : memref<7x14x16x128xf32, #tpu.memory_space<vmem>>, vector<1x3x16x128xf32>
      %517 = vector.shape_cast %516 : vector<1x3x16x128xf32> to vector<3x16x128xf32>
      %518 = vector.shape_cast %86 : vector<3x16x128xf32> to vector<1x3x16x128xf32>
      tpu.vector_store %arg6[%c3_398, %c0_399, %c0_400, %c0_401], %518 {strides = array<i32>} : memref<7x14x16x128xf32, #tpu.memory_space<vmem>>, vector<1x3x16x128xf32>,
      %c4_402 = arith.constant 4 : index
      %c0_403 = arith.constant 0 : index
      %c0_404 = arith.constant 0 : index
      %c0_405 = arith.constant 0 : index
      %519 = vector.load %arg6[%c4_402, %c0_403, %c0_404, %c0_405] : memref<7x14x16x128xf32, #tpu.memory_space<vmem>>, vector<1x3x16x128xf32>
      %520 = vector.shape_cast %519 : vector<1x3x16x128xf32> to vector<3x16x128xf32>
      %521 = vector.shape_cast %86 : vector<3x16x128xf32> to vector<1x3x16x128xf32>
      tpu.vector_store %arg6[%c4_402, %c0_403, %c0_404, %c0_405], %521 {strides = array<i32>} : memref<7x14x16x128xf32, #tpu.memory_space<vmem>>, vector<1x3x16x128xf32>,
      %c5_406 = arith.constant 5 : index
      %c0_407 = arith.constant 0 : index
      %c0_408 = arith.constant 0 : index
      %c0_409 = arith.constant 0 : index
      %522 = vector.load %arg6[%c5_406, %c0_407, %c0_408, %c0_409] : memref<7x14x16x128xf32, #tpu.memory_space<vmem>>, vector<1x3x16x128xf32>
      %523 = vector.shape_cast %522 : vector<1x3x16x128xf32> to vector<3x16x128xf32>
      %524 = vector.shape_cast %86 : vector<3x16x128xf32> to vector<1x3x16x128xf32>
      tpu.vector_store %arg6[%c5_406, %c0_407, %c0_408, %c0_409], %524 {strides = array<i32>} : memref<7x14x16x128xf32, #tpu.memory_space<vmem>>, vector<1x3x16x128xf32>,
      %c6_410 = arith.constant 6 : index
      %c0_411 = arith.constant 0 : index
      %c0_412 = arith.constant 0 : index
      %c0_413 = arith.constant 0 : index
      %525 = vector.load %arg6[%c6_410, %c0_411, %c0_412, %c0_413] : memref<7x14x16x128xf32, #tpu.memory_space<vmem>>, vector<1x3x16x128xf32>
      %526 = vector.shape_cast %525 : vector<1x3x16x128xf32> to vector<3x16x128xf32>
      %527 = vector.shape_cast %86 : vector<3x16x128xf32> to vector<1x3x16x128xf32>
      tpu.vector_store %arg6[%c6_410, %c0_411, %c0_412, %c0_413], %527 {strides = array<i32>} : memref<7x14x16x128xf32, #tpu.memory_space<vmem>>, vector<1x3x16x128xf32>,
    } else {
    }
    %c0_i32_66 = arith.constant 0 : i32
    %90 = arith.cmpi sgt, %arg1, %c0_i32_66 : i32
    %91 = arith.extui %90 : i1 to i32
    %c0_i32_67 = arith.constant 0 : i32
    %92 = arith.cmpi ne, %91, %c0_i32_67 : i32
    scf.if %92 {
      %c3_i32_386 = arith.constant 3 : i32
      %507 = arith.subi %1, %c3_i32_386 : i32
      %c0_i32_387 = arith.constant 0 : i32
      %508 = arith.addi %507, %c0_i32_387 : i32
      %c0_388 = arith.constant 0 : index
      %509 = arith.index_cast %508 : i32 to index
      %c0_389 = arith.constant 0 : index
      %c0_390 = arith.constant 0 : index
      %510 = vector.load %arg2[%c0_388, %509, %c0_389, %c0_390] : memref<1x16x16x128xf32, #tpu.memory_space<vmem>>, vector<1x3x16x128xf32>
      %511 = vector.shape_cast %510 : vector<1x3x16x128xf32> to vector<3x16x128xf32>
      %cst_391 = arith.constant 0.000000e+00 : f32
      %512 = vector.broadcast %cst_391 : f32 to vector<3x16x128xf32>
      %513 = arith.maximumf %511, %512 : vector<3x16x128xf32>
      %cst_392 = arith.constant 0.000000e+00 : f32
      %514 = vector.broadcast %cst_392 : f32 to vector<3x8x128xf32>
      %515 = tpu.concatenate %513, %514 in 1 : vector<3x16x128xf32>, vector<3x8x128xf32> -> vector<3x24x128xf32>
      %c3_i32_393 = arith.constant 3 : i32
      %516 = tpu.dynamic_rotate %515 by %c3_i32_393 dim 1 : vector<3x24x128xf32>, i32 -> vector<3x24x128xf32>
      %517 = vector.extract_strided_slice %516 {offsets = [0, 0, 0], sizes = [3, 16, 128], strides = [1, 1, 1]} : vector<3x24x128xf32> to vector<3x16x128xf32>
      %c0_394 = arith.constant 0 : index
      %c0_395 = arith.constant 0 : index
      %c0_396 = arith.constant 0 : index
      %c0_397 = arith.constant 0 : index
      %518 = vector.load %arg6[%c0_394, %c0_395, %c0_396, %c0_397] : memref<7x14x16x128xf32, #tpu.memory_space<vmem>>, vector<1x3x16x128xf32>
      %519 = vector.shape_cast %518 : vector<1x3x16x128xf32> to vector<3x16x128xf32>
      %520 = vector.shape_cast %517 : vector<3x16x128xf32> to vector<1x3x16x128xf32>
      tpu.vector_store %arg6[%c0_394, %c0_395, %c0_396, %c0_397], %520 {strides = array<i32>} : memref<7x14x16x128xf32, #tpu.memory_space<vmem>>, vector<1x3x16x128xf32>,
      %c2_i32_398 = arith.constant 2 : i32
      %521 = tpu.dynamic_rotate %515 by %c2_i32_398 dim 1 : vector<3x24x128xf32>, i32 -> vector<3x24x128xf32>
      %522 = vector.extract_strided_slice %521 {offsets = [0, 0, 0], sizes = [3, 16, 128], strides = [1, 1, 1]} : vector<3x24x128xf32> to vector<3x16x128xf32>
      %c1_399 = arith.constant 1 : index
      %c0_400 = arith.constant 0 : index
      %c0_401 = arith.constant 0 : index
      %c0_402 = arith.constant 0 : index
      %523 = vector.load %arg6[%c1_399, %c0_400, %c0_401, %c0_402] : memref<7x14x16x128xf32, #tpu.memory_space<vmem>>, vector<1x3x16x128xf32>
      %524 = vector.shape_cast %523 : vector<1x3x16x128xf32> to vector<3x16x128xf32>
      %525 = vector.shape_cast %522 : vector<3x16x128xf32> to vector<1x3x16x128xf32>
      tpu.vector_store %arg6[%c1_399, %c0_400, %c0_401, %c0_402], %525 {strides = array<i32>} : memref<7x14x16x128xf32, #tpu.memory_space<vmem>>, vector<1x3x16x128xf32>,
      %c1_i32_403 = arith.constant 1 : i32
      %526 = tpu.dynamic_rotate %515 by %c1_i32_403 dim 1 : vector<3x24x128xf32>, i32 -> vector<3x24x128xf32>
      %527 = vector.extract_strided_slice %526 {offsets = [0, 0, 0], sizes = [3, 16, 128], strides = [1, 1, 1]} : vector<3x24x128xf32> to vector<3x16x128xf32>
      %c2_404 = arith.constant 2 : index
      %c0_405 = arith.constant 0 : index
      %c0_406 = arith.constant 0 : index
      %c0_407 = arith.constant 0 : index
      %528 = vector.load %arg6[%c2_404, %c0_405, %c0_406, %c0_407] : memref<7x14x16x128xf32, #tpu.memory_space<vmem>>, vector<1x3x16x128xf32>
      %529 = vector.shape_cast %528 : vector<1x3x16x128xf32> to vector<3x16x128xf32>
      %530 = vector.shape_cast %527 : vector<3x16x128xf32> to vector<1x3x16x128xf32>
      tpu.vector_store %arg6[%c2_404, %c0_405, %c0_406, %c0_407], %530 {strides = array<i32>} : memref<7x14x16x128xf32, #tpu.memory_space<vmem>>, vector<1x3x16x128xf32>,
      %531 = vector.extract_strided_slice %515 {offsets = [0, 0, 0], sizes = [3, 16, 128], strides = [1, 1, 1]} : vector<3x24x128xf32> to vector<3x16x128xf32>
      %c3_408 = arith.constant 3 : index
      %c0_409 = arith.constant 0 : index
      %c0_410 = arith.constant 0 : index
      %c0_411 = arith.constant 0 : index
      %532 = vector.load %arg6[%c3_408, %c0_409, %c0_410, %c0_411] : memref<7x14x16x128xf32, #tpu.memory_space<vmem>>, vector<1x3x16x128xf32>
      %533 = vector.shape_cast %532 : vector<1x3x16x128xf32> to vector<3x16x128xf32>
      %534 = vector.shape_cast %531 : vector<3x16x128xf32> to vector<1x3x16x128xf32>
      tpu.vector_store %arg6[%c3_408, %c0_409, %c0_410, %c0_411], %534 {strides = array<i32>} : memref<7x14x16x128xf32, #tpu.memory_space<vmem>>, vector<1x3x16x128xf32>,
      %c23_i32_412 = arith.constant 23 : i32
      %535 = tpu.dynamic_rotate %515 by %c23_i32_412 dim 1 : vector<3x24x128xf32>, i32 -> vector<3x24x128xf32>
      %536 = vector.extract_strided_slice %535 {offsets = [0, 0, 0], sizes = [3, 16, 128], strides = [1, 1, 1]} : vector<3x24x128xf32> to vector<3x16x128xf32>
      %c4_413 = arith.constant 4 : index
      %c0_414 = arith.constant 0 : index
      %c0_415 = arith.constant 0 : index
      %c0_416 = arith.constant 0 : index
      %537 = vector.load %arg6[%c4_413, %c0_414, %c0_415, %c0_416] : memref<7x14x16x128xf32, #tpu.memory_space<vmem>>, vector<1x3x16x128xf32>
      %538 = vector.shape_cast %537 : vector<1x3x16x128xf32> to vector<3x16x128xf32>
      %539 = vector.shape_cast %536 : vector<3x16x128xf32> to vector<1x3x16x128xf32>
      tpu.vector_store %arg6[%c4_413, %c0_414, %c0_415, %c0_416], %539 {strides = array<i32>} : memref<7x14x16x128xf32, #tpu.memory_space<vmem>>, vector<1x3x16x128xf32>,
      %c22_i32_417 = arith.constant 22 : i32
      %540 = tpu.dynamic_rotate %515 by %c22_i32_417 dim 1 : vector<3x24x128xf32>, i32 -> vector<3x24x128xf32>
      %541 = vector.extract_strided_slice %540 {offsets = [0, 0, 0], sizes = [3, 16, 128], strides = [1, 1, 1]} : vector<3x24x128xf32> to vector<3x16x128xf32>
      %c5_418 = arith.constant 5 : index
      %c0_419 = arith.constant 0 : index
      %c0_420 = arith.constant 0 : index
      %c0_421 = arith.constant 0 : index
      %542 = vector.load %arg6[%c5_418, %c0_419, %c0_420, %c0_421] : memref<7x14x16x128xf32, #tpu.memory_space<vmem>>, vector<1x3x16x128xf32>
      %543 = vector.shape_cast %542 : vector<1x3x16x128xf32> to vector<3x16x128xf32>
      %544 = vector.shape_cast %541 : vector<3x16x128xf32> to vector<1x3x16x128xf32>
      tpu.vector_store %arg6[%c5_418, %c0_419, %c0_420, %c0_421], %544 {strides = array<i32>} : memref<7x14x16x128xf32, #tpu.memory_space<vmem>>, vector<1x3x16x128xf32>,
      %c21_i32_422 = arith.constant 21 : i32
      %545 = tpu.dynamic_rotate %515 by %c21_i32_422 dim 1 : vector<3x24x128xf32>, i32 -> vector<3x24x128xf32>
      %546 = vector.extract_strided_slice %545 {offsets = [0, 0, 0], sizes = [3, 16, 128], strides = [1, 1, 1]} : vector<3x24x128xf32> to vector<3x16x128xf32>
      %c6_423 = arith.constant 6 : index
      %c0_424 = arith.constant 0 : index
      %c0_425 = arith.constant 0 : index
      %c0_426 = arith.constant 0 : index
      %547 = vector.load %arg6[%c6_423, %c0_424, %c0_425, %c0_426] : memref<7x14x16x128xf32, #tpu.memory_space<vmem>>, vector<1x3x16x128xf32>
      %548 = vector.shape_cast %547 : vector<1x3x16x128xf32> to vector<3x16x128xf32>
      %549 = vector.shape_cast %546 : vector<3x16x128xf32> to vector<1x3x16x128xf32>
      tpu.vector_store %arg6[%c6_423, %c0_424, %c0_425, %c0_426], %549 {strides = array<i32>} : memref<7x14x16x128xf32, #tpu.memory_space<vmem>>, vector<1x3x16x128xf32>,
    } else {
    }
    %c1_i32_68 = arith.constant 1 : i32
    %93 = arith.cmpi eq, %arg1, %c1_i32_68 : i32
    %94 = arith.extui %93 : i1 to i32
    %c0_i32_69 = arith.constant 0 : i32
    %95 = arith.cmpi ne, %94, %c0_i32_69 : i32
    scf.if %95 {
      %c0_386 = arith.constant 0 : index
      %c11_387 = arith.constant 11 : index
      %c0_388 = arith.constant 0 : index
      %c0_389 = arith.constant 0 : index
      %507 = vector.load %arg6[%c0_386, %c11_387, %c0_388, %c0_389] : memref<7x14x16x128xf32, #tpu.memory_space<vmem>>, vector<1x3x16x128xf32>
      %508 = vector.shape_cast %507 : vector<1x3x16x128xf32> to vector<3x16x128xf32>
      %509 = vector.shape_cast %86 : vector<3x16x128xf32> to vector<1x3x16x128xf32>
      tpu.vector_store %arg6[%c0_386, %c11_387, %c0_388, %c0_389], %509 {strides = array<i32>} : memref<7x14x16x128xf32, #tpu.memory_space<vmem>>, vector<1x3x16x128xf32>,
      %c1_390 = arith.constant 1 : index
      %c11_391 = arith.constant 11 : index
      %c0_392 = arith.constant 0 : index
      %c0_393 = arith.constant 0 : index
      %510 = vector.load %arg6[%c1_390, %c11_391, %c0_392, %c0_393] : memref<7x14x16x128xf32, #tpu.memory_space<vmem>>, vector<1x3x16x128xf32>
      %511 = vector.shape_cast %510 : vector<1x3x16x128xf32> to vector<3x16x128xf32>
      %512 = vector.shape_cast %86 : vector<3x16x128xf32> to vector<1x3x16x128xf32>
      tpu.vector_store %arg6[%c1_390, %c11_391, %c0_392, %c0_393], %512 {strides = array<i32>} : memref<7x14x16x128xf32, #tpu.memory_space<vmem>>, vector<1x3x16x128xf32>,
      %c2_394 = arith.constant 2 : index
      %c11_395 = arith.constant 11 : index
      %c0_396 = arith.constant 0 : index
      %c0_397 = arith.constant 0 : index
      %513 = vector.load %arg6[%c2_394, %c11_395, %c0_396, %c0_397] : memref<7x14x16x128xf32, #tpu.memory_space<vmem>>, vector<1x3x16x128xf32>
      %514 = vector.shape_cast %513 : vector<1x3x16x128xf32> to vector<3x16x128xf32>
      %515 = vector.shape_cast %86 : vector<3x16x128xf32> to vector<1x3x16x128xf32>
      tpu.vector_store %arg6[%c2_394, %c11_395, %c0_396, %c0_397], %515 {strides = array<i32>} : memref<7x14x16x128xf32, #tpu.memory_space<vmem>>, vector<1x3x16x128xf32>,
      %c3_398 = arith.constant 3 : index
      %c11_399 = arith.constant 11 : index
      %c0_400 = arith.constant 0 : index
      %c0_401 = arith.constant 0 : index
      %516 = vector.load %arg6[%c3_398, %c11_399, %c0_400, %c0_401] : memref<7x14x16x128xf32, #tpu.memory_space<vmem>>, vector<1x3x16x128xf32>
      %517 = vector.shape_cast %516 : vector<1x3x16x128xf32> to vector<3x16x128xf32>
      %518 = vector.shape_cast %86 : vector<3x16x128xf32> to vector<1x3x16x128xf32>
      tpu.vector_store %arg6[%c3_398, %c11_399, %c0_400, %c0_401], %518 {strides = array<i32>} : memref<7x14x16x128xf32, #tpu.memory_space<vmem>>, vector<1x3x16x128xf32>,
      %c4_402 = arith.constant 4 : index
      %c11_403 = arith.constant 11 : index
      %c0_404 = arith.constant 0 : index
      %c0_405 = arith.constant 0 : index
      %519 = vector.load %arg6[%c4_402, %c11_403, %c0_404, %c0_405] : memref<7x14x16x128xf32, #tpu.memory_space<vmem>>, vector<1x3x16x128xf32>
      %520 = vector.shape_cast %519 : vector<1x3x16x128xf32> to vector<3x16x128xf32>
      %521 = vector.shape_cast %86 : vector<3x16x128xf32> to vector<1x3x16x128xf32>
      tpu.vector_store %arg6[%c4_402, %c11_403, %c0_404, %c0_405], %521 {strides = array<i32>} : memref<7x14x16x128xf32, #tpu.memory_space<vmem>>, vector<1x3x16x128xf32>,
      %c5_406 = arith.constant 5 : index
      %c11_407 = arith.constant 11 : index
      %c0_408 = arith.constant 0 : index
      %c0_409 = arith.constant 0 : index
      %522 = vector.load %arg6[%c5_406, %c11_407, %c0_408, %c0_409] : memref<7x14x16x128xf32, #tpu.memory_space<vmem>>, vector<1x3x16x128xf32>
      %523 = vector.shape_cast %522 : vector<1x3x16x128xf32> to vector<3x16x128xf32>
      %524 = vector.shape_cast %86 : vector<3x16x128xf32> to vector<1x3x16x128xf32>
      tpu.vector_store %arg6[%c5_406, %c11_407, %c0_408, %c0_409], %524 {strides = array<i32>} : memref<7x14x16x128xf32, #tpu.memory_space<vmem>>, vector<1x3x16x128xf32>,
      %c6_410 = arith.constant 6 : index
      %c11_411 = arith.constant 11 : index
      %c0_412 = arith.constant 0 : index
      %c0_413 = arith.constant 0 : index
      %525 = vector.load %arg6[%c6_410, %c11_411, %c0_412, %c0_413] : memref<7x14x16x128xf32, #tpu.memory_space<vmem>>, vector<1x3x16x128xf32>
      %526 = vector.shape_cast %525 : vector<1x3x16x128xf32> to vector<3x16x128xf32>
      %527 = vector.shape_cast %86 : vector<3x16x128xf32> to vector<1x3x16x128xf32>
      tpu.vector_store %arg6[%c6_410, %c11_411, %c0_412, %c0_413], %527 {strides = array<i32>} : memref<7x14x16x128xf32, #tpu.memory_space<vmem>>, vector<1x3x16x128xf32>,
    } else {
    }
    %c1_i32_70 = arith.constant 1 : i32
    %96 = arith.cmpi slt, %arg1, %c1_i32_70 : i32
    %97 = arith.extui %96 : i1 to i32
    %c0_i32_71 = arith.constant 0 : i32
    %98 = arith.cmpi ne, %97, %c0_i32_71 : i32
    scf.if %98 {
      %c8_i32_386 = arith.constant 8 : i32
      %507 = arith.addi %1, %c8_i32_386 : i32
      %c0_i32_387 = arith.constant 0 : i32
      %508 = arith.addi %507, %c0_i32_387 : i32
      %c0_388 = arith.constant 0 : index
      %509 = arith.index_cast %508 : i32 to index
      %c0_389 = arith.constant 0 : index
      %c0_390 = arith.constant 0 : index
      %510 = vector.load %arg2[%c0_388, %509, %c0_389, %c0_390] : memref<1x16x16x128xf32, #tpu.memory_space<vmem>>, vector<1x3x16x128xf32>
      %511 = vector.shape_cast %510 : vector<1x3x16x128xf32> to vector<3x16x128xf32>
      %cst_391 = arith.constant 0.000000e+00 : f32
      %512 = vector.broadcast %cst_391 : f32 to vector<3x16x128xf32>
      %513 = arith.maximumf %511, %512 : vector<3x16x128xf32>
      %cst_392 = arith.constant 0.000000e+00 : f32
      %514 = vector.broadcast %cst_392 : f32 to vector<3x8x128xf32>
      %515 = tpu.concatenate %513, %514 in 1 : vector<3x16x128xf32>, vector<3x8x128xf32> -> vector<3x24x128xf32>
      %c3_i32_393 = arith.constant 3 : i32
      %516 = tpu.dynamic_rotate %515 by %c3_i32_393 dim 1 : vector<3x24x128xf32>, i32 -> vector<3x24x128xf32>
      %517 = vector.extract_strided_slice %516 {offsets = [0, 0, 0], sizes = [3, 16, 128], strides = [1, 1, 1]} : vector<3x24x128xf32> to vector<3x16x128xf32>
      %c0_394 = arith.constant 0 : index
      %c11_395 = arith.constant 11 : index
      %c0_396 = arith.constant 0 : index
      %c0_397 = arith.constant 0 : index
      %518 = vector.load %arg6[%c0_394, %c11_395, %c0_396, %c0_397] : memref<7x14x16x128xf32, #tpu.memory_space<vmem>>, vector<1x3x16x128xf32>
      %519 = vector.shape_cast %518 : vector<1x3x16x128xf32> to vector<3x16x128xf32>
      %520 = vector.shape_cast %517 : vector<3x16x128xf32> to vector<1x3x16x128xf32>
      tpu.vector_store %arg6[%c0_394, %c11_395, %c0_396, %c0_397], %520 {strides = array<i32>} : memref<7x14x16x128xf32, #tpu.memory_space<vmem>>, vector<1x3x16x128xf32>,
      %c2_i32_398 = arith.constant 2 : i32
      %521 = tpu.dynamic_rotate %515 by %c2_i32_398 dim 1 : vector<3x24x128xf32>, i32 -> vector<3x24x128xf32>
      %522 = vector.extract_strided_slice %521 {offsets = [0, 0, 0], sizes = [3, 16, 128], strides = [1, 1, 1]} : vector<3x24x128xf32> to vector<3x16x128xf32>
      %c1_399 = arith.constant 1 : index
      %c11_400 = arith.constant 11 : index
      %c0_401 = arith.constant 0 : index
      %c0_402 = arith.constant 0 : index
      %523 = vector.load %arg6[%c1_399, %c11_400, %c0_401, %c0_402] : memref<7x14x16x128xf32, #tpu.memory_space<vmem>>, vector<1x3x16x128xf32>
      %524 = vector.shape_cast %523 : vector<1x3x16x128xf32> to vector<3x16x128xf32>
      %525 = vector.shape_cast %522 : vector<3x16x128xf32> to vector<1x3x16x128xf32>
      tpu.vector_store %arg6[%c1_399, %c11_400, %c0_401, %c0_402], %525 {strides = array<i32>} : memref<7x14x16x128xf32, #tpu.memory_space<vmem>>, vector<1x3x16x128xf32>,
      %c1_i32_403 = arith.constant 1 : i32
      %526 = tpu.dynamic_rotate %515 by %c1_i32_403 dim 1 : vector<3x24x128xf32>, i32 -> vector<3x24x128xf32>
      %527 = vector.extract_strided_slice %526 {offsets = [0, 0, 0], sizes = [3, 16, 128], strides = [1, 1, 1]} : vector<3x24x128xf32> to vector<3x16x128xf32>
      %c2_404 = arith.constant 2 : index
      %c11_405 = arith.constant 11 : index
      %c0_406 = arith.constant 0 : index
      %c0_407 = arith.constant 0 : index
      %528 = vector.load %arg6[%c2_404, %c11_405, %c0_406, %c0_407] : memref<7x14x16x128xf32, #tpu.memory_space<vmem>>, vector<1x3x16x128xf32>
      %529 = vector.shape_cast %528 : vector<1x3x16x128xf32> to vector<3x16x128xf32>
      %530 = vector.shape_cast %527 : vector<3x16x128xf32> to vector<1x3x16x128xf32>
      tpu.vector_store %arg6[%c2_404, %c11_405, %c0_406, %c0_407], %530 {strides = array<i32>} : memref<7x14x16x128xf32, #tpu.memory_space<vmem>>, vector<1x3x16x128xf32>,
      %531 = vector.extract_strided_slice %515 {offsets = [0, 0, 0], sizes = [3, 16, 128], strides = [1, 1, 1]} : vector<3x24x128xf32> to vector<3x16x128xf32>
      %c3_408 = arith.constant 3 : index
      %c11_409 = arith.constant 11 : index
      %c0_410 = arith.constant 0 : index
      %c0_411 = arith.constant 0 : index
      %532 = vector.load %arg6[%c3_408, %c11_409, %c0_410, %c0_411] : memref<7x14x16x128xf32, #tpu.memory_space<vmem>>, vector<1x3x16x128xf32>
      %533 = vector.shape_cast %532 : vector<1x3x16x128xf32> to vector<3x16x128xf32>
      %534 = vector.shape_cast %531 : vector<3x16x128xf32> to vector<1x3x16x128xf32>
      tpu.vector_store %arg6[%c3_408, %c11_409, %c0_410, %c0_411], %534 {strides = array<i32>} : memref<7x14x16x128xf32, #tpu.memory_space<vmem>>, vector<1x3x16x128xf32>,
      %c23_i32_412 = arith.constant 23 : i32
      %535 = tpu.dynamic_rotate %515 by %c23_i32_412 dim 1 : vector<3x24x128xf32>, i32 -> vector<3x24x128xf32>
      %536 = vector.extract_strided_slice %535 {offsets = [0, 0, 0], sizes = [3, 16, 128], strides = [1, 1, 1]} : vector<3x24x128xf32> to vector<3x16x128xf32>
      %c4_413 = arith.constant 4 : index
      %c11_414 = arith.constant 11 : index
      %c0_415 = arith.constant 0 : index
      %c0_416 = arith.constant 0 : index
      %537 = vector.load %arg6[%c4_413, %c11_414, %c0_415, %c0_416] : memref<7x14x16x128xf32, #tpu.memory_space<vmem>>, vector<1x3x16x128xf32>
      %538 = vector.shape_cast %537 : vector<1x3x16x128xf32> to vector<3x16x128xf32>
      %539 = vector.shape_cast %536 : vector<3x16x128xf32> to vector<1x3x16x128xf32>
      tpu.vector_store %arg6[%c4_413, %c11_414, %c0_415, %c0_416], %539 {strides = array<i32>} : memref<7x14x16x128xf32, #tpu.memory_space<vmem>>, vector<1x3x16x128xf32>,
      %c22_i32_417 = arith.constant 22 : i32
      %540 = tpu.dynamic_rotate %515 by %c22_i32_417 dim 1 : vector<3x24x128xf32>, i32 -> vector<3x24x128xf32>
      %541 = vector.extract_strided_slice %540 {offsets = [0, 0, 0], sizes = [3, 16, 128], strides = [1, 1, 1]} : vector<3x24x128xf32> to vector<3x16x128xf32>
      %c5_418 = arith.constant 5 : index
      %c11_419 = arith.constant 11 : index
      %c0_420 = arith.constant 0 : index
      %c0_421 = arith.constant 0 : index
      %542 = vector.load %arg6[%c5_418, %c11_419, %c0_420, %c0_421] : memref<7x14x16x128xf32, #tpu.memory_space<vmem>>, vector<1x3x16x128xf32>
      %543 = vector.shape_cast %542 : vector<1x3x16x128xf32> to vector<3x16x128xf32>
      %544 = vector.shape_cast %541 : vector<3x16x128xf32> to vector<1x3x16x128xf32>
      tpu.vector_store %arg6[%c5_418, %c11_419, %c0_420, %c0_421], %544 {strides = array<i32>} : memref<7x14x16x128xf32, #tpu.memory_space<vmem>>, vector<1x3x16x128xf32>,
      %c21_i32_422 = arith.constant 21 : i32
      %545 = tpu.dynamic_rotate %515 by %c21_i32_422 dim 1 : vector<3x24x128xf32>, i32 -> vector<3x24x128xf32>
      %546 = vector.extract_strided_slice %545 {offsets = [0, 0, 0], sizes = [3, 16, 128], strides = [1, 1, 1]} : vector<3x24x128xf32> to vector<3x16x128xf32>
      %c6_423 = arith.constant 6 : index
      %c11_424 = arith.constant 11 : index
      %c0_425 = arith.constant 0 : index
      %c0_426 = arith.constant 0 : index
      %547 = vector.load %arg6[%c6_423, %c11_424, %c0_425, %c0_426] : memref<7x14x16x128xf32, #tpu.memory_space<vmem>>, vector<1x3x16x128xf32>
      %548 = vector.shape_cast %547 : vector<1x3x16x128xf32> to vector<3x16x128xf32>
      %549 = vector.shape_cast %546 : vector<3x16x128xf32> to vector<1x3x16x128xf32>
      tpu.vector_store %arg6[%c6_423, %c11_424, %c0_425, %c0_426], %549 {strides = array<i32>} : memref<7x14x16x128xf32, #tpu.memory_space<vmem>>, vector<1x3x16x128xf32>,
    } else {
    }
    %c0_72 = arith.constant 0 : index
    %c0_73 = arith.constant 0 : index
    %c0_74 = arith.constant 0 : index
    %99 = vector.load %arg4[%c0_72, %c0_73, %c0_74] : memref<1x1x128xf32, #tpu.memory_space<vmem>>, vector<1x1x128xf32>
    %100 = vector.shape_cast %99 : vector<1x1x128xf32> to vector<1x1x128xf32>
    %101 = vector.broadcast %100 : vector<1x1x128xf32> to vector<8x16x128xf32>
    %c0_75 = arith.constant 0 : index
    %c0_76 = arith.constant 0 : index
    %c0_77 = arith.constant 0 : index
    %c0_78 = arith.constant 0 : index
    %102 = vector.load %arg6[%c0_75, %c0_76, %c0_77, %c0_78] : memref<7x14x16x128xf32, #tpu.memory_space<vmem>>, vector<1x8x16x128xf32>
    %103 = vector.shape_cast %102 : vector<1x8x16x128xf32> to vector<8x16x128xf32>
    %c0_79 = arith.constant 0 : index
    %c0_80 = arith.constant 0 : index
    %c0_81 = arith.constant 0 : index
    %104 = vector.load %arg3[%c0_79, %c0_80, %c0_81] : memref<49x1x128xf32, #tpu.memory_space<vmem>>, vector<1x1x128xf32>
    %105 = vector.shape_cast %104 : vector<1x1x128xf32> to vector<1x128xf32>
    %106 = vector.shape_cast %105 : vector<1x128xf32> to vector<1x1x128xf32>
    %107 = vector.broadcast %106 : vector<1x1x128xf32> to vector<8x16x128xf32>
    %108 = arith.mulf %103, %107 : vector<8x16x128xf32>
    %109 = arith.addf %101, %108 : vector<8x16x128xf32>
    %c1_82 = arith.constant 1 : index
    %c0_83 = arith.constant 0 : index
    %c0_84 = arith.constant 0 : index
    %c0_85 = arith.constant 0 : index
    %110 = vector.load %arg6[%c1_82, %c0_83, %c0_84, %c0_85] : memref<7x14x16x128xf32, #tpu.memory_space<vmem>>, vector<1x8x16x128xf32>
    %111 = vector.shape_cast %110 : vector<1x8x16x128xf32> to vector<8x16x128xf32>
    %c1_86 = arith.constant 1 : index
    %c0_87 = arith.constant 0 : index
    %c0_88 = arith.constant 0 : index
    %112 = vector.load %arg3[%c1_86, %c0_87, %c0_88] : memref<49x1x128xf32, #tpu.memory_space<vmem>>, vector<1x1x128xf32>
    %113 = vector.shape_cast %112 : vector<1x1x128xf32> to vector<1x128xf32>
    %114 = vector.shape_cast %113 : vector<1x128xf32> to vector<1x1x128xf32>
    %115 = vector.broadcast %114 : vector<1x1x128xf32> to vector<8x16x128xf32>
    %116 = arith.mulf %111, %115 : vector<8x16x128xf32>
    %117 = arith.addf %109, %116 : vector<8x16x128xf32>
    %c2_89 = arith.constant 2 : index
    %c0_90 = arith.constant 0 : index
    %c0_91 = arith.constant 0 : index
    %c0_92 = arith.constant 0 : index
    %118 = vector.load %arg6[%c2_89, %c0_90, %c0_91, %c0_92] : memref<7x14x16x128xf32, #tpu.memory_space<vmem>>, vector<1x8x16x128xf32>
    %119 = vector.shape_cast %118 : vector<1x8x16x128xf32> to vector<8x16x128xf32>
    %c2_93 = arith.constant 2 : index
    %c0_94 = arith.constant 0 : index
    %c0_95 = arith.constant 0 : index
    %120 = vector.load %arg3[%c2_93, %c0_94, %c0_95] : memref<49x1x128xf32, #tpu.memory_space<vmem>>, vector<1x1x128xf32>
    %121 = vector.shape_cast %120 : vector<1x1x128xf32> to vector<1x128xf32>
    %122 = vector.shape_cast %121 : vector<1x128xf32> to vector<1x1x128xf32>
    %123 = vector.broadcast %122 : vector<1x1x128xf32> to vector<8x16x128xf32>
    %124 = arith.mulf %119, %123 : vector<8x16x128xf32>
    %125 = arith.addf %117, %124 : vector<8x16x128xf32>
    %c3_96 = arith.constant 3 : index
    %c0_97 = arith.constant 0 : index
    %c0_98 = arith.constant 0 : index
    %c0_99 = arith.constant 0 : index
    %126 = vector.load %arg6[%c3_96, %c0_97, %c0_98, %c0_99] : memref<7x14x16x128xf32, #tpu.memory_space<vmem>>, vector<1x8x16x128xf32>
    %127 = vector.shape_cast %126 : vector<1x8x16x128xf32> to vector<8x16x128xf32>
    %c3_100 = arith.constant 3 : index
    %c0_101 = arith.constant 0 : index
    %c0_102 = arith.constant 0 : index
    %128 = vector.load %arg3[%c3_100, %c0_101, %c0_102] : memref<49x1x128xf32, #tpu.memory_space<vmem>>, vector<1x1x128xf32>
    %129 = vector.shape_cast %128 : vector<1x1x128xf32> to vector<1x128xf32>
    %130 = vector.shape_cast %129 : vector<1x128xf32> to vector<1x1x128xf32>
    %131 = vector.broadcast %130 : vector<1x1x128xf32> to vector<8x16x128xf32>
    %132 = arith.mulf %127, %131 : vector<8x16x128xf32>
    %133 = arith.addf %125, %132 : vector<8x16x128xf32>
    %c4_103 = arith.constant 4 : index
    %c0_104 = arith.constant 0 : index
    %c0_105 = arith.constant 0 : index
    %c0_106 = arith.constant 0 : index
    %134 = vector.load %arg6[%c4_103, %c0_104, %c0_105, %c0_106] : memref<7x14x16x128xf32, #tpu.memory_space<vmem>>, vector<1x8x16x128xf32>
    %135 = vector.shape_cast %134 : vector<1x8x16x128xf32> to vector<8x16x128xf32>
    %c4_107 = arith.constant 4 : index
    %c0_108 = arith.constant 0 : index
    %c0_109 = arith.constant 0 : index
    %136 = vector.load %arg3[%c4_107, %c0_108, %c0_109] : memref<49x1x128xf32, #tpu.memory_space<vmem>>, vector<1x1x128xf32>
    %137 = vector.shape_cast %136 : vector<1x1x128xf32> to vector<1x128xf32>
    %138 = vector.shape_cast %137 : vector<1x128xf32> to vector<1x1x128xf32>
    %139 = vector.broadcast %138 : vector<1x1x128xf32> to vector<8x16x128xf32>
    %140 = arith.mulf %135, %139 : vector<8x16x128xf32>
    %141 = arith.addf %133, %140 : vector<8x16x128xf32>
    %c5_110 = arith.constant 5 : index
    %c0_111 = arith.constant 0 : index
    %c0_112 = arith.constant 0 : index
    %c0_113 = arith.constant 0 : index
    %142 = vector.load %arg6[%c5_110, %c0_111, %c0_112, %c0_113] : memref<7x14x16x128xf32, #tpu.memory_space<vmem>>, vector<1x8x16x128xf32>
    %143 = vector.shape_cast %142 : vector<1x8x16x128xf32> to vector<8x16x128xf32>
    %c5_114 = arith.constant 5 : index
    %c0_115 = arith.constant 0 : index
    %c0_116 = arith.constant 0 : index
    %144 = vector.load %arg3[%c5_114, %c0_115, %c0_116] : memref<49x1x128xf32, #tpu.memory_space<vmem>>, vector<1x1x128xf32>
    %145 = vector.shape_cast %144 : vector<1x1x128xf32> to vector<1x128xf32>
    %146 = vector.shape_cast %145 : vector<1x128xf32> to vector<1x1x128xf32>
    %147 = vector.broadcast %146 : vector<1x1x128xf32> to vector<8x16x128xf32>
    %148 = arith.mulf %143, %147 : vector<8x16x128xf32>
    %149 = arith.addf %141, %148 : vector<8x16x128xf32>
    %c6_117 = arith.constant 6 : index
    %c0_118 = arith.constant 0 : index
    %c0_119 = arith.constant 0 : index
    %c0_120 = arith.constant 0 : index
    %150 = vector.load %arg6[%c6_117, %c0_118, %c0_119, %c0_120] : memref<7x14x16x128xf32, #tpu.memory_space<vmem>>, vector<1x8x16x128xf32>
    %151 = vector.shape_cast %150 : vector<1x8x16x128xf32> to vector<8x16x128xf32>
    %c6_121 = arith.constant 6 : index
    %c0_122 = arith.constant 0 : index
    %c0_123 = arith.constant 0 : index
    %152 = vector.load %arg3[%c6_121, %c0_122, %c0_123] : memref<49x1x128xf32, #tpu.memory_space<vmem>>, vector<1x1x128xf32>
    %153 = vector.shape_cast %152 : vector<1x1x128xf32> to vector<1x128xf32>
    %154 = vector.shape_cast %153 : vector<1x128xf32> to vector<1x1x128xf32>
    %155 = vector.broadcast %154 : vector<1x1x128xf32> to vector<8x16x128xf32>
    %156 = arith.mulf %151, %155 : vector<8x16x128xf32>
    %157 = arith.addf %149, %156 : vector<8x16x128xf32>
    %c0_124 = arith.constant 0 : index
    %c1_125 = arith.constant 1 : index
    %c0_126 = arith.constant 0 : index
    %c0_127 = arith.constant 0 : index
    %158 = vector.load %arg6[%c0_124, %c1_125, %c0_126, %c0_127] : memref<7x14x16x128xf32, #tpu.memory_space<vmem>>, vector<1x8x16x128xf32>
    %159 = vector.shape_cast %158 : vector<1x8x16x128xf32> to vector<8x16x128xf32>
    %c7 = arith.constant 7 : index
    %c0_128 = arith.constant 0 : index
    %c0_129 = arith.constant 0 : index
    %160 = vector.load %arg3[%c7, %c0_128, %c0_129] : memref<49x1x128xf32, #tpu.memory_space<vmem>>, vector<1x1x128xf32>
    %161 = vector.shape_cast %160 : vector<1x1x128xf32> to vector<1x128xf32>
    %162 = vector.shape_cast %161 : vector<1x128xf32> to vector<1x1x128xf32>
    %163 = vector.broadcast %162 : vector<1x1x128xf32> to vector<8x16x128xf32>
    %164 = arith.mulf %159, %163 : vector<8x16x128xf32>
    %165 = arith.addf %157, %164 : vector<8x16x128xf32>
    %c1_130 = arith.constant 1 : index
    %c1_131 = arith.constant 1 : index
    %c0_132 = arith.constant 0 : index
    %c0_133 = arith.constant 0 : index
    %166 = vector.load %arg6[%c1_130, %c1_131, %c0_132, %c0_133] : memref<7x14x16x128xf32, #tpu.memory_space<vmem>>, vector<1x8x16x128xf32>
    %167 = vector.shape_cast %166 : vector<1x8x16x128xf32> to vector<8x16x128xf32>
    %c8_134 = arith.constant 8 : index
    %c0_135 = arith.constant 0 : index
    %c0_136 = arith.constant 0 : index
    %168 = vector.load %arg3[%c8_134, %c0_135, %c0_136] : memref<49x1x128xf32, #tpu.memory_space<vmem>>, vector<1x1x128xf32>
    %169 = vector.shape_cast %168 : vector<1x1x128xf32> to vector<1x128xf32>
    %170 = vector.shape_cast %169 : vector<1x128xf32> to vector<1x1x128xf32>
    %171 = vector.broadcast %170 : vector<1x1x128xf32> to vector<8x16x128xf32>
    %172 = arith.mulf %167, %171 : vector<8x16x128xf32>
    %173 = arith.addf %165, %172 : vector<8x16x128xf32>
    %c2_137 = arith.constant 2 : index
    %c1_138 = arith.constant 1 : index
    %c0_139 = arith.constant 0 : index
    %c0_140 = arith.constant 0 : index
    %174 = vector.load %arg6[%c2_137, %c1_138, %c0_139, %c0_140] : memref<7x14x16x128xf32, #tpu.memory_space<vmem>>, vector<1x8x16x128xf32>
    %175 = vector.shape_cast %174 : vector<1x8x16x128xf32> to vector<8x16x128xf32>
    %c9 = arith.constant 9 : index
    %c0_141 = arith.constant 0 : index
    %c0_142 = arith.constant 0 : index
    %176 = vector.load %arg3[%c9, %c0_141, %c0_142] : memref<49x1x128xf32, #tpu.memory_space<vmem>>, vector<1x1x128xf32>
    %177 = vector.shape_cast %176 : vector<1x1x128xf32> to vector<1x128xf32>
    %178 = vector.shape_cast %177 : vector<1x128xf32> to vector<1x1x128xf32>
    %179 = vector.broadcast %178 : vector<1x1x128xf32> to vector<8x16x128xf32>
    %180 = arith.mulf %175, %179 : vector<8x16x128xf32>
    %181 = arith.addf %173, %180 : vector<8x16x128xf32>
    %c3_143 = arith.constant 3 : index
    %c1_144 = arith.constant 1 : index
    %c0_145 = arith.constant 0 : index
    %c0_146 = arith.constant 0 : index
    %182 = vector.load %arg6[%c3_143, %c1_144, %c0_145, %c0_146] : memref<7x14x16x128xf32, #tpu.memory_space<vmem>>, vector<1x8x16x128xf32>
    %183 = vector.shape_cast %182 : vector<1x8x16x128xf32> to vector<8x16x128xf32>
    %c10 = arith.constant 10 : index
    %c0_147 = arith.constant 0 : index
    %c0_148 = arith.constant 0 : index
    %184 = vector.load %arg3[%c10, %c0_147, %c0_148] : memref<49x1x128xf32, #tpu.memory_space<vmem>>, vector<1x1x128xf32>
    %185 = vector.shape_cast %184 : vector<1x1x128xf32> to vector<1x128xf32>
    %186 = vector.shape_cast %185 : vector<1x128xf32> to vector<1x1x128xf32>
    %187 = vector.broadcast %186 : vector<1x1x128xf32> to vector<8x16x128xf32>
    %188 = arith.mulf %183, %187 : vector<8x16x128xf32>
    %189 = arith.addf %181, %188 : vector<8x16x128xf32>
    %c4_149 = arith.constant 4 : index
    %c1_150 = arith.constant 1 : index
    %c0_151 = arith.constant 0 : index
    %c0_152 = arith.constant 0 : index
    %190 = vector.load %arg6[%c4_149, %c1_150, %c0_151, %c0_152] : memref<7x14x16x128xf32, #tpu.memory_space<vmem>>, vector<1x8x16x128xf32>
    %191 = vector.shape_cast %190 : vector<1x8x16x128xf32> to vector<8x16x128xf32>
    %c11 = arith.constant 11 : index
    %c0_153 = arith.constant 0 : index
    %c0_154 = arith.constant 0 : index
    %192 = vector.load %arg3[%c11, %c0_153, %c0_154] : memref<49x1x128xf32, #tpu.memory_space<vmem>>, vector<1x1x128xf32>
    %193 = vector.shape_cast %192 : vector<1x1x128xf32> to vector<1x128xf32>
    %194 = vector.shape_cast %193 : vector<1x128xf32> to vector<1x1x128xf32>
    %195 = vector.broadcast %194 : vector<1x1x128xf32> to vector<8x16x128xf32>
    %196 = arith.mulf %191, %195 : vector<8x16x128xf32>
    %197 = arith.addf %189, %196 : vector<8x16x128xf32>
    %c5_155 = arith.constant 5 : index
    %c1_156 = arith.constant 1 : index
    %c0_157 = arith.constant 0 : index
    %c0_158 = arith.constant 0 : index
    %198 = vector.load %arg6[%c5_155, %c1_156, %c0_157, %c0_158] : memref<7x14x16x128xf32, #tpu.memory_space<vmem>>, vector<1x8x16x128xf32>
    %199 = vector.shape_cast %198 : vector<1x8x16x128xf32> to vector<8x16x128xf32>
    %c12 = arith.constant 12 : index
    %c0_159 = arith.constant 0 : index
    %c0_160 = arith.constant 0 : index
    %200 = vector.load %arg3[%c12, %c0_159, %c0_160] : memref<49x1x128xf32, #tpu.memory_space<vmem>>, vector<1x1x128xf32>
    %201 = vector.shape_cast %200 : vector<1x1x128xf32> to vector<1x128xf32>
    %202 = vector.shape_cast %201 : vector<1x128xf32> to vector<1x1x128xf32>
    %203 = vector.broadcast %202 : vector<1x1x128xf32> to vector<8x16x128xf32>
    %204 = arith.mulf %199, %203 : vector<8x16x128xf32>
    %205 = arith.addf %197, %204 : vector<8x16x128xf32>
    %c6_161 = arith.constant 6 : index
    %c1_162 = arith.constant 1 : index
    %c0_163 = arith.constant 0 : index
    %c0_164 = arith.constant 0 : index
    %206 = vector.load %arg6[%c6_161, %c1_162, %c0_163, %c0_164] : memref<7x14x16x128xf32, #tpu.memory_space<vmem>>, vector<1x8x16x128xf32>
    %207 = vector.shape_cast %206 : vector<1x8x16x128xf32> to vector<8x16x128xf32>
    %c13 = arith.constant 13 : index
    %c0_165 = arith.constant 0 : index
    %c0_166 = arith.constant 0 : index
    %208 = vector.load %arg3[%c13, %c0_165, %c0_166] : memref<49x1x128xf32, #tpu.memory_space<vmem>>, vector<1x1x128xf32>
    %209 = vector.shape_cast %208 : vector<1x1x128xf32> to vector<1x128xf32>
    %210 = vector.shape_cast %209 : vector<1x128xf32> to vector<1x1x128xf32>
    %211 = vector.broadcast %210 : vector<1x1x128xf32> to vector<8x16x128xf32>
    %212 = arith.mulf %207, %211 : vector<8x16x128xf32>
    %213 = arith.addf %205, %212 : vector<8x16x128xf32>
    %c0_167 = arith.constant 0 : index
    %c2_168 = arith.constant 2 : index
    %c0_169 = arith.constant 0 : index
    %c0_170 = arith.constant 0 : index
    %214 = vector.load %arg6[%c0_167, %c2_168, %c0_169, %c0_170] : memref<7x14x16x128xf32, #tpu.memory_space<vmem>>, vector<1x8x16x128xf32>
    %215 = vector.shape_cast %214 : vector<1x8x16x128xf32> to vector<8x16x128xf32>
    %c14 = arith.constant 14 : index
    %c0_171 = arith.constant 0 : index
    %c0_172 = arith.constant 0 : index
    %216 = vector.load %arg3[%c14, %c0_171, %c0_172] : memref<49x1x128xf32, #tpu.memory_space<vmem>>, vector<1x1x128xf32>
    %217 = vector.shape_cast %216 : vector<1x1x128xf32> to vector<1x128xf32>
    %218 = vector.shape_cast %217 : vector<1x128xf32> to vector<1x1x128xf32>
    %219 = vector.broadcast %218 : vector<1x1x128xf32> to vector<8x16x128xf32>
    %220 = arith.mulf %215, %219 : vector<8x16x128xf32>
    %221 = arith.addf %213, %220 : vector<8x16x128xf32>
    %c1_173 = arith.constant 1 : index
    %c2_174 = arith.constant 2 : index
    %c0_175 = arith.constant 0 : index
    %c0_176 = arith.constant 0 : index
    %222 = vector.load %arg6[%c1_173, %c2_174, %c0_175, %c0_176] : memref<7x14x16x128xf32, #tpu.memory_space<vmem>>, vector<1x8x16x128xf32>
    %223 = vector.shape_cast %222 : vector<1x8x16x128xf32> to vector<8x16x128xf32>
    %c15 = arith.constant 15 : index
    %c0_177 = arith.constant 0 : index
    %c0_178 = arith.constant 0 : index
    %224 = vector.load %arg3[%c15, %c0_177, %c0_178] : memref<49x1x128xf32, #tpu.memory_space<vmem>>, vector<1x1x128xf32>
    %225 = vector.shape_cast %224 : vector<1x1x128xf32> to vector<1x128xf32>
    %226 = vector.shape_cast %225 : vector<1x128xf32> to vector<1x1x128xf32>
    %227 = vector.broadcast %226 : vector<1x1x128xf32> to vector<8x16x128xf32>
    %228 = arith.mulf %223, %227 : vector<8x16x128xf32>
    %229 = arith.addf %221, %228 : vector<8x16x128xf32>
    %c2_179 = arith.constant 2 : index
    %c2_180 = arith.constant 2 : index
    %c0_181 = arith.constant 0 : index
    %c0_182 = arith.constant 0 : index
    %230 = vector.load %arg6[%c2_179, %c2_180, %c0_181, %c0_182] : memref<7x14x16x128xf32, #tpu.memory_space<vmem>>, vector<1x8x16x128xf32>
    %231 = vector.shape_cast %230 : vector<1x8x16x128xf32> to vector<8x16x128xf32>
    %c16 = arith.constant 16 : index
    %c0_183 = arith.constant 0 : index
    %c0_184 = arith.constant 0 : index
    %232 = vector.load %arg3[%c16, %c0_183, %c0_184] : memref<49x1x128xf32, #tpu.memory_space<vmem>>, vector<1x1x128xf32>
    %233 = vector.shape_cast %232 : vector<1x1x128xf32> to vector<1x128xf32>
    %234 = vector.shape_cast %233 : vector<1x128xf32> to vector<1x1x128xf32>
    %235 = vector.broadcast %234 : vector<1x1x128xf32> to vector<8x16x128xf32>
    %236 = arith.mulf %231, %235 : vector<8x16x128xf32>
    %237 = arith.addf %229, %236 : vector<8x16x128xf32>
    %c3_185 = arith.constant 3 : index
    %c2_186 = arith.constant 2 : index
    %c0_187 = arith.constant 0 : index
    %c0_188 = arith.constant 0 : index
    %238 = vector.load %arg6[%c3_185, %c2_186, %c0_187, %c0_188] : memref<7x14x16x128xf32, #tpu.memory_space<vmem>>, vector<1x8x16x128xf32>
    %239 = vector.shape_cast %238 : vector<1x8x16x128xf32> to vector<8x16x128xf32>
    %c17 = arith.constant 17 : index
    %c0_189 = arith.constant 0 : index
    %c0_190 = arith.constant 0 : index
    %240 = vector.load %arg3[%c17, %c0_189, %c0_190] : memref<49x1x128xf32, #tpu.memory_space<vmem>>, vector<1x1x128xf32>
    %241 = vector.shape_cast %240 : vector<1x1x128xf32> to vector<1x128xf32>
    %242 = vector.shape_cast %241 : vector<1x128xf32> to vector<1x1x128xf32>
    %243 = vector.broadcast %242 : vector<1x1x128xf32> to vector<8x16x128xf32>
    %244 = arith.mulf %239, %243 : vector<8x16x128xf32>
    %245 = arith.addf %237, %244 : vector<8x16x128xf32>
    %c4_191 = arith.constant 4 : index
    %c2_192 = arith.constant 2 : index
    %c0_193 = arith.constant 0 : index
    %c0_194 = arith.constant 0 : index
    %246 = vector.load %arg6[%c4_191, %c2_192, %c0_193, %c0_194] : memref<7x14x16x128xf32, #tpu.memory_space<vmem>>, vector<1x8x16x128xf32>
    %247 = vector.shape_cast %246 : vector<1x8x16x128xf32> to vector<8x16x128xf32>
    %c18 = arith.constant 18 : index
    %c0_195 = arith.constant 0 : index
    %c0_196 = arith.constant 0 : index
    %248 = vector.load %arg3[%c18, %c0_195, %c0_196] : memref<49x1x128xf32, #tpu.memory_space<vmem>>, vector<1x1x128xf32>
    %249 = vector.shape_cast %248 : vector<1x1x128xf32> to vector<1x128xf32>
    %250 = vector.shape_cast %249 : vector<1x128xf32> to vector<1x1x128xf32>
    %251 = vector.broadcast %250 : vector<1x1x128xf32> to vector<8x16x128xf32>
    %252 = arith.mulf %247, %251 : vector<8x16x128xf32>
    %253 = arith.addf %245, %252 : vector<8x16x128xf32>
    %c5_197 = arith.constant 5 : index
    %c2_198 = arith.constant 2 : index
    %c0_199 = arith.constant 0 : index
    %c0_200 = arith.constant 0 : index
    %254 = vector.load %arg6[%c5_197, %c2_198, %c0_199, %c0_200] : memref<7x14x16x128xf32, #tpu.memory_space<vmem>>, vector<1x8x16x128xf32>
    %255 = vector.shape_cast %254 : vector<1x8x16x128xf32> to vector<8x16x128xf32>
    %c19 = arith.constant 19 : index
    %c0_201 = arith.constant 0 : index
    %c0_202 = arith.constant 0 : index
    %256 = vector.load %arg3[%c19, %c0_201, %c0_202] : memref<49x1x128xf32, #tpu.memory_space<vmem>>, vector<1x1x128xf32>
    %257 = vector.shape_cast %256 : vector<1x1x128xf32> to vector<1x128xf32>
    %258 = vector.shape_cast %257 : vector<1x128xf32> to vector<1x1x128xf32>
    %259 = vector.broadcast %258 : vector<1x1x128xf32> to vector<8x16x128xf32>
    %260 = arith.mulf %255, %259 : vector<8x16x128xf32>
    %261 = arith.addf %253, %260 : vector<8x16x128xf32>
    %c6_203 = arith.constant 6 : index
    %c2_204 = arith.constant 2 : index
    %c0_205 = arith.constant 0 : index
    %c0_206 = arith.constant 0 : index
    %262 = vector.load %arg6[%c6_203, %c2_204, %c0_205, %c0_206] : memref<7x14x16x128xf32, #tpu.memory_space<vmem>>, vector<1x8x16x128xf32>
    %263 = vector.shape_cast %262 : vector<1x8x16x128xf32> to vector<8x16x128xf32>
    %c20 = arith.constant 20 : index
    %c0_207 = arith.constant 0 : index
    %c0_208 = arith.constant 0 : index
    %264 = vector.load %arg3[%c20, %c0_207, %c0_208] : memref<49x1x128xf32, #tpu.memory_space<vmem>>, vector<1x1x128xf32>
    %265 = vector.shape_cast %264 : vector<1x1x128xf32> to vector<1x128xf32>
    %266 = vector.shape_cast %265 : vector<1x128xf32> to vector<1x1x128xf32>
    %267 = vector.broadcast %266 : vector<1x1x128xf32> to vector<8x16x128xf32>
    %268 = arith.mulf %263, %267 : vector<8x16x128xf32>
    %269 = arith.addf %261, %268 : vector<8x16x128xf32>
    %c0_209 = arith.constant 0 : index
    %c3_210 = arith.constant 3 : index
    %c0_211 = arith.constant 0 : index
    %c0_212 = arith.constant 0 : index
    %270 = vector.load %arg6[%c0_209, %c3_210, %c0_211, %c0_212] : memref<7x14x16x128xf32, #tpu.memory_space<vmem>>, vector<1x8x16x128xf32>
    %271 = vector.shape_cast %270 : vector<1x8x16x128xf32> to vector<8x16x128xf32>
    %c21 = arith.constant 21 : index
    %c0_213 = arith.constant 0 : index
    %c0_214 = arith.constant 0 : index
    %272 = vector.load %arg3[%c21, %c0_213, %c0_214] : memref<49x1x128xf32, #tpu.memory_space<vmem>>, vector<1x1x128xf32>
    %273 = vector.shape_cast %272 : vector<1x1x128xf32> to vector<1x128xf32>
    %274 = vector.shape_cast %273 : vector<1x128xf32> to vector<1x1x128xf32>
    %275 = vector.broadcast %274 : vector<1x1x128xf32> to vector<8x16x128xf32>
    %276 = arith.mulf %271, %275 : vector<8x16x128xf32>
    %277 = arith.addf %269, %276 : vector<8x16x128xf32>
    %c1_215 = arith.constant 1 : index
    %c3_216 = arith.constant 3 : index
    %c0_217 = arith.constant 0 : index
    %c0_218 = arith.constant 0 : index
    %278 = vector.load %arg6[%c1_215, %c3_216, %c0_217, %c0_218] : memref<7x14x16x128xf32, #tpu.memory_space<vmem>>, vector<1x8x16x128xf32>
    %279 = vector.shape_cast %278 : vector<1x8x16x128xf32> to vector<8x16x128xf32>
    %c22 = arith.constant 22 : index
    %c0_219 = arith.constant 0 : index
    %c0_220 = arith.constant 0 : index
    %280 = vector.load %arg3[%c22, %c0_219, %c0_220] : memref<49x1x128xf32, #tpu.memory_space<vmem>>, vector<1x1x128xf32>
    %281 = vector.shape_cast %280 : vector<1x1x128xf32> to vector<1x128xf32>
    %282 = vector.shape_cast %281 : vector<1x128xf32> to vector<1x1x128xf32>
    %283 = vector.broadcast %282 : vector<1x1x128xf32> to vector<8x16x128xf32>
    %284 = arith.mulf %279, %283 : vector<8x16x128xf32>
    %285 = arith.addf %277, %284 : vector<8x16x128xf32>
    %c2_221 = arith.constant 2 : index
    %c3_222 = arith.constant 3 : index
    %c0_223 = arith.constant 0 : index
    %c0_224 = arith.constant 0 : index
    %286 = vector.load %arg6[%c2_221, %c3_222, %c0_223, %c0_224] : memref<7x14x16x128xf32, #tpu.memory_space<vmem>>, vector<1x8x16x128xf32>
    %287 = vector.shape_cast %286 : vector<1x8x16x128xf32> to vector<8x16x128xf32>
    %c23 = arith.constant 23 : index
    %c0_225 = arith.constant 0 : index
    %c0_226 = arith.constant 0 : index
    %288 = vector.load %arg3[%c23, %c0_225, %c0_226] : memref<49x1x128xf32, #tpu.memory_space<vmem>>, vector<1x1x128xf32>
    %289 = vector.shape_cast %288 : vector<1x1x128xf32> to vector<1x128xf32>
    %290 = vector.shape_cast %289 : vector<1x128xf32> to vector<1x1x128xf32>
    %291 = vector.broadcast %290 : vector<1x1x128xf32> to vector<8x16x128xf32>
    %292 = arith.mulf %287, %291 : vector<8x16x128xf32>
    %293 = arith.addf %285, %292 : vector<8x16x128xf32>
    %c3_227 = arith.constant 3 : index
    %c3_228 = arith.constant 3 : index
    %c0_229 = arith.constant 0 : index
    %c0_230 = arith.constant 0 : index
    %294 = vector.load %arg6[%c3_227, %c3_228, %c0_229, %c0_230] : memref<7x14x16x128xf32, #tpu.memory_space<vmem>>, vector<1x8x16x128xf32>
    %295 = vector.shape_cast %294 : vector<1x8x16x128xf32> to vector<8x16x128xf32>
    %c24 = arith.constant 24 : index
    %c0_231 = arith.constant 0 : index
    %c0_232 = arith.constant 0 : index
    %296 = vector.load %arg3[%c24, %c0_231, %c0_232] : memref<49x1x128xf32, #tpu.memory_space<vmem>>, vector<1x1x128xf32>
    %297 = vector.shape_cast %296 : vector<1x1x128xf32> to vector<1x128xf32>
    %298 = vector.shape_cast %297 : vector<1x128xf32> to vector<1x1x128xf32>
    %299 = vector.broadcast %298 : vector<1x1x128xf32> to vector<8x16x128xf32>
    %300 = arith.mulf %295, %299 : vector<8x16x128xf32>
    %301 = arith.addf %293, %300 : vector<8x16x128xf32>
    %c4_233 = arith.constant 4 : index
    %c3_234 = arith.constant 3 : index
    %c0_235 = arith.constant 0 : index
    %c0_236 = arith.constant 0 : index
    %302 = vector.load %arg6[%c4_233, %c3_234, %c0_235, %c0_236] : memref<7x14x16x128xf32, #tpu.memory_space<vmem>>, vector<1x8x16x128xf32>
    %303 = vector.shape_cast %302 : vector<1x8x16x128xf32> to vector<8x16x128xf32>
    %c25 = arith.constant 25 : index
    %c0_237 = arith.constant 0 : index
    %c0_238 = arith.constant 0 : index
    %304 = vector.load %arg3[%c25, %c0_237, %c0_238] : memref<49x1x128xf32, #tpu.memory_space<vmem>>, vector<1x1x128xf32>
    %305 = vector.shape_cast %304 : vector<1x1x128xf32> to vector<1x128xf32>
    %306 = vector.shape_cast %305 : vector<1x128xf32> to vector<1x1x128xf32>
    %307 = vector.broadcast %306 : vector<1x1x128xf32> to vector<8x16x128xf32>
    %308 = arith.mulf %303, %307 : vector<8x16x128xf32>
    %309 = arith.addf %301, %308 : vector<8x16x128xf32>
    %c5_239 = arith.constant 5 : index
    %c3_240 = arith.constant 3 : index
    %c0_241 = arith.constant 0 : index
    %c0_242 = arith.constant 0 : index
    %310 = vector.load %arg6[%c5_239, %c3_240, %c0_241, %c0_242] : memref<7x14x16x128xf32, #tpu.memory_space<vmem>>, vector<1x8x16x128xf32>
    %311 = vector.shape_cast %310 : vector<1x8x16x128xf32> to vector<8x16x128xf32>
    %c26 = arith.constant 26 : index
    %c0_243 = arith.constant 0 : index
    %c0_244 = arith.constant 0 : index
    %312 = vector.load %arg3[%c26, %c0_243, %c0_244] : memref<49x1x128xf32, #tpu.memory_space<vmem>>, vector<1x1x128xf32>
    %313 = vector.shape_cast %312 : vector<1x1x128xf32> to vector<1x128xf32>
    %314 = vector.shape_cast %313 : vector<1x128xf32> to vector<1x1x128xf32>
    %315 = vector.broadcast %314 : vector<1x1x128xf32> to vector<8x16x128xf32>
    %316 = arith.mulf %311, %315 : vector<8x16x128xf32>
    %317 = arith.addf %309, %316 : vector<8x16x128xf32>
    %c6_245 = arith.constant 6 : index
    %c3_246 = arith.constant 3 : index
    %c0_247 = arith.constant 0 : index
    %c0_248 = arith.constant 0 : index
    %318 = vector.load %arg6[%c6_245, %c3_246, %c0_247, %c0_248] : memref<7x14x16x128xf32, #tpu.memory_space<vmem>>, vector<1x8x16x128xf32>
    %319 = vector.shape_cast %318 : vector<1x8x16x128xf32> to vector<8x16x128xf32>
    %c27 = arith.constant 27 : index
    %c0_249 = arith.constant 0 : index
    %c0_250 = arith.constant 0 : index
    %320 = vector.load %arg3[%c27, %c0_249, %c0_250] : memref<49x1x128xf32, #tpu.memory_space<vmem>>, vector<1x1x128xf32>
    %321 = vector.shape_cast %320 : vector<1x1x128xf32> to vector<1x128xf32>
    %322 = vector.shape_cast %321 : vector<1x128xf32> to vector<1x1x128xf32>
    %323 = vector.broadcast %322 : vector<1x1x128xf32> to vector<8x16x128xf32>
    %324 = arith.mulf %319, %323 : vector<8x16x128xf32>
    %325 = arith.addf %317, %324 : vector<8x16x128xf32>
    %c0_251 = arith.constant 0 : index
    %c4_252 = arith.constant 4 : index
    %c0_253 = arith.constant 0 : index
    %c0_254 = arith.constant 0 : index
    %326 = vector.load %arg6[%c0_251, %c4_252, %c0_253, %c0_254] : memref<7x14x16x128xf32, #tpu.memory_space<vmem>>, vector<1x8x16x128xf32>
    %327 = vector.shape_cast %326 : vector<1x8x16x128xf32> to vector<8x16x128xf32>
    %c28 = arith.constant 28 : index
    %c0_255 = arith.constant 0 : index
    %c0_256 = arith.constant 0 : index
    %328 = vector.load %arg3[%c28, %c0_255, %c0_256] : memref<49x1x128xf32, #tpu.memory_space<vmem>>, vector<1x1x128xf32>
    %329 = vector.shape_cast %328 : vector<1x1x128xf32> to vector<1x128xf32>
    %330 = vector.shape_cast %329 : vector<1x128xf32> to vector<1x1x128xf32>
    %331 = vector.broadcast %330 : vector<1x1x128xf32> to vector<8x16x128xf32>
    %332 = arith.mulf %327, %331 : vector<8x16x128xf32>
    %333 = arith.addf %325, %332 : vector<8x16x128xf32>
    %c1_257 = arith.constant 1 : index
    %c4_258 = arith.constant 4 : index
    %c0_259 = arith.constant 0 : index
    %c0_260 = arith.constant 0 : index
    %334 = vector.load %arg6[%c1_257, %c4_258, %c0_259, %c0_260] : memref<7x14x16x128xf32, #tpu.memory_space<vmem>>, vector<1x8x16x128xf32>
    %335 = vector.shape_cast %334 : vector<1x8x16x128xf32> to vector<8x16x128xf32>
    %c29 = arith.constant 29 : index
    %c0_261 = arith.constant 0 : index
    %c0_262 = arith.constant 0 : index
    %336 = vector.load %arg3[%c29, %c0_261, %c0_262] : memref<49x1x128xf32, #tpu.memory_space<vmem>>, vector<1x1x128xf32>
    %337 = vector.shape_cast %336 : vector<1x1x128xf32> to vector<1x128xf32>
    %338 = vector.shape_cast %337 : vector<1x128xf32> to vector<1x1x128xf32>
    %339 = vector.broadcast %338 : vector<1x1x128xf32> to vector<8x16x128xf32>
    %340 = arith.mulf %335, %339 : vector<8x16x128xf32>
    %341 = arith.addf %333, %340 : vector<8x16x128xf32>
    %c2_263 = arith.constant 2 : index
    %c4_264 = arith.constant 4 : index
    %c0_265 = arith.constant 0 : index
    %c0_266 = arith.constant 0 : index
    %342 = vector.load %arg6[%c2_263, %c4_264, %c0_265, %c0_266] : memref<7x14x16x128xf32, #tpu.memory_space<vmem>>, vector<1x8x16x128xf32>
    %343 = vector.shape_cast %342 : vector<1x8x16x128xf32> to vector<8x16x128xf32>
    %c30 = arith.constant 30 : index
    %c0_267 = arith.constant 0 : index
    %c0_268 = arith.constant 0 : index
    %344 = vector.load %arg3[%c30, %c0_267, %c0_268] : memref<49x1x128xf32, #tpu.memory_space<vmem>>, vector<1x1x128xf32>
    %345 = vector.shape_cast %344 : vector<1x1x128xf32> to vector<1x128xf32>
    %346 = vector.shape_cast %345 : vector<1x128xf32> to vector<1x1x128xf32>
    %347 = vector.broadcast %346 : vector<1x1x128xf32> to vector<8x16x128xf32>
    %348 = arith.mulf %343, %347 : vector<8x16x128xf32>
    %349 = arith.addf %341, %348 : vector<8x16x128xf32>
    %c3_269 = arith.constant 3 : index
    %c4_270 = arith.constant 4 : index
    %c0_271 = arith.constant 0 : index
    %c0_272 = arith.constant 0 : index
    %350 = vector.load %arg6[%c3_269, %c4_270, %c0_271, %c0_272] : memref<7x14x16x128xf32, #tpu.memory_space<vmem>>, vector<1x8x16x128xf32>
    %351 = vector.shape_cast %350 : vector<1x8x16x128xf32> to vector<8x16x128xf32>
    %c31 = arith.constant 31 : index
    %c0_273 = arith.constant 0 : index
    %c0_274 = arith.constant 0 : index
    %352 = vector.load %arg3[%c31, %c0_273, %c0_274] : memref<49x1x128xf32, #tpu.memory_space<vmem>>, vector<1x1x128xf32>
    %353 = vector.shape_cast %352 : vector<1x1x128xf32> to vector<1x128xf32>
    %354 = vector.shape_cast %353 : vector<1x128xf32> to vector<1x1x128xf32>
    %355 = vector.broadcast %354 : vector<1x1x128xf32> to vector<8x16x128xf32>
    %356 = arith.mulf %351, %355 : vector<8x16x128xf32>
    %357 = arith.addf %349, %356 : vector<8x16x128xf32>
    %c4_275 = arith.constant 4 : index
    %c4_276 = arith.constant 4 : index
    %c0_277 = arith.constant 0 : index
    %c0_278 = arith.constant 0 : index
    %358 = vector.load %arg6[%c4_275, %c4_276, %c0_277, %c0_278] : memref<7x14x16x128xf32, #tpu.memory_space<vmem>>, vector<1x8x16x128xf32>
    %359 = vector.shape_cast %358 : vector<1x8x16x128xf32> to vector<8x16x128xf32>
    %c32 = arith.constant 32 : index
    %c0_279 = arith.constant 0 : index
    %c0_280 = arith.constant 0 : index
    %360 = vector.load %arg3[%c32, %c0_279, %c0_280] : memref<49x1x128xf32, #tpu.memory_space<vmem>>, vector<1x1x128xf32>
    %361 = vector.shape_cast %360 : vector<1x1x128xf32> to vector<1x128xf32>
    %362 = vector.shape_cast %361 : vector<1x128xf32> to vector<1x1x128xf32>
    %363 = vector.broadcast %362 : vector<1x1x128xf32> to vector<8x16x128xf32>
    %364 = arith.mulf %359, %363 : vector<8x16x128xf32>
    %365 = arith.addf %357, %364 : vector<8x16x128xf32>
    %c5_281 = arith.constant 5 : index
    %c4_282 = arith.constant 4 : index
    %c0_283 = arith.constant 0 : index
    %c0_284 = arith.constant 0 : index
    %366 = vector.load %arg6[%c5_281, %c4_282, %c0_283, %c0_284] : memref<7x14x16x128xf32, #tpu.memory_space<vmem>>, vector<1x8x16x128xf32>
    %367 = vector.shape_cast %366 : vector<1x8x16x128xf32> to vector<8x16x128xf32>
    %c33 = arith.constant 33 : index
    %c0_285 = arith.constant 0 : index
    %c0_286 = arith.constant 0 : index
    %368 = vector.load %arg3[%c33, %c0_285, %c0_286] : memref<49x1x128xf32, #tpu.memory_space<vmem>>, vector<1x1x128xf32>
    %369 = vector.shape_cast %368 : vector<1x1x128xf32> to vector<1x128xf32>
    %370 = vector.shape_cast %369 : vector<1x128xf32> to vector<1x1x128xf32>
    %371 = vector.broadcast %370 : vector<1x1x128xf32> to vector<8x16x128xf32>
    %372 = arith.mulf %367, %371 : vector<8x16x128xf32>
    %373 = arith.addf %365, %372 : vector<8x16x128xf32>
    %c6_287 = arith.constant 6 : index
    %c4_288 = arith.constant 4 : index
    %c0_289 = arith.constant 0 : index
    %c0_290 = arith.constant 0 : index
    %374 = vector.load %arg6[%c6_287, %c4_288, %c0_289, %c0_290] : memref<7x14x16x128xf32, #tpu.memory_space<vmem>>, vector<1x8x16x128xf32>
    %375 = vector.shape_cast %374 : vector<1x8x16x128xf32> to vector<8x16x128xf32>
    %c34 = arith.constant 34 : index
    %c0_291 = arith.constant 0 : index
    %c0_292 = arith.constant 0 : index
    %376 = vector.load %arg3[%c34, %c0_291, %c0_292] : memref<49x1x128xf32, #tpu.memory_space<vmem>>, vector<1x1x128xf32>
    %377 = vector.shape_cast %376 : vector<1x1x128xf32> to vector<1x128xf32>
    %378 = vector.shape_cast %377 : vector<1x128xf32> to vector<1x1x128xf32>
    %379 = vector.broadcast %378 : vector<1x1x128xf32> to vector<8x16x128xf32>
    %380 = arith.mulf %375, %379 : vector<8x16x128xf32>
    %381 = arith.addf %373, %380 : vector<8x16x128xf32>
    %c0_293 = arith.constant 0 : index
    %c5_294 = arith.constant 5 : index
    %c0_295 = arith.constant 0 : index
    %c0_296 = arith.constant 0 : index
    %382 = vector.load %arg6[%c0_293, %c5_294, %c0_295, %c0_296] : memref<7x14x16x128xf32, #tpu.memory_space<vmem>>, vector<1x8x16x128xf32>
    %383 = vector.shape_cast %382 : vector<1x8x16x128xf32> to vector<8x16x128xf32>
    %c35 = arith.constant 35 : index
    %c0_297 = arith.constant 0 : index
    %c0_298 = arith.constant 0 : index
    %384 = vector.load %arg3[%c35, %c0_297, %c0_298] : memref<49x1x128xf32, #tpu.memory_space<vmem>>, vector<1x1x128xf32>
    %385 = vector.shape_cast %384 : vector<1x1x128xf32> to vector<1x128xf32>
    %386 = vector.shape_cast %385 : vector<1x128xf32> to vector<1x1x128xf32>
    %387 = vector.broadcast %386 : vector<1x1x128xf32> to vector<8x16x128xf32>
    %388 = arith.mulf %383, %387 : vector<8x16x128xf32>
    %389 = arith.addf %381, %388 : vector<8x16x128xf32>
    %c1_299 = arith.constant 1 : index
    %c5_300 = arith.constant 5 : index
    %c0_301 = arith.constant 0 : index
    %c0_302 = arith.constant 0 : index
    %390 = vector.load %arg6[%c1_299, %c5_300, %c0_301, %c0_302] : memref<7x14x16x128xf32, #tpu.memory_space<vmem>>, vector<1x8x16x128xf32>
    %391 = vector.shape_cast %390 : vector<1x8x16x128xf32> to vector<8x16x128xf32>
    %c36 = arith.constant 36 : index
    %c0_303 = arith.constant 0 : index
    %c0_304 = arith.constant 0 : index
    %392 = vector.load %arg3[%c36, %c0_303, %c0_304] : memref<49x1x128xf32, #tpu.memory_space<vmem>>, vector<1x1x128xf32>
    %393 = vector.shape_cast %392 : vector<1x1x128xf32> to vector<1x128xf32>
    %394 = vector.shape_cast %393 : vector<1x128xf32> to vector<1x1x128xf32>
    %395 = vector.broadcast %394 : vector<1x1x128xf32> to vector<8x16x128xf32>
    %396 = arith.mulf %391, %395 : vector<8x16x128xf32>
    %397 = arith.addf %389, %396 : vector<8x16x128xf32>
    %c2_305 = arith.constant 2 : index
    %c5_306 = arith.constant 5 : index
    %c0_307 = arith.constant 0 : index
    %c0_308 = arith.constant 0 : index
    %398 = vector.load %arg6[%c2_305, %c5_306, %c0_307, %c0_308] : memref<7x14x16x128xf32, #tpu.memory_space<vmem>>, vector<1x8x16x128xf32>
    %399 = vector.shape_cast %398 : vector<1x8x16x128xf32> to vector<8x16x128xf32>
    %c37 = arith.constant 37 : index
    %c0_309 = arith.constant 0 : index
    %c0_310 = arith.constant 0 : index
    %400 = vector.load %arg3[%c37, %c0_309, %c0_310] : memref<49x1x128xf32, #tpu.memory_space<vmem>>, vector<1x1x128xf32>
    %401 = vector.shape_cast %400 : vector<1x1x128xf32> to vector<1x128xf32>
    %402 = vector.shape_cast %401 : vector<1x128xf32> to vector<1x1x128xf32>
    %403 = vector.broadcast %402 : vector<1x1x128xf32> to vector<8x16x128xf32>
    %404 = arith.mulf %399, %403 : vector<8x16x128xf32>
    %405 = arith.addf %397, %404 : vector<8x16x128xf32>
    %c3_311 = arith.constant 3 : index
    %c5_312 = arith.constant 5 : index
    %c0_313 = arith.constant 0 : index
    %c0_314 = arith.constant 0 : index
    %406 = vector.load %arg6[%c3_311, %c5_312, %c0_313, %c0_314] : memref<7x14x16x128xf32, #tpu.memory_space<vmem>>, vector<1x8x16x128xf32>
    %407 = vector.shape_cast %406 : vector<1x8x16x128xf32> to vector<8x16x128xf32>
    %c38 = arith.constant 38 : index
    %c0_315 = arith.constant 0 : index
    %c0_316 = arith.constant 0 : index
    %408 = vector.load %arg3[%c38, %c0_315, %c0_316] : memref<49x1x128xf32, #tpu.memory_space<vmem>>, vector<1x1x128xf32>
    %409 = vector.shape_cast %408 : vector<1x1x128xf32> to vector<1x128xf32>
    %410 = vector.shape_cast %409 : vector<1x128xf32> to vector<1x1x128xf32>
    %411 = vector.broadcast %410 : vector<1x1x128xf32> to vector<8x16x128xf32>
    %412 = arith.mulf %407, %411 : vector<8x16x128xf32>
    %413 = arith.addf %405, %412 : vector<8x16x128xf32>
    %c4_317 = arith.constant 4 : index
    %c5_318 = arith.constant 5 : index
    %c0_319 = arith.constant 0 : index
    %c0_320 = arith.constant 0 : index
    %414 = vector.load %arg6[%c4_317, %c5_318, %c0_319, %c0_320] : memref<7x14x16x128xf32, #tpu.memory_space<vmem>>, vector<1x8x16x128xf32>
    %415 = vector.shape_cast %414 : vector<1x8x16x128xf32> to vector<8x16x128xf32>
    %c39 = arith.constant 39 : index
    %c0_321 = arith.constant 0 : index
    %c0_322 = arith.constant 0 : index
    %416 = vector.load %arg3[%c39, %c0_321, %c0_322] : memref<49x1x128xf32, #tpu.memory_space<vmem>>, vector<1x1x128xf32>
    %417 = vector.shape_cast %416 : vector<1x1x128xf32> to vector<1x128xf32>
    %418 = vector.shape_cast %417 : vector<1x128xf32> to vector<1x1x128xf32>
    %419 = vector.broadcast %418 : vector<1x1x128xf32> to vector<8x16x128xf32>
    %420 = arith.mulf %415, %419 : vector<8x16x128xf32>
    %421 = arith.addf %413, %420 : vector<8x16x128xf32>
    %c5_323 = arith.constant 5 : index
    %c5_324 = arith.constant 5 : index
    %c0_325 = arith.constant 0 : index
    %c0_326 = arith.constant 0 : index
    %422 = vector.load %arg6[%c5_323, %c5_324, %c0_325, %c0_326] : memref<7x14x16x128xf32, #tpu.memory_space<vmem>>, vector<1x8x16x128xf32>
    %423 = vector.shape_cast %422 : vector<1x8x16x128xf32> to vector<8x16x128xf32>
    %c40 = arith.constant 40 : index
    %c0_327 = arith.constant 0 : index
    %c0_328 = arith.constant 0 : index
    %424 = vector.load %arg3[%c40, %c0_327, %c0_328] : memref<49x1x128xf32, #tpu.memory_space<vmem>>, vector<1x1x128xf32>
    %425 = vector.shape_cast %424 : vector<1x1x128xf32> to vector<1x128xf32>
    %426 = vector.shape_cast %425 : vector<1x128xf32> to vector<1x1x128xf32>
    %427 = vector.broadcast %426 : vector<1x1x128xf32> to vector<8x16x128xf32>
    %428 = arith.mulf %423, %427 : vector<8x16x128xf32>
    %429 = arith.addf %421, %428 : vector<8x16x128xf32>
    %c6_329 = arith.constant 6 : index
    %c5_330 = arith.constant 5 : index
    %c0_331 = arith.constant 0 : index
    %c0_332 = arith.constant 0 : index
    %430 = vector.load %arg6[%c6_329, %c5_330, %c0_331, %c0_332] : memref<7x14x16x128xf32, #tpu.memory_space<vmem>>, vector<1x8x16x128xf32>
    %431 = vector.shape_cast %430 : vector<1x8x16x128xf32> to vector<8x16x128xf32>
    %c41 = arith.constant 41 : index
    %c0_333 = arith.constant 0 : index
    %c0_334 = arith.constant 0 : index
    %432 = vector.load %arg3[%c41, %c0_333, %c0_334] : memref<49x1x128xf32, #tpu.memory_space<vmem>>, vector<1x1x128xf32>
    %433 = vector.shape_cast %432 : vector<1x1x128xf32> to vector<1x128xf32>
    %434 = vector.shape_cast %433 : vector<1x128xf32> to vector<1x1x128xf32>
    %435 = vector.broadcast %434 : vector<1x1x128xf32> to vector<8x16x128xf32>
    %436 = arith.mulf %431, %435 : vector<8x16x128xf32>
    %437 = arith.addf %429, %436 : vector<8x16x128xf32>
    %c0_335 = arith.constant 0 : index
    %c6_336 = arith.constant 6 : index
    %c0_337 = arith.constant 0 : index
    %c0_338 = arith.constant 0 : index
    %438 = vector.load %arg6[%c0_335, %c6_336, %c0_337, %c0_338] : memref<7x14x16x128xf32, #tpu.memory_space<vmem>>, vector<1x8x16x128xf32>
    %439 = vector.shape_cast %438 : vector<1x8x16x128xf32> to vector<8x16x128xf32>
    %c42 = arith.constant 42 : index
    %c0_339 = arith.constant 0 : index
    %c0_340 = arith.constant 0 : index
    %440 = vector.load %arg3[%c42, %c0_339, %c0_340] : memref<49x1x128xf32, #tpu.memory_space<vmem>>, vector<1x1x128xf32>
    %441 = vector.shape_cast %440 : vector<1x1x128xf32> to vector<1x128xf32>
    %442 = vector.shape_cast %441 : vector<1x128xf32> to vector<1x1x128xf32>
    %443 = vector.broadcast %442 : vector<1x1x128xf32> to vector<8x16x128xf32>
    %444 = arith.mulf %439, %443 : vector<8x16x128xf32>
    %445 = arith.addf %437, %444 : vector<8x16x128xf32>
    %c1_341 = arith.constant 1 : index
    %c6_342 = arith.constant 6 : index
    %c0_343 = arith.constant 0 : index
    %c0_344 = arith.constant 0 : index
    %446 = vector.load %arg6[%c1_341, %c6_342, %c0_343, %c0_344] : memref<7x14x16x128xf32, #tpu.memory_space<vmem>>, vector<1x8x16x128xf32>
    %447 = vector.shape_cast %446 : vector<1x8x16x128xf32> to vector<8x16x128xf32>
    %c43 = arith.constant 43 : index
    %c0_345 = arith.constant 0 : index
    %c0_346 = arith.constant 0 : index
    %448 = vector.load %arg3[%c43, %c0_345, %c0_346] : memref<49x1x128xf32, #tpu.memory_space<vmem>>, vector<1x1x128xf32>
    %449 = vector.shape_cast %448 : vector<1x1x128xf32> to vector<1x128xf32>
    %450 = vector.shape_cast %449 : vector<1x128xf32> to vector<1x1x128xf32>
    %451 = vector.broadcast %450 : vector<1x1x128xf32> to vector<8x16x128xf32>
    %452 = arith.mulf %447, %451 : vector<8x16x128xf32>
    %453 = arith.addf %445, %452 : vector<8x16x128xf32>
    %c2_347 = arith.constant 2 : index
    %c6_348 = arith.constant 6 : index
    %c0_349 = arith.constant 0 : index
    %c0_350 = arith.constant 0 : index
    %454 = vector.load %arg6[%c2_347, %c6_348, %c0_349, %c0_350] : memref<7x14x16x128xf32, #tpu.memory_space<vmem>>, vector<1x8x16x128xf32>
    %455 = vector.shape_cast %454 : vector<1x8x16x128xf32> to vector<8x16x128xf32>
    %c44 = arith.constant 44 : index
    %c0_351 = arith.constant 0 : index
    %c0_352 = arith.constant 0 : index
    %456 = vector.load %arg3[%c44, %c0_351, %c0_352] : memref<49x1x128xf32, #tpu.memory_space<vmem>>, vector<1x1x128xf32>
    %457 = vector.shape_cast %456 : vector<1x1x128xf32> to vector<1x128xf32>
    %458 = vector.shape_cast %457 : vector<1x128xf32> to vector<1x1x128xf32>
    %459 = vector.broadcast %458 : vector<1x1x128xf32> to vector<8x16x128xf32>
    %460 = arith.mulf %455, %459 : vector<8x16x128xf32>
    %461 = arith.addf %453, %460 : vector<8x16x128xf32>
    %c3_353 = arith.constant 3 : index
    %c6_354 = arith.constant 6 : index
    %c0_355 = arith.constant 0 : index
    %c0_356 = arith.constant 0 : index
    %462 = vector.load %arg6[%c3_353, %c6_354, %c0_355, %c0_356] : memref<7x14x16x128xf32, #tpu.memory_space<vmem>>, vector<1x8x16x128xf32>
    %463 = vector.shape_cast %462 : vector<1x8x16x128xf32> to vector<8x16x128xf32>
    %c45 = arith.constant 45 : index
    %c0_357 = arith.constant 0 : index
    %c0_358 = arith.constant 0 : index
    %464 = vector.load %arg3[%c45, %c0_357, %c0_358] : memref<49x1x128xf32, #tpu.memory_space<vmem>>, vector<1x1x128xf32>
    %465 = vector.shape_cast %464 : vector<1x1x128xf32> to vector<1x128xf32>
    %466 = vector.shape_cast %465 : vector<1x128xf32> to vector<1x1x128xf32>
    %467 = vector.broadcast %466 : vector<1x1x128xf32> to vector<8x16x128xf32>
    %468 = arith.mulf %463, %467 : vector<8x16x128xf32>
    %469 = arith.addf %461, %468 : vector<8x16x128xf32>
    %c4_359 = arith.constant 4 : index
    %c6_360 = arith.constant 6 : index
    %c0_361 = arith.constant 0 : index
    %c0_362 = arith.constant 0 : index
    %470 = vector.load %arg6[%c4_359, %c6_360, %c0_361, %c0_362] : memref<7x14x16x128xf32, #tpu.memory_space<vmem>>, vector<1x8x16x128xf32>
    %471 = vector.shape_cast %470 : vector<1x8x16x128xf32> to vector<8x16x128xf32>
    %c46 = arith.constant 46 : index
    %c0_363 = arith.constant 0 : index
    %c0_364 = arith.constant 0 : index
    %472 = vector.load %arg3[%c46, %c0_363, %c0_364] : memref<49x1x128xf32, #tpu.memory_space<vmem>>, vector<1x1x128xf32>
    %473 = vector.shape_cast %472 : vector<1x1x128xf32> to vector<1x128xf32>
    %474 = vector.shape_cast %473 : vector<1x128xf32> to vector<1x1x128xf32>
    %475 = vector.broadcast %474 : vector<1x1x128xf32> to vector<8x16x128xf32>
    %476 = arith.mulf %471, %475 : vector<8x16x128xf32>
    %477 = arith.addf %469, %476 : vector<8x16x128xf32>
    %c5_365 = arith.constant 5 : index
    %c6_366 = arith.constant 6 : index
    %c0_367 = arith.constant 0 : index
    %c0_368 = arith.constant 0 : index
    %478 = vector.load %arg6[%c5_365, %c6_366, %c0_367, %c0_368] : memref<7x14x16x128xf32, #tpu.memory_space<vmem>>, vector<1x8x16x128xf32>
    %479 = vector.shape_cast %478 : vector<1x8x16x128xf32> to vector<8x16x128xf32>
    %c47 = arith.constant 47 : index
    %c0_369 = arith.constant 0 : index
    %c0_370 = arith.constant 0 : index
    %480 = vector.load %arg3[%c47, %c0_369, %c0_370] : memref<49x1x128xf32, #tpu.memory_space<vmem>>, vector<1x1x128xf32>
    %481 = vector.shape_cast %480 : vector<1x1x128xf32> to vector<1x128xf32>
    %482 = vector.shape_cast %481 : vector<1x128xf32> to vector<1x1x128xf32>
    %483 = vector.broadcast %482 : vector<1x1x128xf32> to vector<8x16x128xf32>
    %484 = arith.mulf %479, %483 : vector<8x16x128xf32>
    %485 = arith.addf %477, %484 : vector<8x16x128xf32>
    %c6_371 = arith.constant 6 : index
    %c6_372 = arith.constant 6 : index
    %c0_373 = arith.constant 0 : index
    %c0_374 = arith.constant 0 : index
    %486 = vector.load %arg6[%c6_371, %c6_372, %c0_373, %c0_374] : memref<7x14x16x128xf32, #tpu.memory_space<vmem>>, vector<1x8x16x128xf32>
    %487 = vector.shape_cast %486 : vector<1x8x16x128xf32> to vector<8x16x128xf32>
    %c48 = arith.constant 48 : index
    %c0_375 = arith.constant 0 : index
    %c0_376 = arith.constant 0 : index
    %488 = vector.load %arg3[%c48, %c0_375, %c0_376] : memref<49x1x128xf32, #tpu.memory_space<vmem>>, vector<1x1x128xf32>
    %489 = vector.shape_cast %488 : vector<1x1x128xf32> to vector<1x128xf32>
    %490 = vector.shape_cast %489 : vector<1x128xf32> to vector<1x1x128xf32>
    %491 = vector.broadcast %490 : vector<1x1x128xf32> to vector<8x16x128xf32>
    %492 = arith.mulf %487, %491 : vector<8x16x128xf32>
    %493 = arith.addf %485, %492 : vector<8x16x128xf32>
    %494 = arith.negf %493 : vector<8x16x128xf32>
    %495 = math.exp %494 : vector<8x16x128xf32>
    %cst_377 = arith.constant 1.000000e+00 : f32
    %496 = vector.broadcast %cst_377 : f32 to vector<8x16x128xf32>
    %497 = arith.addf %496, %495 : vector<8x16x128xf32>
    %498 = arith.divf %496, %497 : vector<8x16x128xf32>
    %c0_i32_378 = arith.constant 0 : i32
    %499 = arith.addi %1, %c0_i32_378 : i32
    %c0_379 = arith.constant 0 : index
    %500 = arith.index_cast %499 : i32 to index
    %c0_380 = arith.constant 0 : index
    %c0_381 = arith.constant 0 : index
    %501 = vector.load %arg2[%c0_379, %500, %c0_380, %c0_381] : memref<1x16x16x128xf32, #tpu.memory_space<vmem>>, vector<1x8x16x128xf32>
    %502 = vector.shape_cast %501 : vector<1x8x16x128xf32> to vector<8x16x128xf32>
    %503 = arith.mulf %502, %498 : vector<8x16x128xf32>
    %c0_382 = arith.constant 0 : index
    %c0_383 = arith.constant 0 : index
    %c0_384 = arith.constant 0 : index
    %c0_385 = arith.constant 0 : index
    %504 = vector.load %arg5[%c0_382, %c0_383, %c0_384, %c0_385] : memref<1x8x16x128xf32, #tpu.memory_space<vmem>>, vector<1x8x16x128xf32>
    %505 = vector.shape_cast %504 : vector<1x8x16x128xf32> to vector<8x16x128xf32>
    %506 = vector.shape_cast %503 : vector<8x16x128xf32> to vector<1x8x16x128xf32>
    tpu.vector_store %arg5[%c0_382, %c0_383, %c0_384, %c0_385], %506 {strides = array<i32>} : memref<1x8x16x128xf32, #tpu.memory_space<vmem>>, vector<1x8x16x128xf32>,
    return
  }
  func.func @transform_0(%arg0: i32, %arg1: i32) -> (i32, i32, i32, i32) {
    %c0_i32 = arith.constant 0 : i32
    %c0_i32_0 = arith.constant 0 : i32
    %c0_i32_1 = arith.constant 0 : i32
    %c0_i32_2 = arith.constant 0 : i32
    return %arg0, %c0_i32, %c0_i32_0, %c0_i32_1 : i32, i32, i32, i32
  }
  func.func @transform_1(%arg0: i32, %arg1: i32) -> (i32, i32, i32) {
    %c0_i32 = arith.constant 0 : i32
    %c0_i32_0 = arith.constant 0 : i32
    %c0_i32_1 = arith.constant 0 : i32
    %c0_i32_2 = arith.constant 0 : i32
    return %c0_i32, %c0_i32_0, %c0_i32_1 : i32, i32, i32
  }
  func.func @transform_2(%arg0: i32, %arg1: i32) -> (i32, i32, i32) {
    %c0_i32 = arith.constant 0 : i32
    %c0_i32_0 = arith.constant 0 : i32
    %c0_i32_1 = arith.constant 0 : i32
    %c0_i32_2 = arith.constant 0 : i32
    return %c0_i32, %c0_i32_0, %c0_i32_1 : i32, i32, i32
  }
  func.func @transform_3(%arg0: i32, %arg1: i32) -> (i32, i32, i32, i32) {
    %c0_i32 = arith.constant 0 : i32
    %c0_i32_0 = arith.constant 0 : i32
    %c0_i32_1 = arith.constant 0 : i32
    return %arg0, %arg1, %c0_i32, %c0_i32_0 : i32, i32, i32, i32
  }
}

</mosaic_0001>

<llo_original>
// kernel: tpu_custom_call.1
$region0: #{tpu_custom_call.1}
  #allocation0 [shape = 'u32[]', space=smem, size = 0x4, offset = 0x4, fixed_abs, tag = 'smem constant byte address 0x4 - core index']
  #allocation1 [shape = 'u32[72,128]{1,0:T(1,128)}', space=vmem, size = 0x9000, scoped, tag = 'internal scratch']
  #allocation2 [shape = 'f32[7,14,16,128]{3,2,1,0:T(8,128)}', space=vmem, size = 0xc4000, scoped, tag = 'scratch operand']
  %s0 = inlined_call_operand.hbm [shape: f32[1,16,16,128], index: 0, kind: input, shape index: {}]
  %s1 = inlined_call_operand.hbm [shape: f32[49,1,128], index: 1, kind: input, shape index: {}]
  %s2 = inlined_call_operand.vmem [shape: f32[1,1,128], index: 2, kind: input, shape index: {}]
  %s3 = inlined_call_operand.hbm [shape: f32[1,16,16,128], index: 3, kind: output, shape index: {}]
  %s4 = sld [smem:[#allocation0]]
  $region69: #{tpu_custom_call.1} parent=0
    _
  %s6 = ssub.s32 1, %s4
  %s7 = scalar_select 0, %s6, %s4
  $region1: #{tpu_custom_call.1} parent=0
    #allocation3 [shape = 'u8[131072]{0}', space=vmem, size = 0x20000, scoped, tag = 'input window, operand 0, single buffered']
    #allocation4 [shape = 's32[2]{0}', space=sflag, size = 0x8, scoped, tag = 'scoped memory for tpu_custom_call.1']
    #allocation5 [shape = 's32[2]{0}', space=sflag, size = 0x8, scoped, tag = 'scoped memory for tpu_custom_call.1']
    #allocation6 [shape = 'u8[25088]{0}', space=vmem, size = 0x6400, scoped, tag = 'input window, operand 1, single buffered']
    #allocation7 [shape = 's32[1]{0}', space=sflag, size = 0x4, scoped, tag = 'scoped memory for tpu_custom_call.1']
    #allocation8 [shape = 'u8[131072]{0}', space=vmem, size = 0x20000, scoped, tag = 'output window, operand 0']
    %8 = vsyncpa [#allocation4], 0
    %9 = vsyncpa [#allocation7], 0
    %10 = vsyncpa [#allocation5], 0
    %s11 = scalar_lea.sflag [#allocation5], 1
    %12 = vsyncpa %s11, 0
    loop: start=0, step=1, limit=4
    $region2: #{tpu_custom_call.1} parent=1 // loop_pre_header
      _
    $region3: #{tpu_custom_call.1} parent=1 // loop_header
      %s14 = sphi 0, %s18
      %p15 = scmp.ge.s32.totalorder %s14, 4
      %s21 = sphi 0, %s33
      %s22 = sphi 0, %s29
      %s23 = sphi 0, %s21
      %s24 = sphi 0, %s22
      %s25 = sphi 0, %s23
      %s26 = sphi 0, %s24
      %s36 = sphi 0, %s38
      %s39 = sphi 0, %s36
      %s40 = sphi 0, %s39
      %s56 = sphi 0, %s40
      %s60 = sphi 0, %s60
      %s62 = sphi 0, %s60
      %s63 = sphi 0, %s62
      %s77 = sphi 0, %s63
      %s81 = sphi 0, %s81
      %s83 = sphi 0, %s81
      %s84 = sphi 0, %s83
      %s98 = sphi 0, %s84
      %s106 = sphi 0, %s108
      %s109 = sphi 0, %s106
      %s110 = sphi 0, %s109
      %s126 = sphi 0, %s110
    $region4: #{tpu_custom_call.1} parent=1 // loop_header_branch
      %17 = sbr.rel (%p15) target = $region8
    $region5: #{tpu_custom_call.1} parent=1 // loop_body
      %s19 = ssub.s32 %s14, 1
      %s20 = ssub.s32 %s14, 2
      %s27 = sadd.s32 1, %s22
      %p28 = scmp.ge.s32.totalorder %s27, 2
      %s29 = scalar_select %p28, 0, %s27
      %s30 = sadd.s32 1, %s21
      %s31 = scalar_select %p28, %s30, %s21
      %p32 = scmp.ge.s32.totalorder %s31, 1
      %s33 = scalar_select %p32, 0, %s31
      %s34 = ssub.s32 %s21, %s33
      %p35 = scmp.eq.s32.totalorder %s34, 0
      %s37 = sadd.s32 %s36, 1
      %s38 = scalar_select %p35, %s36, %s37
      %p41 = pneg %p35
      %p42 = scmp.eq.s32.totalorder %s14, 1
      %p43 = por %p41, %p42
      %p44 = scmp.ne.s32.totalorder %s36, %s39
      %p45 = scmp.eq.s32.totalorder %s14, 0
      %p46 = por %p44, %p45
      %p47 = scmp.ne.s32.totalorder %s36, %s39
      %p48 = scmp.eq.s32.totalorder %s19, 1
      %p49 = por %p47, %p48
      %p50 = scmp.ne.s32.totalorder %s39, %s40
      %p51 = scmp.eq.s32.totalorder %s19, 0
      %p52 = por %p50, %p51
      %p53 = scmp.ne.s32.totalorder %s39, %s40
      %p54 = scmp.eq.s32.totalorder %s20, 1
      %p55 = por %p53, %p54
      %p57 = scmp.ne.s32.totalorder %s40, %s56
      %p58 = scmp.eq.s32.totalorder %s20, 0
      %p59 = por %p57, %p58
      %s61 = sadd.s32 %s60, 1
      %p64 = scmp.eq.s32.totalorder %s14, 1
      %p65 = scmp.ne.s32.totalorder %s60, %s62
      %p66 = scmp.eq.s32.totalorder %s14, 0
      %p67 = por %p65, %p66
      %p68 = scmp.ne.s32.totalorder %s60, %s62
      %p69 = scmp.eq.s32.totalorder %s19, 1
      %p70 = por %p68, %p69
      %p71 = scmp.ne.s32.totalorder %s62, %s63
      %p72 = scmp.eq.s32.totalorder %s19, 0
      %p73 = por %p71, %p72
      %p74 = scmp.ne.s32.totalorder %s62, %s63
      %p75 = scmp.eq.s32.totalorder %s20, 1
      %p76 = por %p74, %p75
      %p78 = scmp.ne.s32.totalorder %s63, %s77
      %p79 = scmp.eq.s32.totalorder %s20, 0
      %p80 = por %p78, %p79
      %s82 = sadd.s32 %s81, 1
      %p85 = scmp.eq.s32.totalorder %s14, 1
      %p86 = scmp.ne.s32.totalorder %s81, %s83
      %p87 = scmp.eq.s32.totalorder %s14, 0
      %p88 = por %p86, %p87
      %p89 = scmp.ne.s32.totalorder %s81, %s83
      %p90 = scmp.eq.s32.totalorder %s19, 1
      %p91 = por %p89, %p90
      %p92 = scmp.ne.s32.totalorder %s83, %s84
      %p93 = scmp.eq.s32.totalorder %s19, 0
      %p94 = por %p92, %p93
      %p95 = scmp.ne.s32.totalorder %s83, %s84
      %p96 = scmp.eq.s32.totalorder %s20, 1
      %p97 = por %p95, %p96
      %p99 = scmp.ne.s32.totalorder %s84, %s98
      %p100 = scmp.eq.s32.totalorder %s20, 0
      %p101 = por %p99, %p100
      %s102 = ssub.s32 %s21, %s33
      %s103 = ssub.s32 %s22, %s29
      %s104 = sor.u32 %s102, %s103
      %p105 = scmp.eq.s32.totalorder %s104, 0
      %s107 = sadd.s32 %s106, 1
      %s108 = scalar_select %p105, %s106, %s107
      %p111 = pneg %p105
      %p112 = scmp.eq.s32.totalorder %s14, 1
      %p113 = por %p111, %p112
      %p114 = scmp.ne.s32.totalorder %s106, %s109
      %p115 = scmp.eq.s32.totalorder %s14, 0
      %p116 = por %p114, %p115
      %p117 = scmp.ne.s32.totalorder %s106, %s109
      %p118 = scmp.eq.s32.totalorder %s19, 1
      %p119 = por %p117, %p118
      %p120 = scmp.ne.s32.totalorder %s109, %s110
      %p121 = scmp.eq.s32.totalorder %s19, 0
      %p122 = por %p120, %p121
      %p123 = scmp.ne.s32.totalorder %s109, %s110
      %p124 = scmp.eq.s32.totalorder %s20, 1
      %p125 = por %p123, %p124
      %p127 = scmp.ne.s32.totalorder %s110, %s126
      %p128 = scmp.eq.s32.totalorder %s20, 0
      %p129 = por %p127, %p128
      %p130 = scmp.le.s32.totalorder 1, %s14
      %p131 = scmp.lt.s32.totalorder %s14, 3
      %p132 = pnand %p130, %p131
      %p133 = pneg %p132
      // Predicated region
      $region9: #{tpu_custom_call.1} parent=5 // pred_check
        _
      $region10: #{tpu_custom_call.1} parent=5 // pred_check_branch
        %135 = sbr.rel (%p132) target = $region12
      $region11: #{tpu_custom_call.1} parent=5 // pred_region
        %s136 = ssub.s32 %s14, 1
        // Predicated region
        $region13: #{tpu_custom_call.1} parent=11 // pred_check
          %p137 = pneg %p52
        $region14: #{tpu_custom_call.1} parent=11 // pred_check_branch
          %139 = sbr.rel (%p137) target = $region16
        $region15: #{tpu_custom_call.1} parent=11 // pred_region
          %141 = vsyncadd [#allocation4], 0
          %s142 = smul.addr %s23, 32
          %s143 = smul.addr %s142, 8
          %s144 = scalar_lea.hbm %s0, %s143
          %s145 = sshll.u32 %s144, 4
          %s146 = int_to_ptr.hbm [resolvable:$true] %s145
          %s147 = sshll.u32 [#allocation3], 4
          %s148 = int_to_ptr.vmem [resolvable:$true] %s147
          %153 = dma.hbm_to_vmem [thread:$0]  %s146, 4096, %s148, [#allocation4], 128, 128, 8
        $region16: #{tpu_custom_call.1} parent=11 // pred_fallthru
          _
        // Predicated region
        $region17: #{tpu_custom_call.1} parent=11 // pred_check
          %p154 = pneg %p73
        $region18: #{tpu_custom_call.1} parent=11 // pred_check_branch
          %156 = sbr.rel (%p154) target = $region20
        $region19: #{tpu_custom_call.1} parent=11 // pred_region
          %158 = vsyncadd [#allocation7], 0
          %s159 = sshll.u32 %s1, 4
          %s160 = int_to_ptr.hbm [resolvable:$true] %s159
          %s161 = sshll.u32 [#allocation6], 4
          %s162 = int_to_ptr.vmem [resolvable:$true] %s161
          %167 = dma.hbm_to_vmem [thread:$0]  %s160, 784, %s162, [#allocation7], 16, 16, 1
        $region20: #{tpu_custom_call.1} parent=11 // pred_fallthru
          _
        // Predicated region
        $region21: #{tpu_custom_call.1} parent=11 // pred_check
          %p168 = pneg %p94
        $region22: #{tpu_custom_call.1} parent=11 // pred_check_branch
          %170 = sbr.rel (%p168) target = $region24
        $region23: #{tpu_custom_call.1} parent=11 // pred_region
          _
        $region24: #{tpu_custom_call.1} parent=11 // pred_fallthru
          _
      $region12: #{tpu_custom_call.1} parent=5 // pred_fallthru
        _
      %p171 = scmp.lt.s32.totalorder %s14, 2
      // Predicated region
      $region25: #{tpu_custom_call.1} parent=5 // pred_check
        %p172 = pneg %p171
      $region26: #{tpu_custom_call.1} parent=5 // pred_check_branch
        %174 = sbr.rel (%p172) target = $region28
      $region27: #{tpu_custom_call.1} parent=5 // pred_region
        _
      $region28: #{tpu_custom_call.1} parent=5 // pred_fallthru
        _
      %p175 = scmp.le.s32.totalorder 1, %s14
      %p176 = scmp.lt.s32.totalorder %s14, 3
      %p177 = pnand %p175, %p176
      %p178 = pneg %p177
      // Predicated region
      $region29: #{tpu_custom_call.1} parent=5 // pred_check
        _
      $region30: #{tpu_custom_call.1} parent=5 // pred_check_branch
        %180 = sbr.rel (%p177) target = $region32
      $region31: #{tpu_custom_call.1} parent=5 // pred_region
        %s181 = ssub.s32 %s14, 1
        // Predicated region
        $region33: #{tpu_custom_call.1} parent=31 // pred_check
          %p182 = pneg %p52
        $region34: #{tpu_custom_call.1} parent=31 // pred_check_branch
          %184 = sbr.rel (%p182) target = $region36
        $region35: #{tpu_custom_call.1} parent=31 // pred_region
          %186 = dma.done [#allocation4], 4096
        $region36: #{tpu_custom_call.1} parent=31 // pred_fallthru
          _
        // Predicated region
        $region37: #{tpu_custom_call.1} parent=31 // pred_check
          %p187 = pneg %p73
        $region38: #{tpu_custom_call.1} parent=31 // pred_check_branch
          %189 = sbr.rel (%p187) target = $region40
        $region39: #{tpu_custom_call.1} parent=31 // pred_region
          %191 = dma.done [#allocation7], 784
        $region40: #{tpu_custom_call.1} parent=31 // pred_fallthru
          _
        %p192 = pneg %p52
        %p193 = pneg %p49
        %p194 = pneg %p73
        %p195 = pneg %p70
        %p196 = pneg %p94
        %p197 = pneg %p91
        %p198 = pneg %p122
        %p199 = pneg %p119
        %s200 = sand.u32 %s109, 1
        %s201 = scalar_lea.sflag [#allocation5], %s200
        %s202 = sand.u32 %s109, 1
        %s203 = smul.addr %s202, 128
        %s204 = scalar_lea.vmem [#allocation8], %s203
        %s205 = smul.u32 8, %s24
        %s206 = smul.u32 %s24, 8
        %s207 = smul.u32 %s206, 16
        %s208 = scalar_lea.vmem [#allocation3], %s207
        %v209 = vld [vmem:[%s208] sm:$0xff]
        %v210 = vld [vmem:[%s208 + $0x8] sm:$0xff]
        %v211 = vld [vmem:[%s208 + $0x10] sm:$0xff]
        %v212 = vld [vmem:[%s208 + $0x18] sm:$0xff]
        %v213 = vld [vmem:[%s208 + $0x20] sm:$0xff]
        %v214 = vld [vmem:[%s208 + $0x28] sm:$0xff]
        %v215 = vld [vmem:[%s208 + $0x30] sm:$0xff]
        %v216 = vld [vmem:[%s208 + $0x38] sm:$0xff]
        %v217 = vld [vmem:[%s208 + $0x40] sm:$0xff]
        %v218 = vld [vmem:[%s208 + $0x48] sm:$0xff]
        %v219 = vmax.f32 %v209, 0.0
        %v220 = vmax.f32 %v210, 0.0
        %v221 = vmax.f32 %v211, 0.0
        %v222 = vmax.f32 %v212, 0.0
        %v223 = vmax.f32 %v213, 0.0
        %v224 = vmax.f32 %v214, 0.0
        %v225 = vmax.f32 %v215, 0.0
        %v226 = vmax.f32 %v216, 0.0
        %v227 = vmax.f32 %v217, 0.0
        %v228 = vmax.f32 %v218, 0.0
        %v229 = vrot.slane %v219, 5
        %v230 = vrot.slane %v221, 5
        %v231 = vrot.slane %v223, 5
        %v232 = vrot.slane %v225, 5
        %v233 = vrot.slane %v227, 5
        %v234 = vrot.slane %v220, 5
        %v235 = vrot.slane %v222, 5
        %v236 = vrot.slane %v224, 5
        %v237 = vrot.slane %v226, 5
        %v238 = vrot.slane %v228, 5
        %v239 = vlaneseq
        %v240 = vshrl.u32 %v239, 7
        %vm241 = vcmp.lt.s32.totalorder %v240, 3
        %v242 = vsel %vm241, %v229, %v234
        %v243 = vsel %vm241, %v230, %v235
        %v244 = vsel %vm241, %v231, %v236
        %v245 = vsel %vm241, %v232, %v237
        %v246 = vsel %vm241, %v233, %v238
        %v247 = vsel %vm241, 0.0, %v229
        %v248 = vsel %vm241, 0.0, %v230
        %v249 = vsel %vm241, 0.0, %v231
        %v250 = vsel %vm241, 0.0, %v232
        %v251 = vsel %vm241, 0.0, %v233
        %s252 = scalar_lea.vmem [#allocation2], 48
        %253 = vst [vmem:[%s252] sm:$0xff] %v247
        %254 = vst [vmem:[%s252 + $0x8] sm:$0xff] %v242
        %255 = vst [vmem:[%s252 + $0x10] sm:$0xff] %v248
        %256 = vst [vmem:[%s252 + $0x18] sm:$0xff] %v243
        %257 = vst [vmem:[%s252 + $0x20] sm:$0xff] %v249
        %258 = vst [vmem:[%s252 + $0x28] sm:$0xff] %v244
        %259 = vst [vmem:[%s252 + $0x30] sm:$0xff] %v250
        %260 = vst [vmem:[%s252 + $0x38] sm:$0xff] %v245
        %261 = vst [vmem:[%s252 + $0x40] sm:$0xff] %v251
        %262 = vst [vmem:[%s252 + $0x48] sm:$0xff] %v246
        %v263 = vrot.slane %v219, 6
        %v264 = vrot.slane %v221, 6
        %v265 = vrot.slane %v223, 6
        %v266 = vrot.slane %v225, 6
        %v267 = vrot.slane %v227, 6
        %v268 = vrot.slane %v220, 6
        %v269 = vrot.slane %v222, 6
        %v270 = vrot.slane %v224, 6
        %v271 = vrot.slane %v226, 6
        %v272 = vrot.slane %v228, 6
        %vm273 = vcmp.lt.s32.totalorder %v240, 2
        %v274 = vsel %vm273, %v263, %v268
        %v275 = vsel %vm273, %v264, %v269
        %v276 = vsel %vm273, %v265, %v270
        %v277 = vsel %vm273, %v266, %v271
        %v278 = vsel %vm273, %v267, %v272
        %v279 = vsel %vm273, 0.0, %v263
        %v280 = vsel %vm273, 0.0, %v264
        %v281 = vsel %vm273, 0.0, %v265
        %v282 = vsel %vm273, 0.0, %v266
        %v283 = vsel %vm273, 0.0, %v267
        %s284 = scalar_lea.vmem [#allocation2], 272
        %285 = vst [vmem:[%s284] sm:$0xff] %v279
        %286 = vst [vmem:[%s284 + $0x8] sm:$0xff] %v274
        %287 = vst [vmem:[%s284 + $0x10] sm:$0xff] %v280
        %288 = vst [vmem:[%s284 + $0x18] sm:$0xff] %v275
        %289 = vst [vmem:[%s284 + $0x20] sm:$0xff] %v281
        %290 = vst [vmem:[%s284 + $0x28] sm:$0xff] %v276
        %291 = vst [vmem:[%s284 + $0x30] sm:$0xff] %v282
        %292 = vst [vmem:[%s284 + $0x38] sm:$0xff] %v277
        %293 = vst [vmem:[%s284 + $0x40] sm:$0xff] %v283
        %294 = vst [vmem:[%s284 + $0x48] sm:$0xff] %v278
        %v295 = vrot.slane %v219, 7
        %v296 = vrot.slane %v221, 7
        %v297 = vrot.slane %v223, 7
        %v298 = vrot.slane %v225, 7
        %v299 = vrot.slane %v227, 7
        %v300 = vrot.slane %v220, 7
        %v301 = vrot.slane %v222, 7
        %v302 = vrot.slane %v224, 7
        %v303 = vrot.slane %v226, 7
        %v304 = vrot.slane %v228, 7
        %vm305 = vcmp.lt.s32.totalorder %v240, 1
        %v306 = vsel %vm305, %v295, %v300
        %v307 = vsel %vm305, %v296, %v301
        %v308 = vsel %vm305, %v297, %v302
        %v309 = vsel %vm305, %v298, %v303
        %v310 = vsel %vm305, %v299, %v304
        %v311 = vsel %vm305, 0.0, %v295
        %v312 = vsel %vm305, 0.0, %v296
        %v313 = vsel %vm305, 0.0, %v297
        %v314 = vsel %vm305, 0.0, %v298
        %v315 = vsel %vm305, 0.0, %v299
        %s316 = scalar_lea.vmem [#allocation2], 496
        %317 = vst [vmem:[%s316] sm:$0xff] %v311
        %318 = vst [vmem:[%s316 + $0x8] sm:$0xff] %v306
        %319 = vst [vmem:[%s316 + $0x10] sm:$0xff] %v312
        %320 = vst [vmem:[%s316 + $0x18] sm:$0xff] %v307
        %321 = vst [vmem:[%s316 + $0x20] sm:$0xff] %v313
        %322 = vst [vmem:[%s316 + $0x28] sm:$0xff] %v308
        %323 = vst [vmem:[%s316 + $0x30] sm:$0xff] %v314
        %324 = vst [vmem:[%s316 + $0x38] sm:$0xff] %v309
        %325 = vst [vmem:[%s316 + $0x40] sm:$0xff] %v315
        %326 = vst [vmem:[%s316 + $0x48] sm:$0xff] %v310
        %s327 = scalar_lea.vmem [#allocation2], 720
        %328 = vst [vmem:[%s327] sm:$0xff] %v219
        %329 = vst [vmem:[%s327 + $0x8] sm:$0xff] %v220
        %330 = vst [vmem:[%s327 + $0x10] sm:$0xff] %v221
        %331 = vst [vmem:[%s327 + $0x18] sm:$0xff] %v222
        %332 = vst [vmem:[%s327 + $0x20] sm:$0xff] %v223
        %333 = vst [vmem:[%s327 + $0x28] sm:$0xff] %v224
        %334 = vst [vmem:[%s327 + $0x30] sm:$0xff] %v225
        %335 = vst [vmem:[%s327 + $0x38] sm:$0xff] %v226
        %336 = vst [vmem:[%s327 + $0x40] sm:$0xff] %v227
        %337 = vst [vmem:[%s327 + $0x48] sm:$0xff] %v228
        %v338 = vrot.slane %v219, 1
        %v339 = vrot.slane %v221, 1
        %v340 = vrot.slane %v223, 1
        %v341 = vrot.slane %v225, 1
        %v342 = vrot.slane %v227, 1
        %v343 = vrot.slane %v220, 1
        %v344 = vrot.slane %v222, 1
        %v345 = vrot.slane %v224, 1
        %v346 = vrot.slane %v226, 1
        %v347 = vrot.slane %v228, 1
        %vm348 = vcmp.lt.s32.totalorder %v240, 7
        %v349 = vsel %vm348, %v343, 0.0
        %v350 = vsel %vm348, %v344, 0.0
        %v351 = vsel %vm348, %v345, 0.0
        %v352 = vsel %vm348, %v346, 0.0
        %v353 = vsel %vm348, %v347, 0.0
        %v354 = vsel %vm348, %v338, %v343
        %v355 = vsel %vm348, %v339, %v344
        %v356 = vsel %vm348, %v340, %v345
        %v357 = vsel %vm348, %v341, %v346
        %v358 = vsel %vm348, %v342, %v347
        %s359 = scalar_lea.vmem [#allocation2], 944
        %360 = vst [vmem:[%s359] sm:$0xff] %v354
        %361 = vst [vmem:[%s359 + $0x8] sm:$0xff] %v349
        %362 = vst [vmem:[%s359 + $0x10] sm:$0xff] %v355
        %363 = vst [vmem:[%s359 + $0x18] sm:$0xff] %v350
        %364 = vst [vmem:[%s359 + $0x20] sm:$0xff] %v356
        %365 = vst [vmem:[%s359 + $0x28] sm:$0xff] %v351
        %366 = vst [vmem:[%s359 + $0x30] sm:$0xff] %v357
        %367 = vst [vmem:[%s359 + $0x38] sm:$0xff] %v352
        %368 = vst [vmem:[%s359 + $0x40] sm:$0xff] %v358
        %369 = vst [vmem:[%s359 + $0x48] sm:$0xff] %v353
        %v370 = vrot.slane %v219, 2
        %v371 = vrot.slane %v221, 2
        %v372 = vrot.slane %v223, 2
        %v373 = vrot.slane %v225, 2
        %v374 = vrot.slane %v227, 2
        %v375 = vrot.slane %v220, 2
        %v376 = vrot.slane %v222, 2
        %v377 = vrot.slane %v224, 2
        %v378 = vrot.slane %v226, 2
        %v379 = vrot.slane %v228, 2
        %vm380 = vcmp.lt.s32.totalorder %v240, 6
        %v381 = vsel %vm380, %v375, 0.0
        %v382 = vsel %vm380, %v376, 0.0
        %v383 = vsel %vm380, %v377, 0.0
        %v384 = vsel %vm380, %v378, 0.0
        %v385 = vsel %vm380, %v379, 0.0
        %v386 = vsel %vm380, %v370, %v375
        %v387 = vsel %vm380, %v371, %v376
        %v388 = vsel %vm380, %v372, %v377
        %v389 = vsel %vm380, %v373, %v378
        %v390 = vsel %vm380, %v374, %v379
        %s391 = scalar_lea.vmem [#allocation2], 1168
        %392 = vst [vmem:[%s391] sm:$0xff] %v386
        %393 = vst [vmem:[%s391 + $0x8] sm:$0xff] %v381
        %394 = vst [vmem:[%s391 + $0x10] sm:$0xff] %v387
        %395 = vst [vmem:[%s391 + $0x18] sm:$0xff] %v382
        %396 = vst [vmem:[%s391 + $0x20] sm:$0xff] %v388
        %397 = vst [vmem:[%s391 + $0x28] sm:$0xff] %v383
        %398 = vst [vmem:[%s391 + $0x30] sm:$0xff] %v389
        %399 = vst [vmem:[%s391 + $0x38] sm:$0xff] %v384
        %400 = vst [vmem:[%s391 + $0x40] sm:$0xff] %v390
        %401 = vst [vmem:[%s391 + $0x48] sm:$0xff] %v385
        %v402 = vrot.slane %v219, 3
        %v403 = vrot.slane %v221, 3
        %v404 = vrot.slane %v223, 3
        %v405 = vrot.slane %v225, 3
        %v406 = vrot.slane %v227, 3
        %v407 = vrot.slane %v220, 3
        %v408 = vrot.slane %v222, 3
        %v409 = vrot.slane %v224, 3
        %v410 = vrot.slane %v226, 3
        %v411 = vrot.slane %v228, 3
        %vm412 = vcmp.lt.s32.totalorder %v240, 5
        %v413 = vsel %vm412, %v407, 0.0
        %v414 = vsel %vm412, %v408, 0.0
        %v415 = vsel %vm412, %v409, 0.0
        %v416 = vsel %vm412, %v410, 0.0
        %v417 = vsel %vm412, %v411, 0.0
        %v418 = vsel %vm412, %v402, %v407
        %v419 = vsel %vm412, %v403, %v408
        %v420 = vsel %vm412, %v404, %v409
        %v421 = vsel %vm412, %v405, %v410
        %v422 = vsel %vm412, %v406, %v411
        %s423 = scalar_lea.vmem [#allocation2], 1392
        %424 = vst [vmem:[%s423] sm:$0xff] %v418
        %425 = vst [vmem:[%s423 + $0x8] sm:$0xff] %v413
        %426 = vst [vmem:[%s423 + $0x10] sm:$0xff] %v419
        %427 = vst [vmem:[%s423 + $0x18] sm:$0xff] %v414
        %428 = vst [vmem:[%s423 + $0x20] sm:$0xff] %v420
        %429 = vst [vmem:[%s423 + $0x28] sm:$0xff] %v415
        %430 = vst [vmem:[%s423 + $0x30] sm:$0xff] %v421
        %431 = vst [vmem:[%s423 + $0x38] sm:$0xff] %v416
        %432 = vst [vmem:[%s423 + $0x40] sm:$0xff] %v422
        %433 = vst [vmem:[%s423 + $0x48] sm:$0xff] %v417
        %s434 = sadd.s32 %s206, 5
        %s435 = smul.u32 %s434, 16
        %s436 = scalar_lea.vmem [#allocation3], %s435
        %v437 = vld [vmem:[%s436] sm:$0xff]
        %v438 = vld [vmem:[%s436 + $0x8] sm:$0xff]
        %v439 = vld [vmem:[%s436 + $0x10] sm:$0xff]
        %v440 = vld [vmem:[%s436 + $0x18] sm:$0xff]
        %v441 = vld [vmem:[%s436 + $0x20] sm:$0xff]
        %v442 = vld [vmem:[%s436 + $0x28] sm:$0xff]
        %v443 = vmax.f32 %v437, 0.0
        %v444 = vmax.f32 %v438, 0.0
        %v445 = vmax.f32 %v439, 0.0
        %v446 = vmax.f32 %v440, 0.0
        %v447 = vmax.f32 %v441, 0.0
        %v448 = vmax.f32 %v442, 0.0
        %v449 = vrot.slane %v443, 5
        %v450 = vrot.slane %v445, 5
        %v451 = vrot.slane %v447, 5
        %v452 = vrot.slane %v444, 5
        %v453 = vrot.slane %v446, 5
        %v454 = vrot.slane %v448, 5
        %v455 = vsel %vm241, %v449, %v452
        %v456 = vsel %vm241, %v450, %v453
        %v457 = vsel %vm241, %v451, %v454
        %v458 = vsel %vm241, 0.0, %v449
        %v459 = vsel %vm241, 0.0, %v450
        %v460 = vsel %vm241, 0.0, %v451
        %s461 = scalar_lea.vmem [#allocation2], 128
        %462 = vst [vmem:[%s461] sm:$0xff] %v458
        %463 = vst [vmem:[%s461 + $0x8] sm:$0xff] %v455
        %464 = vst [vmem:[%s461 + $0x10] sm:$0xff] %v459
        %465 = vst [vmem:[%s461 + $0x18] sm:$0xff] %v456
        %466 = vst [vmem:[%s461 + $0x20] sm:$0xff] %v460
        %467 = vst [vmem:[%s461 + $0x28] sm:$0xff] %v457
        %v468 = vrot.slane %v443, 6
        %v469 = vrot.slane %v445, 6
        %v470 = vrot.slane %v447, 6
        %v471 = vrot.slane %v444, 6
        %v472 = vrot.slane %v446, 6
        %v473 = vrot.slane %v448, 6
        %v474 = vsel %vm273, %v468, %v471
        %v475 = vsel %vm273, %v469, %v472
        %v476 = vsel %vm273, %v470, %v473
        %v477 = vsel %vm273, 0.0, %v468
        %v478 = vsel %vm273, 0.0, %v469
        %v479 = vsel %vm273, 0.0, %v470
        %s480 = scalar_lea.vmem [#allocation2], 352
        %481 = vst [vmem:[%s480] sm:$0xff] %v477
        %482 = vst [vmem:[%s480 + $0x8] sm:$0xff] %v474
        %483 = vst [vmem:[%s480 + $0x10] sm:$0xff] %v478
        %484 = vst [vmem:[%s480 + $0x18] sm:$0xff] %v475
        %485 = vst [vmem:[%s480 + $0x20] sm:$0xff] %v479
        %486 = vst [vmem:[%s480 + $0x28] sm:$0xff] %v476
        %v487 = vrot.slane %v443, 7
        %v488 = vrot.slane %v445, 7
        %v489 = vrot.slane %v447, 7
        %v490 = vrot.slane %v444, 7
        %v491 = vrot.slane %v446, 7
        %v492 = vrot.slane %v448, 7
        %v493 = vsel %vm305, %v487, %v490
        %v494 = vsel %vm305, %v488, %v491
        %v495 = vsel %vm305, %v489, %v492
        %v496 = vsel %vm305, 0.0, %v487
        %v497 = vsel %vm305, 0.0, %v488
        %v498 = vsel %vm305, 0.0, %v489
        %s499 = scalar_lea.vmem [#allocation2], 576
        %500 = vst [vmem:[%s499] sm:$0xff] %v496
        %501 = vst [vmem:[%s499 + $0x8] sm:$0xff] %v493
        %502 = vst [vmem:[%s499 + $0x10] sm:$0xff] %v497
        %503 = vst [vmem:[%s499 + $0x18] sm:$0xff] %v494
        %504 = vst [vmem:[%s499 + $0x20] sm:$0xff] %v498
        %505 = vst [vmem:[%s499 + $0x28] sm:$0xff] %v495
        %s506 = scalar_lea.vmem [#allocation2], 800
        %507 = vst [vmem:[%s506] sm:$0xff] %v443
        %508 = vst [vmem:[%s506 + $0x8] sm:$0xff] %v444
        %509 = vst [vmem:[%s506 + $0x10] sm:$0xff] %v445
        %510 = vst [vmem:[%s506 + $0x18] sm:$0xff] %v446
        %511 = vst [vmem:[%s506 + $0x20] sm:$0xff] %v447
        %512 = vst [vmem:[%s506 + $0x28] sm:$0xff] %v448
        %v513 = vrot.slane %v443, 1
        %v514 = vrot.slane %v445, 1
        %v515 = vrot.slane %v447, 1
        %v516 = vrot.slane %v444, 1
        %v517 = vrot.slane %v446, 1
        %v518 = vrot.slane %v448, 1
        %v519 = vsel %vm348, %v516, 0.0
        %v520 = vsel %vm348, %v517, 0.0
        %v521 = vsel %vm348, %v518, 0.0
        %v522 = vsel %vm348, %v513, %v516
        %v523 = vsel %vm348, %v514, %v517
        %v524 = vsel %vm348, %v515, %v518
        %s525 = scalar_lea.vmem [#allocation2], 1024
        %526 = vst [vmem:[%s525] sm:$0xff] %v522
        %527 = vst [vmem:[%s525 + $0x8] sm:$0xff] %v519
        %528 = vst [vmem:[%s525 + $0x10] sm:$0xff] %v523
        %529 = vst [vmem:[%s525 + $0x18] sm:$0xff] %v520
        %530 = vst [vmem:[%s525 + $0x20] sm:$0xff] %v524
        %531 = vst [vmem:[%s525 + $0x28] sm:$0xff] %v521
        %v532 = vrot.slane %v443, 2
        %v533 = vrot.slane %v445, 2
        %v534 = vrot.slane %v447, 2
        %v535 = vrot.slane %v444, 2
        %v536 = vrot.slane %v446, 2
        %v537 = vrot.slane %v448, 2
        %v538 = vsel %vm380, %v535, 0.0
        %v539 = vsel %vm380, %v536, 0.0
        %v540 = vsel %vm380, %v537, 0.0
        %v541 = vsel %vm380, %v532, %v535
        %v542 = vsel %vm380, %v533, %v536
        %v543 = vsel %vm380, %v534, %v537
        %s544 = scalar_lea.vmem [#allocation2], 1248
        %545 = vst [vmem:[%s544] sm:$0xff] %v541
        %546 = vst [vmem:[%s544 + $0x8] sm:$0xff] %v538
        %547 = vst [vmem:[%s544 + $0x10] sm:$0xff] %v542
        %548 = vst [vmem:[%s544 + $0x18] sm:$0xff] %v539
        %549 = vst [vmem:[%s544 + $0x20] sm:$0xff] %v543
        %550 = vst [vmem:[%s544 + $0x28] sm:$0xff] %v540
        %v551 = vrot.slane %v443, 3
        %v552 = vrot.slane %v445, 3
        %v553 = vrot.slane %v447, 3
        %v554 = vrot.slane %v444, 3
        %v555 = vrot.slane %v446, 3
        %v556 = vrot.slane %v448, 3
        %v557 = vsel %vm412, %v554, 0.0
        %v558 = vsel %vm412, %v555, 0.0
        %v559 = vsel %vm412, %v556, 0.0
        %v560 = vsel %vm412, %v551, %v554
        %v561 = vsel %vm412, %v552, %v555
        %v562 = vsel %vm412, %v553, %v556
        %s563 = scalar_lea.vmem [#allocation2], 1472
        %564 = vst [vmem:[%s563] sm:$0xff] %v560
        %565 = vst [vmem:[%s563 + $0x8] sm:$0xff] %v557
        %566 = vst [vmem:[%s563 + $0x10] sm:$0xff] %v561
        %567 = vst [vmem:[%s563 + $0x18] sm:$0xff] %v558
        %568 = vst [vmem:[%s563 + $0x20] sm:$0xff] %v562
        %569 = vst [vmem:[%s563 + $0x28] sm:$0xff] %v559
        %p570 = scmp.eq.s32.totalorder %s24, 0
        // Predicated region
        $region41: #{tpu_custom_call.1} parent=31 // pred_check
          %p571 = pneg %p570
        $region42: #{tpu_custom_call.1} parent=31 // pred_check_branch
          %573 = sbr.rel (%p571) target = $region44
        $region43: #{tpu_custom_call.1} parent=31 // pred_region
          %574 = vst [vmem:[#allocation2] sm:$0xff] 0.0
          %575 = vst [vmem:[#allocation2 + $0x8] sm:$0xff] 0.0
          %576 = vst [vmem:[#allocation2 + $0x10] sm:$0xff] 0.0
          %577 = vst [vmem:[#allocation2 + $0x18] sm:$0xff] 0.0
          %578 = vst [vmem:[#allocation2 + $0x20] sm:$0xff] 0.0
          %579 = vst [vmem:[#allocation2 + $0x28] sm:$0xff] 0.0
          %s580 = scalar_lea.vmem [#allocation2], 224
          %581 = vst [vmem:[%s580] sm:$0xff] 0.0
          %582 = vst [vmem:[%s580 + $0x8] sm:$0xff] 0.0
          %583 = vst [vmem:[%s580 + $0x10] sm:$0xff] 0.0
          %584 = vst [vmem:[%s580 + $0x18] sm:$0xff] 0.0
          %585 = vst [vmem:[%s580 + $0x20] sm:$0xff] 0.0
          %586 = vst [vmem:[%s580 + $0x28] sm:$0xff] 0.0
          %s587 = scalar_lea.vmem [#allocation2], 448
          %588 = vst [vmem:[%s587] sm:$0xff] 0.0
          %589 = vst [vmem:[%s587 + $0x8] sm:$0xff] 0.0
          %590 = vst [vmem:[%s587 + $0x10] sm:$0xff] 0.0
          %591 = vst [vmem:[%s587 + $0x18] sm:$0xff] 0.0
          %592 = vst [vmem:[%s587 + $0x20] sm:$0xff] 0.0
          %593 = vst [vmem:[%s587 + $0x28] sm:$0xff] 0.0
          %s594 = scalar_lea.vmem [#allocation2], 672
          %595 = vst [vmem:[%s594] sm:$0xff] 0.0
          %596 = vst [vmem:[%s594 + $0x8] sm:$0xff] 0.0
          %597 = vst [vmem:[%s594 + $0x10] sm:$0xff] 0.0
          %598 = vst [vmem:[%s594 + $0x18] sm:$0xff] 0.0
          %599 = vst [vmem:[%s594 + $0x20] sm:$0xff] 0.0
          %600 = vst [vmem:[%s594 + $0x28] sm:$0xff] 0.0
          %s601 = scalar_lea.vmem [#allocation2], 896
          %602 = vst [vmem:[%s601] sm:$0xff] 0.0
          %603 = vst [vmem:[%s601 + $0x8] sm:$0xff] 0.0
          %604 = vst [vmem:[%s601 + $0x10] sm:$0xff] 0.0
          %605 = vst [vmem:[%s601 + $0x18] sm:$0xff] 0.0
          %606 = vst [vmem:[%s601 + $0x20] sm:$0xff] 0.0
          %607 = vst [vmem:[%s601 + $0x28] sm:$0xff] 0.0
          %s608 = scalar_lea.vmem [#allocation2], 1120
          %609 = vst [vmem:[%s608] sm:$0xff] 0.0
          %610 = vst [vmem:[%s608 + $0x8] sm:$0xff] 0.0
          %611 = vst [vmem:[%s608 + $0x10] sm:$0xff] 0.0
          %612 = vst [vmem:[%s608 + $0x18] sm:$0xff] 0.0
          %613 = vst [vmem:[%s608 + $0x20] sm:$0xff] 0.0
          %614 = vst [vmem:[%s608 + $0x28] sm:$0xff] 0.0
          %s615 = scalar_lea.vmem [#allocation2], 1344
          %616 = vst [vmem:[%s615] sm:$0xff] 0.0
          %617 = vst [vmem:[%s615 + $0x8] sm:$0xff] 0.0
          %618 = vst [vmem:[%s615 + $0x10] sm:$0xff] 0.0
          %619 = vst [vmem:[%s615 + $0x18] sm:$0xff] 0.0
          %620 = vst [vmem:[%s615 + $0x20] sm:$0xff] 0.0
          %621 = vst [vmem:[%s615 + $0x28] sm:$0xff] 0.0
        $region44: #{tpu_custom_call.1} parent=31 // pred_fallthru
          _
        %p622 = scmp.gt.s32.totalorder %s24, 0
        // Predicated region
        $region45: #{tpu_custom_call.1} parent=31 // pred_check
          %p623 = pneg %p622
        $region46: #{tpu_custom_call.1} parent=31 // pred_check_branch
          %625 = sbr.rel (%p623) target = $region48
        $region47: #{tpu_custom_call.1} parent=31 // pred_region
          %s626 = ssub.s32 %s206, 3
          %s627 = smul.u32 %s626, 16
          %s628 = scalar_lea.vmem [#allocation3], %s627
          %v629 = vld [vmem:[%s628] sm:$0xff]
          %v630 = vld [vmem:[%s628 + $0x8] sm:$0xff]
          %v631 = vld [vmem:[%s628 + $0x10] sm:$0xff]
          %v632 = vld [vmem:[%s628 + $0x18] sm:$0xff]
          %v633 = vld [vmem:[%s628 + $0x20] sm:$0xff]
          %v634 = vld [vmem:[%s628 + $0x28] sm:$0xff]
          %v635 = vmax.f32 %v629, 0.0
          %v636 = vmax.f32 %v630, 0.0
          %v637 = vmax.f32 %v631, 0.0
          %v638 = vmax.f32 %v632, 0.0
          %v639 = vmax.f32 %v633, 0.0
          %v640 = vmax.f32 %v634, 0.0
          %v641 = vrot.slane %v635, 5
          %v642 = vrot.slane %v637, 5
          %v643 = vrot.slane %v639, 5
          %v644 = vrot.slane %v636, 5
          %v645 = vrot.slane %v638, 5
          %v646 = vrot.slane %v640, 5
          %v647 = vsel %vm241, %v641, %v644
          %v648 = vsel %vm241, %v642, %v645
          %v649 = vsel %vm241, %v643, %v646
          %v650 = vsel %vm241, 0.0, %v641
          %v651 = vsel %vm241, 0.0, %v642
          %v652 = vsel %vm241, 0.0, %v643
          %653 = vst [vmem:[#allocation2] sm:$0xff] %v650
          %654 = vst [vmem:[#allocation2 + $0x8] sm:$0xff] %v647
          %655 = vst [vmem:[#allocation2 + $0x10] sm:$0xff] %v651
          %656 = vst [vmem:[#allocation2 + $0x18] sm:$0xff] %v648
          %657 = vst [vmem:[#allocation2 + $0x20] sm:$0xff] %v652
          %658 = vst [vmem:[#allocation2 + $0x28] sm:$0xff] %v649
          %v659 = vrot.slane %v635, 6
          %v660 = vrot.slane %v637, 6
          %v661 = vrot.slane %v639, 6
          %v662 = vrot.slane %v636, 6
          %v663 = vrot.slane %v638, 6
          %v664 = vrot.slane %v640, 6
          %v665 = vsel %vm273, %v659, %v662
          %v666 = vsel %vm273, %v660, %v663
          %v667 = vsel %vm273, %v661, %v664
          %v668 = vsel %vm273, 0.0, %v659
          %v669 = vsel %vm273, 0.0, %v660
          %v670 = vsel %vm273, 0.0, %v661
          %s671 = scalar_lea.vmem [#allocation2], 224
          %672 = vst [vmem:[%s671] sm:$0xff] %v668
          %673 = vst [vmem:[%s671 + $0x8] sm:$0xff] %v665
          %674 = vst [vmem:[%s671 + $0x10] sm:$0xff] %v669
          %675 = vst [vmem:[%s671 + $0x18] sm:$0xff] %v666
          %676 = vst [vmem:[%s671 + $0x20] sm:$0xff] %v670
          %677 = vst [vmem:[%s671 + $0x28] sm:$0xff] %v667
          %v678 = vrot.slane %v635, 7
          %v679 = vrot.slane %v637, 7
          %v680 = vrot.slane %v639, 7
          %v681 = vrot.slane %v636, 7
          %v682 = vrot.slane %v638, 7
          %v683 = vrot.slane %v640, 7
          %v684 = vsel %vm305, %v678, %v681
          %v685 = vsel %vm305, %v679, %v682
          %v686 = vsel %vm305, %v680, %v683
          %v687 = vsel %vm305, 0.0, %v678
          %v688 = vsel %vm305, 0.0, %v679
          %v689 = vsel %vm305, 0.0, %v680
          %s690 = scalar_lea.vmem [#allocation2], 448
          %691 = vst [vmem:[%s690] sm:$0xff] %v687
          %692 = vst [vmem:[%s690 + $0x8] sm:$0xff] %v684
          %693 = vst [vmem:[%s690 + $0x10] sm:$0xff] %v688
          %694 = vst [vmem:[%s690 + $0x18] sm:$0xff] %v685
          %695 = vst [vmem:[%s690 + $0x20] sm:$0xff] %v689
          %696 = vst [vmem:[%s690 + $0x28] sm:$0xff] %v686
          %s697 = scalar_lea.vmem [#allocation2], 672
          %698 = vst [vmem:[%s697] sm:$0xff] %v635
          %699 = vst [vmem:[%s697 + $0x8] sm:$0xff] %v636
          %700 = vst [vmem:[%s697 + $0x10] sm:$0xff] %v637
          %701 = vst [vmem:[%s697 + $0x18] sm:$0xff] %v638
          %702 = vst [vmem:[%s697 + $0x20] sm:$0xff] %v639
          %703 = vst [vmem:[%s697 + $0x28] sm:$0xff] %v640
          %v704 = vrot.slane %v635, 1
          %v705 = vrot.slane %v637, 1
          %v706 = vrot.slane %v639, 1
          %v707 = vrot.slane %v636, 1
          %v708 = vrot.slane %v638, 1
          %v709 = vrot.slane %v640, 1
          %v710 = vsel %vm348, %v707, 0.0
          %v711 = vsel %vm348, %v708, 0.0
          %v712 = vsel %vm348, %v709, 0.0
          %v713 = vsel %vm348, %v704, %v707
          %v714 = vsel %vm348, %v705, %v708
          %v715 = vsel %vm348, %v706, %v709
          %s716 = scalar_lea.vmem [#allocation2], 896
          %717 = vst [vmem:[%s716] sm:$0xff] %v713
          %718 = vst [vmem:[%s716 + $0x8] sm:$0xff] %v710
          %719 = vst [vmem:[%s716 + $0x10] sm:$0xff] %v714
          %720 = vst [vmem:[%s716 + $0x18] sm:$0xff] %v711
          %721 = vst [vmem:[%s716 + $0x20] sm:$0xff] %v715
          %722 = vst [vmem:[%s716 + $0x28] sm:$0xff] %v712
          %v723 = vrot.slane %v635, 2
          %v724 = vrot.slane %v637, 2
          %v725 = vrot.slane %v639, 2
          %v726 = vrot.slane %v636, 2
          %v727 = vrot.slane %v638, 2
          %v728 = vrot.slane %v640, 2
          %v729 = vsel %vm380, %v726, 0.0
          %v730 = vsel %vm380, %v727, 0.0
          %v731 = vsel %vm380, %v728, 0.0
          %v732 = vsel %vm380, %v723, %v726
          %v733 = vsel %vm380, %v724, %v727
          %v734 = vsel %vm380, %v725, %v728
          %s735 = scalar_lea.vmem [#allocation2], 1120
          %736 = vst [vmem:[%s735] sm:$0xff] %v732
          %737 = vst [vmem:[%s735 + $0x8] sm:$0xff] %v729
          %738 = vst [vmem:[%s735 + $0x10] sm:$0xff] %v733
          %739 = vst [vmem:[%s735 + $0x18] sm:$0xff] %v730
          %740 = vst [vmem:[%s735 + $0x20] sm:$0xff] %v734
          %741 = vst [vmem:[%s735 + $0x28] sm:$0xff] %v731
          %v742 = vrot.slane %v635, 3
          %v743 = vrot.slane %v637, 3
          %v744 = vrot.slane %v639, 3
          %v745 = vrot.slane %v636, 3
          %v746 = vrot.slane %v638, 3
          %v747 = vrot.slane %v640, 3
          %v748 = vsel %vm412, %v745, 0.0
          %v749 = vsel %vm412, %v746, 0.0
          %v750 = vsel %vm412, %v747, 0.0
          %v751 = vsel %vm412, %v742, %v745
          %v752 = vsel %vm412, %v743, %v746
          %v753 = vsel %vm412, %v744, %v747
          %s754 = scalar_lea.vmem [#allocation2], 1344
          %755 = vst [vmem:[%s754] sm:$0xff] %v751
          %756 = vst [vmem:[%s754 + $0x8] sm:$0xff] %v748
          %757 = vst [vmem:[%s754 + $0x10] sm:$0xff] %v752
          %758 = vst [vmem:[%s754 + $0x18] sm:$0xff] %v749
          %759 = vst [vmem:[%s754 + $0x20] sm:$0xff] %v753
          %760 = vst [vmem:[%s754 + $0x28] sm:$0xff] %v750
        $region48: #{tpu_custom_call.1} parent=31 // pred_fallthru
          _
        %p761 = scmp.eq.s32.totalorder %s24, 1
        // Predicated region
        $region49: #{tpu_custom_call.1} parent=31 // pred_check
          %p762 = pneg %p761
        $region50: #{tpu_custom_call.1} parent=31 // pred_check_branch
          %764 = sbr.rel (%p762) target = $region52
        $region51: #{tpu_custom_call.1} parent=31 // pred_region
          %s765 = scalar_lea.vmem [#allocation2], 176
          %766 = vst [vmem:[%s765] sm:$0xff] 0.0
          %767 = vst [vmem:[%s765 + $0x8] sm:$0xff] 0.0
          %768 = vst [vmem:[%s765 + $0x10] sm:$0xff] 0.0
          %769 = vst [vmem:[%s765 + $0x18] sm:$0xff] 0.0
          %770 = vst [vmem:[%s765 + $0x20] sm:$0xff] 0.0
          %771 = vst [vmem:[%s765 + $0x28] sm:$0xff] 0.0
          %s772 = scalar_lea.vmem [#allocation2], 400
          %773 = vst [vmem:[%s772] sm:$0xff] 0.0
          %774 = vst [vmem:[%s772 + $0x8] sm:$0xff] 0.0
          %775 = vst [vmem:[%s772 + $0x10] sm:$0xff] 0.0
          %776 = vst [vmem:[%s772 + $0x18] sm:$0xff] 0.0
          %777 = vst [vmem:[%s772 + $0x20] sm:$0xff] 0.0
          %778 = vst [vmem:[%s772 + $0x28] sm:$0xff] 0.0
          %s779 = scalar_lea.vmem [#allocation2], 624
          %780 = vst [vmem:[%s779] sm:$0xff] 0.0
          %781 = vst [vmem:[%s779 + $0x8] sm:$0xff] 0.0
          %782 = vst [vmem:[%s779 + $0x10] sm:$0xff] 0.0
          %783 = vst [vmem:[%s779 + $0x18] sm:$0xff] 0.0
          %784 = vst [vmem:[%s779 + $0x20] sm:$0xff] 0.0
          %785 = vst [vmem:[%s779 + $0x28] sm:$0xff] 0.0
          %s786 = scalar_lea.vmem [#allocation2], 848
          %787 = vst [vmem:[%s786] sm:$0xff] 0.0
          %788 = vst [vmem:[%s786 + $0x8] sm:$0xff] 0.0
          %789 = vst [vmem:[%s786 + $0x10] sm:$0xff] 0.0
          %790 = vst [vmem:[%s786 + $0x18] sm:$0xff] 0.0
          %791 = vst [vmem:[%s786 + $0x20] sm:$0xff] 0.0
          %792 = vst [vmem:[%s786 + $0x28] sm:$0xff] 0.0
          %s793 = scalar_lea.vmem [#allocation2], 1072
          %794 = vst [vmem:[%s793] sm:$0xff] 0.0
          %795 = vst [vmem:[%s793 + $0x8] sm:$0xff] 0.0
          %796 = vst [vmem:[%s793 + $0x10] sm:$0xff] 0.0
          %797 = vst [vmem:[%s793 + $0x18] sm:$0xff] 0.0
          %798 = vst [vmem:[%s793 + $0x20] sm:$0xff] 0.0
          %799 = vst [vmem:[%s793 + $0x28] sm:$0xff] 0.0
          %s800 = scalar_lea.vmem [#allocation2], 1296
          %801 = vst [vmem:[%s800] sm:$0xff] 0.0
          %802 = vst [vmem:[%s800 + $0x8] sm:$0xff] 0.0
          %803 = vst [vmem:[%s800 + $0x10] sm:$0xff] 0.0
          %804 = vst [vmem:[%s800 + $0x18] sm:$0xff] 0.0
          %805 = vst [vmem:[%s800 + $0x20] sm:$0xff] 0.0
          %806 = vst [vmem:[%s800 + $0x28] sm:$0xff] 0.0
          %s807 = scalar_lea.vmem [#allocation2], 1520
          %808 = vst [vmem:[%s807] sm:$0xff] 0.0
          %809 = vst [vmem:[%s807 + $0x8] sm:$0xff] 0.0
          %810 = vst [vmem:[%s807 + $0x10] sm:$0xff] 0.0
          %811 = vst [vmem:[%s807 + $0x18] sm:$0xff] 0.0
          %812 = vst [vmem:[%s807 + $0x20] sm:$0xff] 0.0
          %813 = vst [vmem:[%s807 + $0x28] sm:$0xff] 0.0
        $region52: #{tpu_custom_call.1} parent=31 // pred_fallthru
          _
        %p814 = scmp.lt.s32.totalorder %s24, 1
        // Predicated region
        $region53: #{tpu_custom_call.1} parent=31 // pred_check
          %p815 = pneg %p814
        $region54: #{tpu_custom_call.1} parent=31 // pred_check_branch
          %817 = sbr.rel (%p815) target = $region56
        $region55: #{tpu_custom_call.1} parent=31 // pred_region
          %s818 = sadd.s32 %s206, 8
          %s819 = smul.u32 %s818, 16
          %s820 = scalar_lea.vmem [#allocation3], %s819
          %v821 = vld [vmem:[%s820] sm:$0xff]
          %v822 = vld [vmem:[%s820 + $0x8] sm:$0xff]
          %v823 = vld [vmem:[%s820 + $0x10] sm:$0xff]
          %v824 = vld [vmem:[%s820 + $0x18] sm:$0xff]
          %v825 = vld [vmem:[%s820 + $0x20] sm:$0xff]
          %v826 = vld [vmem:[%s820 + $0x28] sm:$0xff]
          %v827 = vmax.f32 %v821, 0.0
          %v828 = vmax.f32 %v822, 0.0
          %v829 = vmax.f32 %v823, 0.0
          %v830 = vmax.f32 %v824, 0.0
          %v831 = vmax.f32 %v825, 0.0
          %v832 = vmax.f32 %v826, 0.0
          %v833 = vrot.slane %v827, 5
          %v834 = vrot.slane %v829, 5
          %v835 = vrot.slane %v831, 5
          %v836 = vrot.slane %v828, 5
          %v837 = vrot.slane %v830, 5
          %v838 = vrot.slane %v832, 5
          %v839 = vsel %vm241, %v833, %v836
          %v840 = vsel %vm241, %v834, %v837
          %v841 = vsel %vm241, %v835, %v838
          %v842 = vsel %vm241, 0.0, %v833
          %v843 = vsel %vm241, 0.0, %v834
          %v844 = vsel %vm241, 0.0, %v835
          %s845 = scalar_lea.vmem [#allocation2], 176
          %846 = vst [vmem:[%s845] sm:$0xff] %v842
          %847 = vst [vmem:[%s845 + $0x8] sm:$0xff] %v839
          %848 = vst [vmem:[%s845 + $0x10] sm:$0xff] %v843
          %849 = vst [vmem:[%s845 + $0x18] sm:$0xff] %v840
          %850 = vst [vmem:[%s845 + $0x20] sm:$0xff] %v844
          %851 = vst [vmem:[%s845 + $0x28] sm:$0xff] %v841
          %v852 = vrot.slane %v827, 6
          %v853 = vrot.slane %v829, 6
          %v854 = vrot.slane %v831, 6
          %v855 = vrot.slane %v828, 6
          %v856 = vrot.slane %v830, 6
          %v857 = vrot.slane %v832, 6
          %v858 = vsel %vm273, %v852, %v855
          %v859 = vsel %vm273, %v853, %v856
          %v860 = vsel %vm273, %v854, %v857
          %v861 = vsel %vm273, 0.0, %v852
          %v862 = vsel %vm273, 0.0, %v853
          %v863 = vsel %vm273, 0.0, %v854
          %s864 = scalar_lea.vmem [#allocation2], 400
          %865 = vst [vmem:[%s864] sm:$0xff] %v861
          %866 = vst [vmem:[%s864 + $0x8] sm:$0xff] %v858
          %867 = vst [vmem:[%s864 + $0x10] sm:$0xff] %v862
          %868 = vst [vmem:[%s864 + $0x18] sm:$0xff] %v859
          %869 = vst [vmem:[%s864 + $0x20] sm:$0xff] %v863
          %870 = vst [vmem:[%s864 + $0x28] sm:$0xff] %v860
          %v871 = vrot.slane %v827, 7
          %v872 = vrot.slane %v829, 7
          %v873 = vrot.slane %v831, 7
          %v874 = vrot.slane %v828, 7
          %v875 = vrot.slane %v830, 7
          %v876 = vrot.slane %v832, 7
          %v877 = vsel %vm305, %v871, %v874
          %v878 = vsel %vm305, %v872, %v875
          %v879 = vsel %vm305, %v873, %v876
          %v880 = vsel %vm305, 0.0, %v871
          %v881 = vsel %vm305, 0.0, %v872
          %v882 = vsel %vm305, 0.0, %v873
          %s883 = scalar_lea.vmem [#allocation2], 624
          %884 = vst [vmem:[%s883] sm:$0xff] %v880
          %885 = vst [vmem:[%s883 + $0x8] sm:$0xff] %v877
          %886 = vst [vmem:[%s883 + $0x10] sm:$0xff] %v881
          %887 = vst [vmem:[%s883 + $0x18] sm:$0xff] %v878
          %888 = vst [vmem:[%s883 + $0x20] sm:$0xff] %v882
          %889 = vst [vmem:[%s883 + $0x28] sm:$0xff] %v879
          %s890 = scalar_lea.vmem [#allocation2], 848
          %891 = vst [vmem:[%s890] sm:$0xff] %v827
          %892 = vst [vmem:[%s890 + $0x8] sm:$0xff] %v828
          %893 = vst [vmem:[%s890 + $0x10] sm:$0xff] %v829
          %894 = vst [vmem:[%s890 + $0x18] sm:$0xff] %v830
          %895 = vst [vmem:[%s890 + $0x20] sm:$0xff] %v831
          %896 = vst [vmem:[%s890 + $0x28] sm:$0xff] %v832
          %v897 = vrot.slane %v827, 1
          %v898 = vrot.slane %v829, 1
          %v899 = vrot.slane %v831, 1
          %v900 = vrot.slane %v828, 1
          %v901 = vrot.slane %v830, 1
          %v902 = vrot.slane %v832, 1
          %v903 = vsel %vm348, %v900, 0.0
          %v904 = vsel %vm348, %v901, 0.0
          %v905 = vsel %vm348, %v902, 0.0
          %v906 = vsel %vm348, %v897, %v900
          %v907 = vsel %vm348, %v898, %v901
          %v908 = vsel %vm348, %v899, %v902
          %s909 = scalar_lea.vmem [#allocation2], 1072
          %910 = vst [vmem:[%s909] sm:$0xff] %v906
          %911 = vst [vmem:[%s909 + $0x8] sm:$0xff] %v903
          %912 = vst [vmem:[%s909 + $0x10] sm:$0xff] %v907
          %913 = vst [vmem:[%s909 + $0x18] sm:$0xff] %v904
          %914 = vst [vmem:[%s909 + $0x20] sm:$0xff] %v908
          %915 = vst [vmem:[%s909 + $0x28] sm:$0xff] %v905
          %v916 = vrot.slane %v827, 2
          %v917 = vrot.slane %v829, 2
          %v918 = vrot.slane %v831, 2
          %v919 = vrot.slane %v828, 2
          %v920 = vrot.slane %v830, 2
          %v921 = vrot.slane %v832, 2
          %v922 = vsel %vm380, %v919, 0.0
          %v923 = vsel %vm380, %v920, 0.0
          %v924 = vsel %vm380, %v921, 0.0
          %v925 = vsel %vm380, %v916, %v919
          %v926 = vsel %vm380, %v917, %v920
          %v927 = vsel %vm380, %v918, %v921
          %s928 = scalar_lea.vmem [#allocation2], 1296
          %929 = vst [vmem:[%s928] sm:$0xff] %v925
          %930 = vst [vmem:[%s928 + $0x8] sm:$0xff] %v922
          %931 = vst [vmem:[%s928 + $0x10] sm:$0xff] %v926
          %932 = vst [vmem:[%s928 + $0x18] sm:$0xff] %v923
          %933 = vst [vmem:[%s928 + $0x20] sm:$0xff] %v927
          %934 = vst [vmem:[%s928 + $0x28] sm:$0xff] %v924
          %v935 = vrot.slane %v827, 3
          %v936 = vrot.slane %v829, 3
          %v937 = vrot.slane %v831, 3
          %v938 = vrot.slane %v828, 3
          %v939 = vrot.slane %v830, 3
          %v940 = vrot.slane %v832, 3
          %v941 = vsel %vm412, %v938, 0.0
          %v942 = vsel %vm412, %v939, 0.0
          %v943 = vsel %vm412, %v940, 0.0
          %v944 = vsel %vm412, %v935, %v938
          %v945 = vsel %vm412, %v936, %v939
          %v946 = vsel %vm412, %v937, %v940
          %s947 = scalar_lea.vmem [#allocation2], 1520
          %948 = vst [vmem:[%s947] sm:$0xff] %v944
          %949 = vst [vmem:[%s947 + $0x8] sm:$0xff] %v941
          %950 = vst [vmem:[%s947 + $0x10] sm:$0xff] %v945
          %951 = vst [vmem:[%s947 + $0x18] sm:$0xff] %v942
          %952 = vst [vmem:[%s947 + $0x20] sm:$0xff] %v946
          %953 = vst [vmem:[%s947 + $0x28] sm:$0xff] %v943
        $region56: #{tpu_custom_call.1} parent=31 // pred_fallthru
          _
        %v954 = vld [vmem:[%s2] sm:$0x1]
        %v956 = vperm.slane %v954, 0
        %v958 = vld [vmem:[#allocation2] sm:$0xff]
        %v959 = vld [vmem:[#allocation2 + $0x8] sm:$0xff]
        %v960 = vld [vmem:[#allocation2 + $0x10] sm:$0xff]
        %v961 = vld [vmem:[#allocation2 + $0x18] sm:$0xff]
        %v962 = vld [vmem:[#allocation2 + $0x20] sm:$0xff]
        %v963 = vld [vmem:[#allocation2 + $0x28] sm:$0xff]
        %v964 = vld [vmem:[#allocation2 + $0x30] sm:$0xff]
        %v965 = vld [vmem:[#allocation2 + $0x38] sm:$0xff]
        %v966 = vld [vmem:[#allocation2 + $0x40] sm:$0xff]
        %v967 = vld [vmem:[#allocation2 + $0x48] sm:$0xff]
        %v968 = vld [vmem:[#allocation2 + $0x50] sm:$0xff]
        %v969 = vld [vmem:[#allocation2 + $0x58] sm:$0xff]
        %v970 = vld [vmem:[#allocation2 + $0x60] sm:$0xff]
        %v971 = vld [vmem:[#allocation2 + $0x68] sm:$0xff]
        %v972 = vld [vmem:[#allocation2 + $0x70] sm:$0xff]
        %v973 = vld [vmem:[#allocation2 + $0x78] sm:$0xff]
        %v974 = vld [vmem:[#allocation6] sm:$0x1]
        %v976 = vperm.slane %v974, 0
        %v978 = vmul.f32 %v958, %v976
        %v979 = vmul.f32 %v959, %v976
        %v980 = vmul.f32 %v960, %v976
        %v981 = vmul.f32 %v961, %v976
        %v982 = vmul.f32 %v962, %v976
        %v983 = vmul.f32 %v963, %v976
        %v984 = vmul.f32 %v964, %v976
        %v985 = vmul.f32 %v965, %v976
        %v986 = vmul.f32 %v966, %v976
        %v987 = vmul.f32 %v967, %v976
        %v988 = vmul.f32 %v968, %v976
        %v989 = vmul.f32 %v969, %v976
        %v990 = vmul.f32 %v970, %v976
        %v991 = vmul.f32 %v971, %v976
        %v992 = vmul.f32 %v972, %v976
        %v993 = vmul.f32 %v973, %v976
        %v994 = vadd.f32 %v956, %v978
        %v995 = vadd.f32 %v956, %v979
        %v996 = vadd.f32 %v956, %v980
        %v997 = vadd.f32 %v956, %v981
        %v998 = vadd.f32 %v956, %v982
        %v999 = vadd.f32 %v956, %v983
        %v1000 = vadd.f32 %v956, %v984
        %v1001 = vadd.f32 %v956, %v985
        %v1002 = vadd.f32 %v956, %v986
        %v1003 = vadd.f32 %v956, %v987
        %v1004 = vadd.f32 %v956, %v988
        %v1005 = vadd.f32 %v956, %v989
        %v1006 = vadd.f32 %v956, %v990
        %v1007 = vadd.f32 %v956, %v991
        %v1008 = vadd.f32 %v956, %v992
        %v1009 = vadd.f32 %v956, %v993
        %s1010 = scalar_lea.vmem [#allocation2], 224
        %v1011 = vld [vmem:[%s1010] sm:$0xff]
        %v1012 = vld [vmem:[%s1010 + $0x8] sm:$0xff]
        %v1013 = vld [vmem:[%s1010 + $0x10] sm:$0xff]
        %v1014 = vld [vmem:[%s1010 + $0x18] sm:$0xff]
        %v1015 = vld [vmem:[%s1010 + $0x20] sm:$0xff]
        %v1016 = vld [vmem:[%s1010 + $0x28] sm:$0xff]
        %v1017 = vld [vmem:[%s1010 + $0x30] sm:$0xff]
        %v1018 = vld [vmem:[%s1010 + $0x38] sm:$0xff]
        %v1019 = vld [vmem:[%s1010 + $0x40] sm:$0xff]
        %v1020 = vld [vmem:[%s1010 + $0x48] sm:$0xff]
        %v1021 = vld [vmem:[%s1010 + $0x50] sm:$0xff]
        %v1022 = vld [vmem:[%s1010 + $0x58] sm:$0xff]
        %v1023 = vld [vmem:[%s1010 + $0x60] sm:$0xff]
        %v1024 = vld [vmem:[%s1010 + $0x68] sm:$0xff]
        %v1025 = vld [vmem:[%s1010 + $0x70] sm:$0xff]
        %v1026 = vld [vmem:[%s1010 + $0x78] sm:$0xff]
        %s1027 = scalar_lea.vmem [#allocation6], 1
        %v1028 = vld [vmem:[%s1027] sm:$0x1]
        %v1030 = vperm.slane %v1028, 0
        %v1032 = vmul.f32 %v1011, %v1030
        %v1033 = vmul.f32 %v1012, %v1030
        %v1034 = vmul.f32 %v1013, %v1030
        %v1035 = vmul.f32 %v1014, %v1030
        %v1036 = vmul.f32 %v1015, %v1030
        %v1037 = vmul.f32 %v1016, %v1030
        %v1038 = vmul.f32 %v1017, %v1030
        %v1039 = vmul.f32 %v1018, %v1030
        %v1040 = vmul.f32 %v1019, %v1030
        %v1041 = vmul.f32 %v1020, %v1030
        %v1042 = vmul.f32 %v1021, %v1030
        %v1043 = vmul.f32 %v1022, %v1030
        %v1044 = vmul.f32 %v1023, %v1030
        %v1045 = vmul.f32 %v1024, %v1030
        %v1046 = vmul.f32 %v1025, %v1030
        %v1047 = vmul.f32 %v1026, %v1030
        %v1048 = vadd.f32 %v994, %v1032
        %v1049 = vadd.f32 %v995, %v1033
        %v1050 = vadd.f32 %v996, %v1034
        %v1051 = vadd.f32 %v997, %v1035
        %v1052 = vadd.f32 %v998, %v1036
        %v1053 = vadd.f32 %v999, %v1037
        %v1054 = vadd.f32 %v1000, %v1038
        %v1055 = vadd.f32 %v1001, %v1039
        %v1056 = vadd.f32 %v1002, %v1040
        %v1057 = vadd.f32 %v1003, %v1041
        %v1058 = vadd.f32 %v1004, %v1042
        %v1059 = vadd.f32 %v1005, %v1043
        %v1060 = vadd.f32 %v1006, %v1044
        %v1061 = vadd.f32 %v1007, %v1045
        %v1062 = vadd.f32 %v1008, %v1046
        %v1063 = vadd.f32 %v1009, %v1047
        %s1064 = scalar_lea.vmem [#allocation2], 448
        %v1065 = vld [vmem:[%s1064] sm:$0xff]
        %v1066 = vld [vmem:[%s1064 + $0x8] sm:$0xff]
        %v1067 = vld [vmem:[%s1064 + $0x10] sm:$0xff]
        %v1068 = vld [vmem:[%s1064 + $0x18] sm:$0xff]
        %v1069 = vld [vmem:[%s1064 + $0x20] sm:$0xff]
        %v1070 = vld [vmem:[%s1064 + $0x28] sm:$0xff]
        %v1071 = vld [vmem:[%s1064 + $0x30] sm:$0xff]
        %v1072 = vld [vmem:[%s1064 + $0x38] sm:$0xff]
        %v1073 = vld [vmem:[%s1064 + $0x40] sm:$0xff]
        %v1074 = vld [vmem:[%s1064 + $0x48] sm:$0xff]
        %v1075 = vld [vmem:[%s1064 + $0x50] sm:$0xff]
        %v1076 = vld [vmem:[%s1064 + $0x58] sm:$0xff]
        %v1077 = vld [vmem:[%s1064 + $0x60] sm:$0xff]
        %v1078 = vld [vmem:[%s1064 + $0x68] sm:$0xff]
        %v1079 = vld [vmem:[%s1064 + $0x70] sm:$0xff]
        %v1080 = vld [vmem:[%s1064 + $0x78] sm:$0xff]
        %s1081 = scalar_lea.vmem [#allocation6], 2
        %v1082 = vld [vmem:[%s1081] sm:$0x1]
        %v1084 = vperm.slane %v1082, 0
        %v1086 = vmul.f32 %v1065, %v1084
        %v1087 = vmul.f32 %v1066, %v1084
        %v1088 = vmul.f32 %v1067, %v1084
        %v1089 = vmul.f32 %v1068, %v1084
        %v1090 = vmul.f32 %v1069, %v1084
        %v1091 = vmul.f32 %v1070, %v1084
        %v1092 = vmul.f32 %v1071, %v1084
        %v1093 = vmul.f32 %v1072, %v1084
        %v1094 = vmul.f32 %v1073, %v1084
        %v1095 = vmul.f32 %v1074, %v1084
        %v1096 = vmul.f32 %v1075, %v1084
        %v1097 = vmul.f32 %v1076, %v1084
        %v1098 = vmul.f32 %v1077, %v1084
        %v1099 = vmul.f32 %v1078, %v1084
        %v1100 = vmul.f32 %v1079, %v1084
        %v1101 = vmul.f32 %v1080, %v1084
        %v1102 = vadd.f32 %v1048, %v1086
        %v1103 = vadd.f32 %v1049, %v1087
        %v1104 = vadd.f32 %v1050, %v1088
        %v1105 = vadd.f32 %v1051, %v1089
        %v1106 = vadd.f32 %v1052, %v1090
        %v1107 = vadd.f32 %v1053, %v1091
        %v1108 = vadd.f32 %v1054, %v1092
        %v1109 = vadd.f32 %v1055, %v1093
        %v1110 = vadd.f32 %v1056, %v1094
        %v1111 = vadd.f32 %v1057, %v1095
        %v1112 = vadd.f32 %v1058, %v1096
        %v1113 = vadd.f32 %v1059, %v1097
        %v1114 = vadd.f32 %v1060, %v1098
        %v1115 = vadd.f32 %v1061, %v1099
        %v1116 = vadd.f32 %v1062, %v1100
        %v1117 = vadd.f32 %v1063, %v1101
        %s1118 = scalar_lea.vmem [#allocation2], 672
        %v1119 = vld [vmem:[%s1118] sm:$0xff]
        %v1120 = vld [vmem:[%s1118 + $0x8] sm:$0xff]
        %v1121 = vld [vmem:[%s1118 + $0x10] sm:$0xff]
        %v1122 = vld [vmem:[%s1118 + $0x18] sm:$0xff]
        %v1123 = vld [vmem:[%s1118 + $0x20] sm:$0xff]
        %v1124 = vld [vmem:[%s1118 + $0x28] sm:$0xff]
        %v1125 = vld [vmem:[%s1118 + $0x30] sm:$0xff]
        %v1126 = vld [vmem:[%s1118 + $0x38] sm:$0xff]
        %v1127 = vld [vmem:[%s1118 + $0x40] sm:$0xff]
        %v1128 = vld [vmem:[%s1118 + $0x48] sm:$0xff]
        %v1129 = vld [vmem:[%s1118 + $0x50] sm:$0xff]
        %v1130 = vld [vmem:[%s1118 + $0x58] sm:$0xff]
        %v1131 = vld [vmem:[%s1118 + $0x60] sm:$0xff]
        %v1132 = vld [vmem:[%s1118 + $0x68] sm:$0xff]
        %v1133 = vld [vmem:[%s1118 + $0x70] sm:$0xff]
        %v1134 = vld [vmem:[%s1118 + $0x78] sm:$0xff]
        %s1135 = scalar_lea.vmem [#allocation6], 3
        %v1136 = vld [vmem:[%s1135] sm:$0x1]
        %v1138 = vperm.slane %v1136, 0
        %v1140 = vmul.f32 %v1119, %v1138
        %v1141 = vmul.f32 %v1120, %v1138
        %v1142 = vmul.f32 %v1121, %v1138
        %v1143 = vmul.f32 %v1122, %v1138
        %v1144 = vmul.f32 %v1123, %v1138
        %v1145 = vmul.f32 %v1124, %v1138
        %v1146 = vmul.f32 %v1125, %v1138
        %v1147 = vmul.f32 %v1126, %v1138
        %v1148 = vmul.f32 %v1127, %v1138
        %v1149 = vmul.f32 %v1128, %v1138
        %v1150 = vmul.f32 %v1129, %v1138
        %v1151 = vmul.f32 %v1130, %v1138
        %v1152 = vmul.f32 %v1131, %v1138
        %v1153 = vmul.f32 %v1132, %v1138
        %v1154 = vmul.f32 %v1133, %v1138
        %v1155 = vmul.f32 %v1134, %v1138
        %v1156 = vadd.f32 %v1102, %v1140
        %v1157 = vadd.f32 %v1103, %v1141
        %v1158 = vadd.f32 %v1104, %v1142
        %v1159 = vadd.f32 %v1105, %v1143
        %v1160 = vadd.f32 %v1106, %v1144
        %v1161 = vadd.f32 %v1107, %v1145
        %v1162 = vadd.f32 %v1108, %v1146
        %v1163 = vadd.f32 %v1109, %v1147
        %v1164 = vadd.f32 %v1110, %v1148
        %v1165 = vadd.f32 %v1111, %v1149
        %v1166 = vadd.f32 %v1112, %v1150
        %v1167 = vadd.f32 %v1113, %v1151
        %v1168 = vadd.f32 %v1114, %v1152
        %v1169 = vadd.f32 %v1115, %v1153
        %v1170 = vadd.f32 %v1116, %v1154
        %v1171 = vadd.f32 %v1117, %v1155
        %s1172 = scalar_lea.vmem [#allocation2], 896
        %v1173 = vld [vmem:[%s1172] sm:$0xff]
        %v1174 = vld [vmem:[%s1172 + $0x8] sm:$0xff]
        %v1175 = vld [vmem:[%s1172 + $0x10] sm:$0xff]
        %v1176 = vld [vmem:[%s1172 + $0x18] sm:$0xff]
        %v1177 = vld [vmem:[%s1172 + $0x20] sm:$0xff]
        %v1178 = vld [vmem:[%s1172 + $0x28] sm:$0xff]
        %v1179 = vld [vmem:[%s1172 + $0x30] sm:$0xff]
        %v1180 = vld [vmem:[%s1172 + $0x38] sm:$0xff]
        %v1181 = vld [vmem:[%s1172 + $0x40] sm:$0xff]
        %v1182 = vld [vmem:[%s1172 + $0x48] sm:$0xff]
        %v1183 = vld [vmem:[%s1172 + $0x50] sm:$0xff]
        %v1184 = vld [vmem:[%s1172 + $0x58] sm:$0xff]
        %v1185 = vld [vmem:[%s1172 + $0x60] sm:$0xff]
        %v1186 = vld [vmem:[%s1172 + $0x68] sm:$0xff]
        %v1187 = vld [vmem:[%s1172 + $0x70] sm:$0xff]
        %v1188 = vld [vmem:[%s1172 + $0x78] sm:$0xff]
        %s1189 = scalar_lea.vmem [#allocation6], 4
        %v1190 = vld [vmem:[%s1189] sm:$0x1]
        %v1192 = vperm.slane %v1190, 0
        %v1194 = vmul.f32 %v1173, %v1192
        %v1195 = vmul.f32 %v1174, %v1192
        %v1196 = vmul.f32 %v1175, %v1192
        %v1197 = vmul.f32 %v1176, %v1192
        %v1198 = vmul.f32 %v1177, %v1192
        %v1199 = vmul.f32 %v1178, %v1192
        %v1200 = vmul.f32 %v1179, %v1192
        %v1201 = vmul.f32 %v1180, %v1192
        %v1202 = vmul.f32 %v1181, %v1192
        %v1203 = vmul.f32 %v1182, %v1192
        %v1204 = vmul.f32 %v1183, %v1192
        %v1205 = vmul.f32 %v1184, %v1192
        %v1206 = vmul.f32 %v1185, %v1192
        %v1207 = vmul.f32 %v1186, %v1192
        %v1208 = vmul.f32 %v1187, %v1192
        %v1209 = vmul.f32 %v1188, %v1192
        %v1210 = vadd.f32 %v1156, %v1194
        %v1211 = vadd.f32 %v1157, %v1195
        %v1212 = vadd.f32 %v1158, %v1196
        %v1213 = vadd.f32 %v1159, %v1197
        %v1214 = vadd.f32 %v1160, %v1198
        %v1215 = vadd.f32 %v1161, %v1199
        %v1216 = vadd.f32 %v1162, %v1200
        %v1217 = vadd.f32 %v1163, %v1201
        %v1218 = vadd.f32 %v1164, %v1202
        %v1219 = vadd.f32 %v1165, %v1203
        %v1220 = vadd.f32 %v1166, %v1204
        %v1221 = vadd.f32 %v1167, %v1205
        %v1222 = vadd.f32 %v1168, %v1206
        %v1223 = vadd.f32 %v1169, %v1207
        %v1224 = vadd.f32 %v1170, %v1208
        %v1225 = vadd.f32 %v1171, %v1209
        %s1226 = scalar_lea.vmem [#allocation2], 1120
        %v1227 = vld [vmem:[%s1226] sm:$0xff]
        %v1228 = vld [vmem:[%s1226 + $0x8] sm:$0xff]
        %v1229 = vld [vmem:[%s1226 + $0x10] sm:$0xff]
        %v1230 = vld [vmem:[%s1226 + $0x18] sm:$0xff]
        %v1231 = vld [vmem:[%s1226 + $0x20] sm:$0xff]
        %v1232 = vld [vmem:[%s1226 + $0x28] sm:$0xff]
        %v1233 = vld [vmem:[%s1226 + $0x30] sm:$0xff]
        %v1234 = vld [vmem:[%s1226 + $0x38] sm:$0xff]
        %v1235 = vld [vmem:[%s1226 + $0x40] sm:$0xff]
        %v1236 = vld [vmem:[%s1226 + $0x48] sm:$0xff]
        %v1237 = vld [vmem:[%s1226 + $0x50] sm:$0xff]
        %v1238 = vld [vmem:[%s1226 + $0x58] sm:$0xff]
        %v1239 = vld [vmem:[%s1226 + $0x60] sm:$0xff]
        %v1240 = vld [vmem:[%s1226 + $0x68] sm:$0xff]
        %v1241 = vld [vmem:[%s1226 + $0x70] sm:$0xff]
        %v1242 = vld [vmem:[%s1226 + $0x78] sm:$0xff]
        %s1243 = scalar_lea.vmem [#allocation6], 5
        %v1244 = vld [vmem:[%s1243] sm:$0x1]
        %v1246 = vperm.slane %v1244, 0
        %v1248 = vmul.f32 %v1227, %v1246
        %v1249 = vmul.f32 %v1228, %v1246
        %v1250 = vmul.f32 %v1229, %v1246
        %v1251 = vmul.f32 %v1230, %v1246
        %v1252 = vmul.f32 %v1231, %v1246
        %v1253 = vmul.f32 %v1232, %v1246
        %v1254 = vmul.f32 %v1233, %v1246
        %v1255 = vmul.f32 %v1234, %v1246
        %v1256 = vmul.f32 %v1235, %v1246
        %v1257 = vmul.f32 %v1236, %v1246
        %v1258 = vmul.f32 %v1237, %v1246
        %v1259 = vmul.f32 %v1238, %v1246
        %v1260 = vmul.f32 %v1239, %v1246
        %v1261 = vmul.f32 %v1240, %v1246
        %v1262 = vmul.f32 %v1241, %v1246
        %v1263 = vmul.f32 %v1242, %v1246
        %v1264 = vadd.f32 %v1210, %v1248
        %v1265 = vadd.f32 %v1211, %v1249
        %v1266 = vadd.f32 %v1212, %v1250
        %v1267 = vadd.f32 %v1213, %v1251
        %v1268 = vadd.f32 %v1214, %v1252
        %v1269 = vadd.f32 %v1215, %v1253
        %v1270 = vadd.f32 %v1216, %v1254
        %v1271 = vadd.f32 %v1217, %v1255
        %v1272 = vadd.f32 %v1218, %v1256
        %v1273 = vadd.f32 %v1219, %v1257
        %v1274 = vadd.f32 %v1220, %v1258
        %v1275 = vadd.f32 %v1221, %v1259
        %v1276 = vadd.f32 %v1222, %v1260
        %v1277 = vadd.f32 %v1223, %v1261
        %v1278 = vadd.f32 %v1224, %v1262
        %v1279 = vadd.f32 %v1225, %v1263
        %s1280 = scalar_lea.vmem [#allocation2], 1344
        %v1281 = vld [vmem:[%s1280] sm:$0xff]
        %v1282 = vld [vmem:[%s1280 + $0x8] sm:$0xff]
        %v1283 = vld [vmem:[%s1280 + $0x10] sm:$0xff]
        %v1284 = vld [vmem:[%s1280 + $0x18] sm:$0xff]
        %v1285 = vld [vmem:[%s1280 + $0x20] sm:$0xff]
        %v1286 = vld [vmem:[%s1280 + $0x28] sm:$0xff]
        %v1287 = vld [vmem:[%s1280 + $0x30] sm:$0xff]
        %v1288 = vld [vmem:[%s1280 + $0x38] sm:$0xff]
        %v1289 = vld [vmem:[%s1280 + $0x40] sm:$0xff]
        %v1290 = vld [vmem:[%s1280 + $0x48] sm:$0xff]
        %v1291 = vld [vmem:[%s1280 + $0x50] sm:$0xff]
        %v1292 = vld [vmem:[%s1280 + $0x58] sm:$0xff]
        %v1293 = vld [vmem:[%s1280 + $0x60] sm:$0xff]
        %v1294 = vld [vmem:[%s1280 + $0x68] sm:$0xff]
        %v1295 = vld [vmem:[%s1280 + $0x70] sm:$0xff]
        %v1296 = vld [vmem:[%s1280 + $0x78] sm:$0xff]
        %s1297 = scalar_lea.vmem [#allocation6], 6
        %v1298 = vld [vmem:[%s1297] sm:$0x1]
        %v1300 = vperm.slane %v1298, 0
        %v1302 = vmul.f32 %v1281, %v1300
        %v1303 = vmul.f32 %v1282, %v1300
        %v1304 = vmul.f32 %v1283, %v1300
        %v1305 = vmul.f32 %v1284, %v1300
        %v1306 = vmul.f32 %v1285, %v1300
        %v1307 = vmul.f32 %v1286, %v1300
        %v1308 = vmul.f32 %v1287, %v1300
        %v1309 = vmul.f32 %v1288, %v1300
        %v1310 = vmul.f32 %v1289, %v1300
        %v1311 = vmul.f32 %v1290, %v1300
        %v1312 = vmul.f32 %v1291, %v1300
        %v1313 = vmul.f32 %v1292, %v1300
        %v1314 = vmul.f32 %v1293, %v1300
        %v1315 = vmul.f32 %v1294, %v1300
        %v1316 = vmul.f32 %v1295, %v1300
        %v1317 = vmul.f32 %v1296, %v1300
        %v1318 = vadd.f32 %v1264, %v1302
        %v1319 = vadd.f32 %v1265, %v1303
        %v1320 = vadd.f32 %v1266, %v1304
        %v1321 = vadd.f32 %v1267, %v1305
        %v1322 = vadd.f32 %v1268, %v1306
        %v1323 = vadd.f32 %v1269, %v1307
        %v1324 = vadd.f32 %v1270, %v1308
        %v1325 = vadd.f32 %v1271, %v1309
        %v1326 = vadd.f32 %v1272, %v1310
        %v1327 = vadd.f32 %v1273, %v1311
        %v1328 = vadd.f32 %v1274, %v1312
        %v1329 = vadd.f32 %v1275, %v1313
        %v1330 = vadd.f32 %v1276, %v1314
        %v1331 = vadd.f32 %v1277, %v1315
        %v1332 = vadd.f32 %v1278, %v1316
        %v1333 = vadd.f32 %v1279, %v1317
        %s1334 = scalar_lea.vmem [#allocation2], 16
        %v1335 = vld [vmem:[%s1334] sm:$0xff]
        %v1336 = vld [vmem:[%s1334 + $0x8] sm:$0xff]
        %v1337 = vld [vmem:[%s1334 + $0x10] sm:$0xff]
        %v1338 = vld [vmem:[%s1334 + $0x18] sm:$0xff]
        %v1339 = vld [vmem:[%s1334 + $0x20] sm:$0xff]
        %v1340 = vld [vmem:[%s1334 + $0x28] sm:$0xff]
        %v1341 = vld [vmem:[%s1334 + $0x30] sm:$0xff]
        %v1342 = vld [vmem:[%s1334 + $0x38] sm:$0xff]
        %v1343 = vld [vmem:[%s1334 + $0x40] sm:$0xff]
        %v1344 = vld [vmem:[%s1334 + $0x48] sm:$0xff]
        %v1345 = vld [vmem:[%s1334 + $0x50] sm:$0xff]
        %v1346 = vld [vmem:[%s1334 + $0x58] sm:$0xff]
        %v1347 = vld [vmem:[%s1334 + $0x60] sm:$0xff]
        %v1348 = vld [vmem:[%s1334 + $0x68] sm:$0xff]
        %v1349 = vld [vmem:[%s1334 + $0x70] sm:$0xff]
        %v1350 = vld [vmem:[%s1334 + $0x78] sm:$0xff]
        %s1351 = scalar_lea.vmem [#allocation6], 7
        %v1352 = vld [vmem:[%s1351] sm:$0x1]
        %v1354 = vperm.slane %v1352, 0
        %v1356 = vmul.f32 %v1335, %v1354
        %v1357 = vmul.f32 %v1336, %v1354
        %v1358 = vmul.f32 %v1337, %v1354
        %v1359 = vmul.f32 %v1338, %v1354
        %v1360 = vmul.f32 %v1339, %v1354
        %v1361 = vmul.f32 %v1340, %v1354
        %v1362 = vmul.f32 %v1341, %v1354
        %v1363 = vmul.f32 %v1342, %v1354
        %v1364 = vmul.f32 %v1343, %v1354
        %v1365 = vmul.f32 %v1344, %v1354
        %v1366 = vmul.f32 %v1345, %v1354
        %v1367 = vmul.f32 %v1346, %v1354
        %v1368 = vmul.f32 %v1347, %v1354
        %v1369 = vmul.f32 %v1348, %v1354
        %v1370 = vmul.f32 %v1349, %v1354
        %v1371 = vmul.f32 %v1350, %v1354
        %v1372 = vadd.f32 %v1318, %v1356
        %v1373 = vadd.f32 %v1319, %v1357
        %v1374 = vadd.f32 %v1320, %v1358
        %v1375 = vadd.f32 %v1321, %v1359
        %v1376 = vadd.f32 %v1322, %v1360
        %v1377 = vadd.f32 %v1323, %v1361
        %v1378 = vadd.f32 %v1324, %v1362
        %v1379 = vadd.f32 %v1325, %v1363
        %v1380 = vadd.f32 %v1326, %v1364
        %v1381 = vadd.f32 %v1327, %v1365
        %v1382 = vadd.f32 %v1328, %v1366
        %v1383 = vadd.f32 %v1329, %v1367
        %v1384 = vadd.f32 %v1330, %v1368
        %v1385 = vadd.f32 %v1331, %v1369
        %v1386 = vadd.f32 %v1332, %v1370
        %v1387 = vadd.f32 %v1333, %v1371
        %s1388 = scalar_lea.vmem [#allocation2], 240
        %v1389 = vld [vmem:[%s1388] sm:$0xff]
        %v1390 = vld [vmem:[%s1388 + $0x8] sm:$0xff]
        %v1391 = vld [vmem:[%s1388 + $0x10] sm:$0xff]
        %v1392 = vld [vmem:[%s1388 + $0x18] sm:$0xff]
        %v1393 = vld [vmem:[%s1388 + $0x20] sm:$0xff]
        %v1394 = vld [vmem:[%s1388 + $0x28] sm:$0xff]
        %v1395 = vld [vmem:[%s1388 + $0x30] sm:$0xff]
        %v1396 = vld [vmem:[%s1388 + $0x38] sm:$0xff]
        %v1397 = vld [vmem:[%s1388 + $0x40] sm:$0xff]
        %v1398 = vld [vmem:[%s1388 + $0x48] sm:$0xff]
        %v1399 = vld [vmem:[%s1388 + $0x50] sm:$0xff]
        %v1400 = vld [vmem:[%s1388 + $0x58] sm:$0xff]
        %v1401 = vld [vmem:[%s1388 + $0x60] sm:$0xff]
        %v1402 = vld [vmem:[%s1388 + $0x68] sm:$0xff]
        %v1403 = vld [vmem:[%s1388 + $0x70] sm:$0xff]
        %v1404 = vld [vmem:[%s1388 + $0x78] sm:$0xff]
        %s1405 = scalar_lea.vmem [#allocation6], 8
        %v1406 = vld [vmem:[%s1405] sm:$0x1]
        %v1408 = vperm.slane %v1406, 0
        %v1410 = vmul.f32 %v1389, %v1408
        %v1411 = vmul.f32 %v1390, %v1408
        %v1412 = vmul.f32 %v1391, %v1408
        %v1413 = vmul.f32 %v1392, %v1408
        %v1414 = vmul.f32 %v1393, %v1408
        %v1415 = vmul.f32 %v1394, %v1408
        %v1416 = vmul.f32 %v1395, %v1408
        %v1417 = vmul.f32 %v1396, %v1408
        %v1418 = vmul.f32 %v1397, %v1408
        %v1419 = vmul.f32 %v1398, %v1408
        %v1420 = vmul.f32 %v1399, %v1408
        %v1421 = vmul.f32 %v1400, %v1408
        %v1422 = vmul.f32 %v1401, %v1408
        %v1423 = vmul.f32 %v1402, %v1408
        %v1424 = vmul.f32 %v1403, %v1408
        %v1425 = vmul.f32 %v1404, %v1408
        %v1426 = vadd.f32 %v1372, %v1410
        %v1427 = vadd.f32 %v1373, %v1411
        %v1428 = vadd.f32 %v1374, %v1412
        %v1429 = vadd.f32 %v1375, %v1413
        %v1430 = vadd.f32 %v1376, %v1414
        %v1431 = vadd.f32 %v1377, %v1415
        %v1432 = vadd.f32 %v1378, %v1416
        %v1433 = vadd.f32 %v1379, %v1417
        %v1434 = vadd.f32 %v1380, %v1418
        %v1435 = vadd.f32 %v1381, %v1419
        %v1436 = vadd.f32 %v1382, %v1420
        %v1437 = vadd.f32 %v1383, %v1421
        %v1438 = vadd.f32 %v1384, %v1422
        %v1439 = vadd.f32 %v1385, %v1423
        %v1440 = vadd.f32 %v1386, %v1424
        %v1441 = vadd.f32 %v1387, %v1425
        %s1442 = scalar_lea.vmem [#allocation2], 464
        %v1443 = vld [vmem:[%s1442] sm:$0xff]
        %v1444 = vld [vmem:[%s1442 + $0x8] sm:$0xff]
        %v1445 = vld [vmem:[%s1442 + $0x10] sm:$0xff]
        %v1446 = vld [vmem:[%s1442 + $0x18] sm:$0xff]
        %v1447 = vld [vmem:[%s1442 + $0x20] sm:$0xff]
        %v1448 = vld [vmem:[%s1442 + $0x28] sm:$0xff]
        %v1449 = vld [vmem:[%s1442 + $0x30] sm:$0xff]
        %v1450 = vld [vmem:[%s1442 + $0x38] sm:$0xff]
        %v1451 = vld [vmem:[%s1442 + $0x40] sm:$0xff]
        %v1452 = vld [vmem:[%s1442 + $0x48] sm:$0xff]
        %v1453 = vld [vmem:[%s1442 + $0x50] sm:$0xff]
        %v1454 = vld [vmem:[%s1442 + $0x58] sm:$0xff]
        %v1455 = vld [vmem:[%s1442 + $0x60] sm:$0xff]
        %v1456 = vld [vmem:[%s1442 + $0x68] sm:$0xff]
        %v1457 = vld [vmem:[%s1442 + $0x70] sm:$0xff]
        %v1458 = vld [vmem:[%s1442 + $0x78] sm:$0xff]
        %s1459 = scalar_lea.vmem [#allocation6], 9
        %v1460 = vld [vmem:[%s1459] sm:$0x1]
        %v1462 = vperm.slane %v1460, 0
        %v1464 = vmul.f32 %v1443, %v1462
        %v1465 = vmul.f32 %v1444, %v1462
        %v1466 = vmul.f32 %v1445, %v1462
        %v1467 = vmul.f32 %v1446, %v1462
        %v1468 = vmul.f32 %v1447, %v1462
        %v1469 = vmul.f32 %v1448, %v1462
        %v1470 = vmul.f32 %v1449, %v1462
        %v1471 = vmul.f32 %v1450, %v1462
        %v1472 = vmul.f32 %v1451, %v1462
        %v1473 = vmul.f32 %v1452, %v1462
        %v1474 = vmul.f32 %v1453, %v1462
        %v1475 = vmul.f32 %v1454, %v1462
        %v1476 = vmul.f32 %v1455, %v1462
        %v1477 = vmul.f32 %v1456, %v1462
        %v1478 = vmul.f32 %v1457, %v1462
        %v1479 = vmul.f32 %v1458, %v1462
        %v1480 = vadd.f32 %v1426, %v1464
        %v1481 = vadd.f32 %v1427, %v1465
        %v1482 = vadd.f32 %v1428, %v1466
        %v1483 = vadd.f32 %v1429, %v1467
        %v1484 = vadd.f32 %v1430, %v1468
        %v1485 = vadd.f32 %v1431, %v1469
        %v1486 = vadd.f32 %v1432, %v1470
        %v1487 = vadd.f32 %v1433, %v1471
        %v1488 = vadd.f32 %v1434, %v1472
        %v1489 = vadd.f32 %v1435, %v1473
        %v1490 = vadd.f32 %v1436, %v1474
        %v1491 = vadd.f32 %v1437, %v1475
        %v1492 = vadd.f32 %v1438, %v1476
        %v1493 = vadd.f32 %v1439, %v1477
        %v1494 = vadd.f32 %v1440, %v1478
        %v1495 = vadd.f32 %v1441, %v1479
        %s1496 = scalar_lea.vmem [#allocation2], 688
        %v1497 = vld [vmem:[%s1496] sm:$0xff]
        %v1498 = vld [vmem:[%s1496 + $0x8] sm:$0xff]
        %v1499 = vld [vmem:[%s1496 + $0x10] sm:$0xff]
        %v1500 = vld [vmem:[%s1496 + $0x18] sm:$0xff]
        %v1501 = vld [vmem:[%s1496 + $0x20] sm:$0xff]
        %v1502 = vld [vmem:[%s1496 + $0x28] sm:$0xff]
        %v1503 = vld [vmem:[%s1496 + $0x30] sm:$0xff]
        %v1504 = vld [vmem:[%s1496 + $0x38] sm:$0xff]
        %v1505 = vld [vmem:[%s1496 + $0x40] sm:$0xff]
        %v1506 = vld [vmem:[%s1496 + $0x48] sm:$0xff]
        %v1507 = vld [vmem:[%s1496 + $0x50] sm:$0xff]
        %v1508 = vld [vmem:[%s1496 + $0x58] sm:$0xff]
        %v1509 = vld [vmem:[%s1496 + $0x60] sm:$0xff]
        %v1510 = vld [vmem:[%s1496 + $0x68] sm:$0xff]
        %v1511 = vld [vmem:[%s1496 + $0x70] sm:$0xff]
        %v1512 = vld [vmem:[%s1496 + $0x78] sm:$0xff]
        %s1513 = scalar_lea.vmem [#allocation6], 10
        %v1514 = vld [vmem:[%s1513] sm:$0x1]
        %v1516 = vperm.slane %v1514, 0
        %v1518 = vmul.f32 %v1497, %v1516
        %v1519 = vmul.f32 %v1498, %v1516
        %v1520 = vmul.f32 %v1499, %v1516
        %v1521 = vmul.f32 %v1500, %v1516
        %v1522 = vmul.f32 %v1501, %v1516
        %v1523 = vmul.f32 %v1502, %v1516
        %v1524 = vmul.f32 %v1503, %v1516
        %v1525 = vmul.f32 %v1504, %v1516
        %v1526 = vmul.f32 %v1505, %v1516
        %v1527 = vmul.f32 %v1506, %v1516
        %v1528 = vmul.f32 %v1507, %v1516
        %v1529 = vmul.f32 %v1508, %v1516
        %v1530 = vmul.f32 %v1509, %v1516
        %v1531 = vmul.f32 %v1510, %v1516
        %v1532 = vmul.f32 %v1511, %v1516
        %v1533 = vmul.f32 %v1512, %v1516
        %v1534 = vadd.f32 %v1480, %v1518
        %v1535 = vadd.f32 %v1481, %v1519
        %v1536 = vadd.f32 %v1482, %v1520
        %v1537 = vadd.f32 %v1483, %v1521
        %v1538 = vadd.f32 %v1484, %v1522
        %v1539 = vadd.f32 %v1485, %v1523
        %v1540 = vadd.f32 %v1486, %v1524
        %v1541 = vadd.f32 %v1487, %v1525
        %v1542 = vadd.f32 %v1488, %v1526
        %v1543 = vadd.f32 %v1489, %v1527
        %v1544 = vadd.f32 %v1490, %v1528
        %v1545 = vadd.f32 %v1491, %v1529
        %v1546 = vadd.f32 %v1492, %v1530
        %v1547 = vadd.f32 %v1493, %v1531
        %v1548 = vadd.f32 %v1494, %v1532
        %v1549 = vadd.f32 %v1495, %v1533
        %s1550 = scalar_lea.vmem [#allocation2], 912
        %v1551 = vld [vmem:[%s1550] sm:$0xff]
        %v1552 = vld [vmem:[%s1550 + $0x8] sm:$0xff]
        %v1553 = vld [vmem:[%s1550 + $0x10] sm:$0xff]
        %v1554 = vld [vmem:[%s1550 + $0x18] sm:$0xff]
        %v1555 = vld [vmem:[%s1550 + $0x20] sm:$0xff]
        %v1556 = vld [vmem:[%s1550 + $0x28] sm:$0xff]
        %v1557 = vld [vmem:[%s1550 + $0x30] sm:$0xff]
        %v1558 = vld [vmem:[%s1550 + $0x38] sm:$0xff]
        %v1559 = vld [vmem:[%s1550 + $0x40] sm:$0xff]
        %v1560 = vld [vmem:[%s1550 + $0x48] sm:$0xff]
        %v1561 = vld [vmem:[%s1550 + $0x50] sm:$0xff]
        %v1562 = vld [vmem:[%s1550 + $0x58] sm:$0xff]
        %v1563 = vld [vmem:[%s1550 + $0x60] sm:$0xff]
        %v1564 = vld [vmem:[%s1550 + $0x68] sm:$0xff]
        %v1565 = vld [vmem:[%s1550 + $0x70] sm:$0xff]
        %v1566 = vld [vmem:[%s1550 + $0x78] sm:$0xff]
        %s1567 = scalar_lea.vmem [#allocation6], 11
        %v1568 = vld [vmem:[%s1567] sm:$0x1]
        %v1570 = vperm.slane %v1568, 0
        %v1572 = vmul.f32 %v1551, %v1570
        %v1573 = vmul.f32 %v1552, %v1570
        %v1574 = vmul.f32 %v1553, %v1570
        %v1575 = vmul.f32 %v1554, %v1570
        %v1576 = vmul.f32 %v1555, %v1570
        %v1577 = vmul.f32 %v1556, %v1570
        %v1578 = vmul.f32 %v1557, %v1570
        %v1579 = vmul.f32 %v1558, %v1570
        %v1580 = vmul.f32 %v1559, %v1570
        %v1581 = vmul.f32 %v1560, %v1570
        %v1582 = vmul.f32 %v1561, %v1570
        %v1583 = vmul.f32 %v1562, %v1570
        %v1584 = vmul.f32 %v1563, %v1570
        %v1585 = vmul.f32 %v1564, %v1570
        %v1586 = vmul.f32 %v1565, %v1570
        %v1587 = vmul.f32 %v1566, %v1570
        %v1588 = vadd.f32 %v1534, %v1572
        %v1589 = vadd.f32 %v1535, %v1573
        %v1590 = vadd.f32 %v1536, %v1574
        %v1591 = vadd.f32 %v1537, %v1575
        %v1592 = vadd.f32 %v1538, %v1576
        %v1593 = vadd.f32 %v1539, %v1577
        %v1594 = vadd.f32 %v1540, %v1578
        %v1595 = vadd.f32 %v1541, %v1579
        %v1596 = vadd.f32 %v1542, %v1580
        %v1597 = vadd.f32 %v1543, %v1581
        %v1598 = vadd.f32 %v1544, %v1582
        %v1599 = vadd.f32 %v1545, %v1583
        %v1600 = vadd.f32 %v1546, %v1584
        %v1601 = vadd.f32 %v1547, %v1585
        %v1602 = vadd.f32 %v1548, %v1586
        %v1603 = vadd.f32 %v1549, %v1587
        %s1604 = scalar_lea.vmem [#allocation2], 1136
        %v1605 = vld [vmem:[%s1604] sm:$0xff]
        %v1606 = vld [vmem:[%s1604 + $0x8] sm:$0xff]
        %v1607 = vld [vmem:[%s1604 + $0x10] sm:$0xff]
        %v1608 = vld [vmem:[%s1604 + $0x18] sm:$0xff]
        %v1609 = vld [vmem:[%s1604 + $0x20] sm:$0xff]
        %v1610 = vld [vmem:[%s1604 + $0x28] sm:$0xff]
        %v1611 = vld [vmem:[%s1604 + $0x30] sm:$0xff]
        %v1612 = vld [vmem:[%s1604 + $0x38] sm:$0xff]
        %v1613 = vld [vmem:[%s1604 + $0x40] sm:$0xff]
        %v1614 = vld [vmem:[%s1604 + $0x48] sm:$0xff]
        %v1615 = vld [vmem:[%s1604 + $0x50] sm:$0xff]
        %v1616 = vld [vmem:[%s1604 + $0x58] sm:$0xff]
        %v1617 = vld [vmem:[%s1604 + $0x60] sm:$0xff]
        %v1618 = vld [vmem:[%s1604 + $0x68] sm:$0xff]
        %v1619 = vld [vmem:[%s1604 + $0x70] sm:$0xff]
        %v1620 = vld [vmem:[%s1604 + $0x78] sm:$0xff]
        %s1621 = scalar_lea.vmem [#allocation6], 12
        %v1622 = vld [vmem:[%s1621] sm:$0x1]
        %v1624 = vperm.slane %v1622, 0
        %v1626 = vmul.f32 %v1605, %v1624
        %v1627 = vmul.f32 %v1606, %v1624
        %v1628 = vmul.f32 %v1607, %v1624
        %v1629 = vmul.f32 %v1608, %v1624
        %v1630 = vmul.f32 %v1609, %v1624
        %v1631 = vmul.f32 %v1610, %v1624
        %v1632 = vmul.f32 %v1611, %v1624
        %v1633 = vmul.f32 %v1612, %v1624
        %v1634 = vmul.f32 %v1613, %v1624
        %v1635 = vmul.f32 %v1614, %v1624
        %v1636 = vmul.f32 %v1615, %v1624
        %v1637 = vmul.f32 %v1616, %v1624
        %v1638 = vmul.f32 %v1617, %v1624
        %v1639 = vmul.f32 %v1618, %v1624
        %v1640 = vmul.f32 %v1619, %v1624
        %v1641 = vmul.f32 %v1620, %v1624
        %v1642 = vadd.f32 %v1588, %v1626
        %v1643 = vadd.f32 %v1589, %v1627
        %v1644 = vadd.f32 %v1590, %v1628
        %v1645 = vadd.f32 %v1591, %v1629
        %v1646 = vadd.f32 %v1592, %v1630
        %v1647 = vadd.f32 %v1593, %v1631
        %v1648 = vadd.f32 %v1594, %v1632
        %v1649 = vadd.f32 %v1595, %v1633
        %v1650 = vadd.f32 %v1596, %v1634
        %v1651 = vadd.f32 %v1597, %v1635
        %v1652 = vadd.f32 %v1598, %v1636
        %v1653 = vadd.f32 %v1599, %v1637
        %v1654 = vadd.f32 %v1600, %v1638
        %v1655 = vadd.f32 %v1601, %v1639
        %v1656 = vadd.f32 %v1602, %v1640
        %v1657 = vadd.f32 %v1603, %v1641
        %s1658 = scalar_lea.vmem [#allocation2], 1360
        %v1659 = vld [vmem:[%s1658] sm:$0xff]
        %v1660 = vld [vmem:[%s1658 + $0x8] sm:$0xff]
        %v1661 = vld [vmem:[%s1658 + $0x10] sm:$0xff]
        %v1662 = vld [vmem:[%s1658 + $0x18] sm:$0xff]
        %v1663 = vld [vmem:[%s1658 + $0x20] sm:$0xff]
        %v1664 = vld [vmem:[%s1658 + $0x28] sm:$0xff]
        %v1665 = vld [vmem:[%s1658 + $0x30] sm:$0xff]
        %v1666 = vld [vmem:[%s1658 + $0x38] sm:$0xff]
        %v1667 = vld [vmem:[%s1658 + $0x40] sm:$0xff]
        %v1668 = vld [vmem:[%s1658 + $0x48] sm:$0xff]
        %v1669 = vld [vmem:[%s1658 + $0x50] sm:$0xff]
        %v1670 = vld [vmem:[%s1658 + $0x58] sm:$0xff]
        %v1671 = vld [vmem:[%s1658 + $0x60] sm:$0xff]
        %v1672 = vld [vmem:[%s1658 + $0x68] sm:$0xff]
        %v1673 = vld [vmem:[%s1658 + $0x70] sm:$0xff]
        %v1674 = vld [vmem:[%s1658 + $0x78] sm:$0xff]
        %s1675 = scalar_lea.vmem [#allocation6], 13
        %v1676 = vld [vmem:[%s1675] sm:$0x1]
        %v1678 = vperm.slane %v1676, 0
        %v1680 = vmul.f32 %v1659, %v1678
        %v1681 = vmul.f32 %v1660, %v1678
        %v1682 = vmul.f32 %v1661, %v1678
        %v1683 = vmul.f32 %v1662, %v1678
        %v1684 = vmul.f32 %v1663, %v1678
        %v1685 = vmul.f32 %v1664, %v1678
        %v1686 = vmul.f32 %v1665, %v1678
        %v1687 = vmul.f32 %v1666, %v1678
        %v1688 = vmul.f32 %v1667, %v1678
        %v1689 = vmul.f32 %v1668, %v1678
        %v1690 = vmul.f32 %v1669, %v1678
        %v1691 = vmul.f32 %v1670, %v1678
        %v1692 = vmul.f32 %v1671, %v1678
        %v1693 = vmul.f32 %v1672, %v1678
        %v1694 = vmul.f32 %v1673, %v1678
        %v1695 = vmul.f32 %v1674, %v1678
        %v1696 = vadd.f32 %v1642, %v1680
        %v1697 = vadd.f32 %v1643, %v1681
        %v1698 = vadd.f32 %v1644, %v1682
        %v1699 = vadd.f32 %v1645, %v1683
        %v1700 = vadd.f32 %v1646, %v1684
        %v1701 = vadd.f32 %v1647, %v1685
        %v1702 = vadd.f32 %v1648, %v1686
        %v1703 = vadd.f32 %v1649, %v1687
        %v1704 = vadd.f32 %v1650, %v1688
        %v1705 = vadd.f32 %v1651, %v1689
        %v1706 = vadd.f32 %v1652, %v1690
        %v1707 = vadd.f32 %v1653, %v1691
        %v1708 = vadd.f32 %v1654, %v1692
        %v1709 = vadd.f32 %v1655, %v1693
        %v1710 = vadd.f32 %v1656, %v1694
        %v1711 = vadd.f32 %v1657, %v1695
        %s1712 = scalar_lea.vmem [#allocation2], 32
        %v1713 = vld [vmem:[%s1712] sm:$0xff]
        %v1714 = vld [vmem:[%s1712 + $0x8] sm:$0xff]
        %v1715 = vld [vmem:[%s1712 + $0x10] sm:$0xff]
        %v1716 = vld [vmem:[%s1712 + $0x18] sm:$0xff]
        %v1717 = vld [vmem:[%s1712 + $0x20] sm:$0xff]
        %v1718 = vld [vmem:[%s1712 + $0x28] sm:$0xff]
        %v1719 = vld [vmem:[%s1712 + $0x30] sm:$0xff]
        %v1720 = vld [vmem:[%s1712 + $0x38] sm:$0xff]
        %v1721 = vld [vmem:[%s1712 + $0x40] sm:$0xff]
        %v1722 = vld [vmem:[%s1712 + $0x48] sm:$0xff]
        %v1723 = vld [vmem:[%s1712 + $0x50] sm:$0xff]
        %v1724 = vld [vmem:[%s1712 + $0x58] sm:$0xff]
        %v1725 = vld [vmem:[%s1712 + $0x60] sm:$0xff]
        %v1726 = vld [vmem:[%s1712 + $0x68] sm:$0xff]
        %v1727 = vld [vmem:[%s1712 + $0x70] sm:$0xff]
        %v1728 = vld [vmem:[%s1712 + $0x78] sm:$0xff]
        %s1729 = scalar_lea.vmem [#allocation6], 14
        %v1730 = vld [vmem:[%s1729] sm:$0x1]
        %v1732 = vperm.slane %v1730, 0
        %v1734 = vmul.f32 %v1713, %v1732
        %v1735 = vmul.f32 %v1714, %v1732
        %v1736 = vmul.f32 %v1715, %v1732
        %v1737 = vmul.f32 %v1716, %v1732
        %v1738 = vmul.f32 %v1717, %v1732
        %v1739 = vmul.f32 %v1718, %v1732
        %v1740 = vmul.f32 %v1719, %v1732
        %v1741 = vmul.f32 %v1720, %v1732
        %v1742 = vmul.f32 %v1721, %v1732
        %v1743 = vmul.f32 %v1722, %v1732
        %v1744 = vmul.f32 %v1723, %v1732
        %v1745 = vmul.f32 %v1724, %v1732
        %v1746 = vmul.f32 %v1725, %v1732
        %v1747 = vmul.f32 %v1726, %v1732
        %v1748 = vmul.f32 %v1727, %v1732
        %v1749 = vmul.f32 %v1728, %v1732
        %v1750 = vadd.f32 %v1696, %v1734
        %v1751 = vadd.f32 %v1697, %v1735
        %v1752 = vadd.f32 %v1698, %v1736
        %v1753 = vadd.f32 %v1699, %v1737
        %v1754 = vadd.f32 %v1700, %v1738
        %v1755 = vadd.f32 %v1701, %v1739
        %v1756 = vadd.f32 %v1702, %v1740
        %v1757 = vadd.f32 %v1703, %v1741
        %v1758 = vadd.f32 %v1704, %v1742
        %v1759 = vadd.f32 %v1705, %v1743
        %v1760 = vadd.f32 %v1706, %v1744
        %v1761 = vadd.f32 %v1707, %v1745
        %v1762 = vadd.f32 %v1708, %v1746
        %v1763 = vadd.f32 %v1709, %v1747
        %v1764 = vadd.f32 %v1710, %v1748
        %v1765 = vadd.f32 %v1711, %v1749
        %s1766 = scalar_lea.vmem [#allocation2], 256
        %v1767 = vld [vmem:[%s1766] sm:$0xff]
        %v1768 = vld [vmem:[%s1766 + $0x8] sm:$0xff]
        %v1769 = vld [vmem:[%s1766 + $0x10] sm:$0xff]
        %v1770 = vld [vmem:[%s1766 + $0x18] sm:$0xff]
        %v1771 = vld [vmem:[%s1766 + $0x20] sm:$0xff]
        %v1772 = vld [vmem:[%s1766 + $0x28] sm:$0xff]
        %v1773 = vld [vmem:[%s1766 + $0x30] sm:$0xff]
        %v1774 = vld [vmem:[%s1766 + $0x38] sm:$0xff]
        %v1775 = vld [vmem:[%s1766 + $0x40] sm:$0xff]
        %v1776 = vld [vmem:[%s1766 + $0x48] sm:$0xff]
        %v1777 = vld [vmem:[%s1766 + $0x50] sm:$0xff]
        %v1778 = vld [vmem:[%s1766 + $0x58] sm:$0xff]
        %v1779 = vld [vmem:[%s1766 + $0x60] sm:$0xff]
        %v1780 = vld [vmem:[%s1766 + $0x68] sm:$0xff]
        %v1781 = vld [vmem:[%s1766 + $0x70] sm:$0xff]
        %v1782 = vld [vmem:[%s1766 + $0x78] sm:$0xff]
        %s1783 = scalar_lea.vmem [#allocation6], 15
        %v1784 = vld [vmem:[%s1783] sm:$0x1]
        %v1786 = vperm.slane %v1784, 0
        %v1788 = vmul.f32 %v1767, %v1786
        %v1789 = vmul.f32 %v1768, %v1786
        %v1790 = vmul.f32 %v1769, %v1786
        %v1791 = vmul.f32 %v1770, %v1786
        %v1792 = vmul.f32 %v1771, %v1786
        %v1793 = vmul.f32 %v1772, %v1786
        %v1794 = vmul.f32 %v1773, %v1786
        %v1795 = vmul.f32 %v1774, %v1786
        %v1796 = vmul.f32 %v1775, %v1786
        %v1797 = vmul.f32 %v1776, %v1786
        %v1798 = vmul.f32 %v1777, %v1786
        %v1799 = vmul.f32 %v1778, %v1786
        %v1800 = vmul.f32 %v1779, %v1786
        %v1801 = vmul.f32 %v1780, %v1786
        %v1802 = vmul.f32 %v1781, %v1786
        %v1803 = vmul.f32 %v1782, %v1786
        %v1804 = vadd.f32 %v1750, %v1788
        %v1805 = vadd.f32 %v1751, %v1789
        %v1806 = vadd.f32 %v1752, %v1790
        %v1807 = vadd.f32 %v1753, %v1791
        %v1808 = vadd.f32 %v1754, %v1792
        %v1809 = vadd.f32 %v1755, %v1793
        %v1810 = vadd.f32 %v1756, %v1794
        %v1811 = vadd.f32 %v1757, %v1795
        %v1812 = vadd.f32 %v1758, %v1796
        %v1813 = vadd.f32 %v1759, %v1797
        %v1814 = vadd.f32 %v1760, %v1798
        %v1815 = vadd.f32 %v1761, %v1799
        %v1816 = vadd.f32 %v1762, %v1800
        %v1817 = vadd.f32 %v1763, %v1801
        %v1818 = vadd.f32 %v1764, %v1802
        %v1819 = vadd.f32 %v1765, %v1803
        %s1820 = scalar_lea.vmem [#allocation2], 480
        %v1821 = vld [vmem:[%s1820] sm:$0xff]
        %v1822 = vld [vmem:[%s1820 + $0x8] sm:$0xff]
        %v1823 = vld [vmem:[%s1820 + $0x10] sm:$0xff]
        %v1824 = vld [vmem:[%s1820 + $0x18] sm:$0xff]
        %v1825 = vld [vmem:[%s1820 + $0x20] sm:$0xff]
        %v1826 = vld [vmem:[%s1820 + $0x28] sm:$0xff]
        %v1827 = vld [vmem:[%s1820 + $0x30] sm:$0xff]
        %v1828 = vld [vmem:[%s1820 + $0x38] sm:$0xff]
        %v1829 = vld [vmem:[%s1820 + $0x40] sm:$0xff]
        %v1830 = vld [vmem:[%s1820 + $0x48] sm:$0xff]
        %v1831 = vld [vmem:[%s1820 + $0x50] sm:$0xff]
        %v1832 = vld [vmem:[%s1820 + $0x58] sm:$0xff]
        %v1833 = vld [vmem:[%s1820 + $0x60] sm:$0xff]
        %v1834 = vld [vmem:[%s1820 + $0x68] sm:$0xff]
        %v1835 = vld [vmem:[%s1820 + $0x70] sm:$0xff]
        %v1836 = vld [vmem:[%s1820 + $0x78] sm:$0xff]
        %s1837 = scalar_lea.vmem [#allocation6], 16
        %v1838 = vld [vmem:[%s1837] sm:$0x1]
        %v1840 = vperm.slane %v1838, 0
        %v1842 = vmul.f32 %v1821, %v1840
        %v1843 = vmul.f32 %v1822, %v1840
        %v1844 = vmul.f32 %v1823, %v1840
        %v1845 = vmul.f32 %v1824, %v1840
        %v1846 = vmul.f32 %v1825, %v1840
        %v1847 = vmul.f32 %v1826, %v1840
        %v1848 = vmul.f32 %v1827, %v1840
        %v1849 = vmul.f32 %v1828, %v1840
        %v1850 = vmul.f32 %v1829, %v1840
        %v1851 = vmul.f32 %v1830, %v1840
        %v1852 = vmul.f32 %v1831, %v1840
        %v1853 = vmul.f32 %v1832, %v1840
        %v1854 = vmul.f32 %v1833, %v1840
        %v1855 = vmul.f32 %v1834, %v1840
        %v1856 = vmul.f32 %v1835, %v1840
        %v1857 = vmul.f32 %v1836, %v1840
        %v1858 = vadd.f32 %v1804, %v1842
        %v1859 = vadd.f32 %v1805, %v1843
        %v1860 = vadd.f32 %v1806, %v1844
        %v1861 = vadd.f32 %v1807, %v1845
        %v1862 = vadd.f32 %v1808, %v1846
        %v1863 = vadd.f32 %v1809, %v1847
        %v1864 = vadd.f32 %v1810, %v1848
        %v1865 = vadd.f32 %v1811, %v1849
        %v1866 = vadd.f32 %v1812, %v1850
        %v1867 = vadd.f32 %v1813, %v1851
        %v1868 = vadd.f32 %v1814, %v1852
        %v1869 = vadd.f32 %v1815, %v1853
        %v1870 = vadd.f32 %v1816, %v1854
        %v1871 = vadd.f32 %v1817, %v1855
        %v1872 = vadd.f32 %v1818, %v1856
        %v1873 = vadd.f32 %v1819, %v1857
        %s1874 = scalar_lea.vmem [#allocation2], 704
        %v1875 = vld [vmem:[%s1874] sm:$0xff]
        %v1876 = vld [vmem:[%s1874 + $0x8] sm:$0xff]
        %v1877 = vld [vmem:[%s1874 + $0x10] sm:$0xff]
        %v1878 = vld [vmem:[%s1874 + $0x18] sm:$0xff]
        %v1879 = vld [vmem:[%s1874 + $0x20] sm:$0xff]
        %v1880 = vld [vmem:[%s1874 + $0x28] sm:$0xff]
        %v1881 = vld [vmem:[%s1874 + $0x30] sm:$0xff]
        %v1882 = vld [vmem:[%s1874 + $0x38] sm:$0xff]
        %v1883 = vld [vmem:[%s1874 + $0x40] sm:$0xff]
        %v1884 = vld [vmem:[%s1874 + $0x48] sm:$0xff]
        %v1885 = vld [vmem:[%s1874 + $0x50] sm:$0xff]
        %v1886 = vld [vmem:[%s1874 + $0x58] sm:$0xff]
        %v1887 = vld [vmem:[%s1874 + $0x60] sm:$0xff]
        %v1888 = vld [vmem:[%s1874 + $0x68] sm:$0xff]
        %v1889 = vld [vmem:[%s1874 + $0x70] sm:$0xff]
        %v1890 = vld [vmem:[%s1874 + $0x78] sm:$0xff]
        %s1891 = scalar_lea.vmem [#allocation6], 17
        %v1892 = vld [vmem:[%s1891] sm:$0x1]
        %v1894 = vperm.slane %v1892, 0
        %v1896 = vmul.f32 %v1875, %v1894
        %v1897 = vmul.f32 %v1876, %v1894
        %v1898 = vmul.f32 %v1877, %v1894
        %v1899 = vmul.f32 %v1878, %v1894
        %v1900 = vmul.f32 %v1879, %v1894
        %v1901 = vmul.f32 %v1880, %v1894
        %v1902 = vmul.f32 %v1881, %v1894
        %v1903 = vmul.f32 %v1882, %v1894
        %v1904 = vmul.f32 %v1883, %v1894
        %v1905 = vmul.f32 %v1884, %v1894
        %v1906 = vmul.f32 %v1885, %v1894
        %v1907 = vmul.f32 %v1886, %v1894
        %v1908 = vmul.f32 %v1887, %v1894
        %v1909 = vmul.f32 %v1888, %v1894
        %v1910 = vmul.f32 %v1889, %v1894
        %v1911 = vmul.f32 %v1890, %v1894
        %v1912 = vadd.f32 %v1858, %v1896
        %v1913 = vadd.f32 %v1859, %v1897
        %v1914 = vadd.f32 %v1860, %v1898
        %v1915 = vadd.f32 %v1861, %v1899
        %v1916 = vadd.f32 %v1862, %v1900
        %v1917 = vadd.f32 %v1863, %v1901
        %v1918 = vadd.f32 %v1864, %v1902
        %v1919 = vadd.f32 %v1865, %v1903
        %v1920 = vadd.f32 %v1866, %v1904
        %v1921 = vadd.f32 %v1867, %v1905
        %v1922 = vadd.f32 %v1868, %v1906
        %v1923 = vadd.f32 %v1869, %v1907
        %v1924 = vadd.f32 %v1870, %v1908
        %v1925 = vadd.f32 %v1871, %v1909
        %v1926 = vadd.f32 %v1872, %v1910
        %v1927 = vadd.f32 %v1873, %v1911
        %s1928 = scalar_lea.vmem [#allocation2], 928
        %v1929 = vld [vmem:[%s1928] sm:$0xff]
        %v1930 = vld [vmem:[%s1928 + $0x8] sm:$0xff]
        %v1931 = vld [vmem:[%s1928 + $0x10] sm:$0xff]
        %v1932 = vld [vmem:[%s1928 + $0x18] sm:$0xff]
        %v1933 = vld [vmem:[%s1928 + $0x20] sm:$0xff]
        %v1934 = vld [vmem:[%s1928 + $0x28] sm:$0xff]
        %v1935 = vld [vmem:[%s1928 + $0x30] sm:$0xff]
        %v1936 = vld [vmem:[%s1928 + $0x38] sm:$0xff]
        %v1937 = vld [vmem:[%s1928 + $0x40] sm:$0xff]
        %v1938 = vld [vmem:[%s1928 + $0x48] sm:$0xff]
        %v1939 = vld [vmem:[%s1928 + $0x50] sm:$0xff]
        %v1940 = vld [vmem:[%s1928 + $0x58] sm:$0xff]
        %v1941 = vld [vmem:[%s1928 + $0x60] sm:$0xff]
        %v1942 = vld [vmem:[%s1928 + $0x68] sm:$0xff]
        %v1943 = vld [vmem:[%s1928 + $0x70] sm:$0xff]
        %v1944 = vld [vmem:[%s1928 + $0x78] sm:$0xff]
        %s1945 = scalar_lea.vmem [#allocation6], 18
        %v1946 = vld [vmem:[%s1945] sm:$0x1]
        %v1948 = vperm.slane %v1946, 0
        %v1950 = vmul.f32 %v1929, %v1948
        %v1951 = vmul.f32 %v1930, %v1948
        %v1952 = vmul.f32 %v1931, %v1948
        %v1953 = vmul.f32 %v1932, %v1948
        %v1954 = vmul.f32 %v1933, %v1948
        %v1955 = vmul.f32 %v1934, %v1948
        %v1956 = vmul.f32 %v1935, %v1948
        %v1957 = vmul.f32 %v1936, %v1948
        %v1958 = vmul.f32 %v1937, %v1948
        %v1959 = vmul.f32 %v1938, %v1948
        %v1960 = vmul.f32 %v1939, %v1948
        %v1961 = vmul.f32 %v1940, %v1948
        %v1962 = vmul.f32 %v1941, %v1948
        %v1963 = vmul.f32 %v1942, %v1948
        %v1964 = vmul.f32 %v1943, %v1948
        %v1965 = vmul.f32 %v1944, %v1948
        %v1966 = vadd.f32 %v1912, %v1950
        %v1967 = vadd.f32 %v1913, %v1951
        %v1968 = vadd.f32 %v1914, %v1952
        %v1969 = vadd.f32 %v1915, %v1953
        %v1970 = vadd.f32 %v1916, %v1954
        %v1971 = vadd.f32 %v1917, %v1955
        %v1972 = vadd.f32 %v1918, %v1956
        %v1973 = vadd.f32 %v1919, %v1957
        %v1974 = vadd.f32 %v1920, %v1958
        %v1975 = vadd.f32 %v1921, %v1959
        %v1976 = vadd.f32 %v1922, %v1960
        %v1977 = vadd.f32 %v1923, %v1961
        %v1978 = vadd.f32 %v1924, %v1962
        %v1979 = vadd.f32 %v1925, %v1963
        %v1980 = vadd.f32 %v1926, %v1964
        %v1981 = vadd.f32 %v1927, %v1965
        %s1982 = scalar_lea.vmem [#allocation2], 1152
        %v1983 = vld [vmem:[%s1982] sm:$0xff]
        %v1984 = vld [vmem:[%s1982 + $0x8] sm:$0xff]
        %v1985 = vld [vmem:[%s1982 + $0x10] sm:$0xff]
        %v1986 = vld [vmem:[%s1982 + $0x18] sm:$0xff]
        %v1987 = vld [vmem:[%s1982 + $0x20] sm:$0xff]
        %v1988 = vld [vmem:[%s1982 + $0x28] sm:$0xff]
        %v1989 = vld [vmem:[%s1982 + $0x30] sm:$0xff]
        %v1990 = vld [vmem:[%s1982 + $0x38] sm:$0xff]
        %v1991 = vld [vmem:[%s1982 + $0x40] sm:$0xff]
        %v1992 = vld [vmem:[%s1982 + $0x48] sm:$0xff]
        %v1993 = vld [vmem:[%s1982 + $0x50] sm:$0xff]
        %v1994 = vld [vmem:[%s1982 + $0x58] sm:$0xff]
        %v1995 = vld [vmem:[%s1982 + $0x60] sm:$0xff]
        %v1996 = vld [vmem:[%s1982 + $0x68] sm:$0xff]
        %v1997 = vld [vmem:[%s1982 + $0x70] sm:$0xff]
        %v1998 = vld [vmem:[%s1982 + $0x78] sm:$0xff]
        %s1999 = scalar_lea.vmem [#allocation6], 19
        %v2000 = vld [vmem:[%s1999] sm:$0x1]
        %v2002 = vperm.slane %v2000, 0
        %v2004 = vmul.f32 %v1983, %v2002
        %v2005 = vmul.f32 %v1984, %v2002
        %v2006 = vmul.f32 %v1985, %v2002
        %v2007 = vmul.f32 %v1986, %v2002
        %v2008 = vmul.f32 %v1987, %v2002
        %v2009 = vmul.f32 %v1988, %v2002
        %v2010 = vmul.f32 %v1989, %v2002
        %v2011 = vmul.f32 %v1990, %v2002
        %v2012 = vmul.f32 %v1991, %v2002
        %v2013 = vmul.f32 %v1992, %v2002
        %v2014 = vmul.f32 %v1993, %v2002
        %v2015 = vmul.f32 %v1994, %v2002
        %v2016 = vmul.f32 %v1995, %v2002
        %v2017 = vmul.f32 %v1996, %v2002
        %v2018 = vmul.f32 %v1997, %v2002
        %v2019 = vmul.f32 %v1998, %v2002
        %v2020 = vadd.f32 %v1966, %v2004
        %v2021 = vadd.f32 %v1967, %v2005
        %v2022 = vadd.f32 %v1968, %v2006
        %v2023 = vadd.f32 %v1969, %v2007
        %v2024 = vadd.f32 %v1970, %v2008
        %v2025 = vadd.f32 %v1971, %v2009
        %v2026 = vadd.f32 %v1972, %v2010
        %v2027 = vadd.f32 %v1973, %v2011
        %v2028 = vadd.f32 %v1974, %v2012
        %v2029 = vadd.f32 %v1975, %v2013
        %v2030 = vadd.f32 %v1976, %v2014
        %v2031 = vadd.f32 %v1977, %v2015
        %v2032 = vadd.f32 %v1978, %v2016
        %v2033 = vadd.f32 %v1979, %v2017
        %v2034 = vadd.f32 %v1980, %v2018
        %v2035 = vadd.f32 %v1981, %v2019
        %s2036 = scalar_lea.vmem [#allocation2], 1376
        %v2037 = vld [vmem:[%s2036] sm:$0xff]
        %v2038 = vld [vmem:[%s2036 + $0x8] sm:$0xff]
        %v2039 = vld [vmem:[%s2036 + $0x10] sm:$0xff]
        %v2040 = vld [vmem:[%s2036 + $0x18] sm:$0xff]
        %v2041 = vld [vmem:[%s2036 + $0x20] sm:$0xff]
        %v2042 = vld [vmem:[%s2036 + $0x28] sm:$0xff]
        %v2043 = vld [vmem:[%s2036 + $0x30] sm:$0xff]
        %v2044 = vld [vmem:[%s2036 + $0x38] sm:$0xff]
        %v2045 = vld [vmem:[%s2036 + $0x40] sm:$0xff]
        %v2046 = vld [vmem:[%s2036 + $0x48] sm:$0xff]
        %v2047 = vld [vmem:[%s2036 + $0x50] sm:$0xff]
        %v2048 = vld [vmem:[%s2036 + $0x58] sm:$0xff]
        %v2049 = vld [vmem:[%s2036 + $0x60] sm:$0xff]
        %v2050 = vld [vmem:[%s2036 + $0x68] sm:$0xff]
        %v2051 = vld [vmem:[%s2036 + $0x70] sm:$0xff]
        %v2052 = vld [vmem:[%s2036 + $0x78] sm:$0xff]
        %s2053 = scalar_lea.vmem [#allocation6], 20
        %v2054 = vld [vmem:[%s2053] sm:$0x1]
        %v2056 = vperm.slane %v2054, 0
        %v2058 = vmul.f32 %v2037, %v2056
        %v2059 = vmul.f32 %v2038, %v2056
        %v2060 = vmul.f32 %v2039, %v2056
        %v2061 = vmul.f32 %v2040, %v2056
        %v2062 = vmul.f32 %v2041, %v2056
        %v2063 = vmul.f32 %v2042, %v2056
        %v2064 = vmul.f32 %v2043, %v2056
        %v2065 = vmul.f32 %v2044, %v2056
        %v2066 = vmul.f32 %v2045, %v2056
        %v2067 = vmul.f32 %v2046, %v2056
        %v2068 = vmul.f32 %v2047, %v2056
        %v2069 = vmul.f32 %v2048, %v2056
        %v2070 = vmul.f32 %v2049, %v2056
        %v2071 = vmul.f32 %v2050, %v2056
        %v2072 = vmul.f32 %v2051, %v2056
        %v2073 = vmul.f32 %v2052, %v2056
        %v2074 = vadd.f32 %v2020, %v2058
        %v2075 = vadd.f32 %v2021, %v2059
        %v2076 = vadd.f32 %v2022, %v2060
        %v2077 = vadd.f32 %v2023, %v2061
        %v2078 = vadd.f32 %v2024, %v2062
        %v2079 = vadd.f32 %v2025, %v2063
        %v2080 = vadd.f32 %v2026, %v2064
        %v2081 = vadd.f32 %v2027, %v2065
        %v2082 = vadd.f32 %v2028, %v2066
        %v2083 = vadd.f32 %v2029, %v2067
        %v2084 = vadd.f32 %v2030, %v2068
        %v2085 = vadd.f32 %v2031, %v2069
        %v2086 = vadd.f32 %v2032, %v2070
        %v2087 = vadd.f32 %v2033, %v2071
        %v2088 = vadd.f32 %v2034, %v2072
        %v2089 = vadd.f32 %v2035, %v2073
        %v2090 = vld [vmem:[%s252] sm:$0xff]
        %v2091 = vld [vmem:[%s252 + $0x8] sm:$0xff]
        %v2092 = vld [vmem:[%s252 + $0x10] sm:$0xff]
        %v2093 = vld [vmem:[%s252 + $0x18] sm:$0xff]
        %v2094 = vld [vmem:[%s252 + $0x20] sm:$0xff]
        %v2095 = vld [vmem:[%s252 + $0x28] sm:$0xff]
        %v2096 = vld [vmem:[%s252 + $0x30] sm:$0xff]
        %v2097 = vld [vmem:[%s252 + $0x38] sm:$0xff]
        %v2098 = vld [vmem:[%s252 + $0x40] sm:$0xff]
        %v2099 = vld [vmem:[%s252 + $0x48] sm:$0xff]
        %v2100 = vld [vmem:[%s252 + $0x50] sm:$0xff]
        %v2101 = vld [vmem:[%s252 + $0x58] sm:$0xff]
        %v2102 = vld [vmem:[%s252 + $0x60] sm:$0xff]
        %v2103 = vld [vmem:[%s252 + $0x68] sm:$0xff]
        %v2104 = vld [vmem:[%s252 + $0x70] sm:$0xff]
        %v2105 = vld [vmem:[%s252 + $0x78] sm:$0xff]
        %s2106 = scalar_lea.vmem [#allocation6], 21
        %v2107 = vld [vmem:[%s2106] sm:$0x1]
        %v2109 = vperm.slane %v2107, 0
        %v2111 = vmul.f32 %v2090, %v2109
        %v2112 = vmul.f32 %v2091, %v2109
        %v2113 = vmul.f32 %v2092, %v2109
        %v2114 = vmul.f32 %v2093, %v2109
        %v2115 = vmul.f32 %v2094, %v2109
        %v2116 = vmul.f32 %v2095, %v2109
        %v2117 = vmul.f32 %v2096, %v2109
        %v2118 = vmul.f32 %v2097, %v2109
        %v2119 = vmul.f32 %v2098, %v2109
        %v2120 = vmul.f32 %v2099, %v2109
        %v2121 = vmul.f32 %v2100, %v2109
        %v2122 = vmul.f32 %v2101, %v2109
        %v2123 = vmul.f32 %v2102, %v2109
        %v2124 = vmul.f32 %v2103, %v2109
        %v2125 = vmul.f32 %v2104, %v2109
        %v2126 = vmul.f32 %v2105, %v2109
        %v2127 = vadd.f32 %v2074, %v2111
        %v2128 = vadd.f32 %v2075, %v2112
        %v2129 = vadd.f32 %v2076, %v2113
        %v2130 = vadd.f32 %v2077, %v2114
        %v2131 = vadd.f32 %v2078, %v2115
        %v2132 = vadd.f32 %v2079, %v2116
        %v2133 = vadd.f32 %v2080, %v2117
        %v2134 = vadd.f32 %v2081, %v2118
        %v2135 = vadd.f32 %v2082, %v2119
        %v2136 = vadd.f32 %v2083, %v2120
        %v2137 = vadd.f32 %v2084, %v2121
        %v2138 = vadd.f32 %v2085, %v2122
        %v2139 = vadd.f32 %v2086, %v2123
        %v2140 = vadd.f32 %v2087, %v2124
        %v2141 = vadd.f32 %v2088, %v2125
        %v2142 = vadd.f32 %v2089, %v2126
        %v2143 = vld [vmem:[%s284] sm:$0xff]
        %v2144 = vld [vmem:[%s284 + $0x8] sm:$0xff]
        %v2145 = vld [vmem:[%s284 + $0x10] sm:$0xff]
        %v2146 = vld [vmem:[%s284 + $0x18] sm:$0xff]
        %v2147 = vld [vmem:[%s284 + $0x20] sm:$0xff]
        %v2148 = vld [vmem:[%s284 + $0x28] sm:$0xff]
        %v2149 = vld [vmem:[%s284 + $0x30] sm:$0xff]
        %v2150 = vld [vmem:[%s284 + $0x38] sm:$0xff]
        %v2151 = vld [vmem:[%s284 + $0x40] sm:$0xff]
        %v2152 = vld [vmem:[%s284 + $0x48] sm:$0xff]
        %v2153 = vld [vmem:[%s284 + $0x50] sm:$0xff]
        %v2154 = vld [vmem:[%s284 + $0x58] sm:$0xff]
        %v2155 = vld [vmem:[%s284 + $0x60] sm:$0xff]
        %v2156 = vld [vmem:[%s284 + $0x68] sm:$0xff]
        %v2157 = vld [vmem:[%s284 + $0x70] sm:$0xff]
        %v2158 = vld [vmem:[%s284 + $0x78] sm:$0xff]
        %s2159 = scalar_lea.vmem [#allocation6], 22
        %v2160 = vld [vmem:[%s2159] sm:$0x1]
        %v2162 = vperm.slane %v2160, 0
        %v2164 = vmul.f32 %v2143, %v2162
        %v2165 = vmul.f32 %v2144, %v2162
        %v2166 = vmul.f32 %v2145, %v2162
        %v2167 = vmul.f32 %v2146, %v2162
        %v2168 = vmul.f32 %v2147, %v2162
        %v2169 = vmul.f32 %v2148, %v2162
        %v2170 = vmul.f32 %v2149, %v2162
        %v2171 = vmul.f32 %v2150, %v2162
        %v2172 = vmul.f32 %v2151, %v2162
        %v2173 = vmul.f32 %v2152, %v2162
        %v2174 = vmul.f32 %v2153, %v2162
        %v2175 = vmul.f32 %v2154, %v2162
        %v2176 = vmul.f32 %v2155, %v2162
        %v2177 = vmul.f32 %v2156, %v2162
        %v2178 = vmul.f32 %v2157, %v2162
        %v2179 = vmul.f32 %v2158, %v2162
        %v2180 = vadd.f32 %v2127, %v2164
        %v2181 = vadd.f32 %v2128, %v2165
        %v2182 = vadd.f32 %v2129, %v2166
        %v2183 = vadd.f32 %v2130, %v2167
        %v2184 = vadd.f32 %v2131, %v2168
        %v2185 = vadd.f32 %v2132, %v2169
        %v2186 = vadd.f32 %v2133, %v2170
        %v2187 = vadd.f32 %v2134, %v2171
        %v2188 = vadd.f32 %v2135, %v2172
        %v2189 = vadd.f32 %v2136, %v2173
        %v2190 = vadd.f32 %v2137, %v2174
        %v2191 = vadd.f32 %v2138, %v2175
        %v2192 = vadd.f32 %v2139, %v2176
        %v2193 = vadd.f32 %v2140, %v2177
        %v2194 = vadd.f32 %v2141, %v2178
        %v2195 = vadd.f32 %v2142, %v2179
        %v2196 = vld [vmem:[%s316] sm:$0xff]
        %v2197 = vld [vmem:[%s316 + $0x8] sm:$0xff]
        %v2198 = vld [vmem:[%s316 + $0x10] sm:$0xff]
        %v2199 = vld [vmem:[%s316 + $0x18] sm:$0xff]
        %v2200 = vld [vmem:[%s316 + $0x20] sm:$0xff]
        %v2201 = vld [vmem:[%s316 + $0x28] sm:$0xff]
        %v2202 = vld [vmem:[%s316 + $0x30] sm:$0xff]
        %v2203 = vld [vmem:[%s316 + $0x38] sm:$0xff]
        %v2204 = vld [vmem:[%s316 + $0x40] sm:$0xff]
        %v2205 = vld [vmem:[%s316 + $0x48] sm:$0xff]
        %v2206 = vld [vmem:[%s316 + $0x50] sm:$0xff]
        %v2207 = vld [vmem:[%s316 + $0x58] sm:$0xff]
        %v2208 = vld [vmem:[%s316 + $0x60] sm:$0xff]
        %v2209 = vld [vmem:[%s316 + $0x68] sm:$0xff]
        %v2210 = vld [vmem:[%s316 + $0x70] sm:$0xff]
        %v2211 = vld [vmem:[%s316 + $0x78] sm:$0xff]
        %s2212 = scalar_lea.vmem [#allocation6], 23
        %v2213 = vld [vmem:[%s2212] sm:$0x1]
        %v2215 = vperm.slane %v2213, 0
        %v2217 = vmul.f32 %v2196, %v2215
        %v2218 = vmul.f32 %v2197, %v2215
        %v2219 = vmul.f32 %v2198, %v2215
        %v2220 = vmul.f32 %v2199, %v2215
        %v2221 = vmul.f32 %v2200, %v2215
        %v2222 = vmul.f32 %v2201, %v2215
        %v2223 = vmul.f32 %v2202, %v2215
        %v2224 = vmul.f32 %v2203, %v2215
        %v2225 = vmul.f32 %v2204, %v2215
        %v2226 = vmul.f32 %v2205, %v2215
        %v2227 = vmul.f32 %v2206, %v2215
        %v2228 = vmul.f32 %v2207, %v2215
        %v2229 = vmul.f32 %v2208, %v2215
        %v2230 = vmul.f32 %v2209, %v2215
        %v2231 = vmul.f32 %v2210, %v2215
        %v2232 = vmul.f32 %v2211, %v2215
        %v2233 = vadd.f32 %v2180, %v2217
        %v2234 = vadd.f32 %v2181, %v2218
        %v2235 = vadd.f32 %v2182, %v2219
        %v2236 = vadd.f32 %v2183, %v2220
        %v2237 = vadd.f32 %v2184, %v2221
        %v2238 = vadd.f32 %v2185, %v2222
        %v2239 = vadd.f32 %v2186, %v2223
        %v2240 = vadd.f32 %v2187, %v2224
        %v2241 = vadd.f32 %v2188, %v2225
        %v2242 = vadd.f32 %v2189, %v2226
        %v2243 = vadd.f32 %v2190, %v2227
        %v2244 = vadd.f32 %v2191, %v2228
        %v2245 = vadd.f32 %v2192, %v2229
        %v2246 = vadd.f32 %v2193, %v2230
        %v2247 = vadd.f32 %v2194, %v2231
        %v2248 = vadd.f32 %v2195, %v2232
        %v2249 = vld [vmem:[%s327] sm:$0xff]
        %v2250 = vld [vmem:[%s327 + $0x8] sm:$0xff]
        %v2251 = vld [vmem:[%s327 + $0x10] sm:$0xff]
        %v2252 = vld [vmem:[%s327 + $0x18] sm:$0xff]
        %v2253 = vld [vmem:[%s327 + $0x20] sm:$0xff]
        %v2254 = vld [vmem:[%s327 + $0x28] sm:$0xff]
        %v2255 = vld [vmem:[%s327 + $0x30] sm:$0xff]
        %v2256 = vld [vmem:[%s327 + $0x38] sm:$0xff]
        %v2257 = vld [vmem:[%s327 + $0x40] sm:$0xff]
        %v2258 = vld [vmem:[%s327 + $0x48] sm:$0xff]
        %v2259 = vld [vmem:[%s327 + $0x50] sm:$0xff]
        %v2260 = vld [vmem:[%s327 + $0x58] sm:$0xff]
        %v2261 = vld [vmem:[%s327 + $0x60] sm:$0xff]
        %v2262 = vld [vmem:[%s327 + $0x68] sm:$0xff]
        %v2263 = vld [vmem:[%s327 + $0x70] sm:$0xff]
        %v2264 = vld [vmem:[%s327 + $0x78] sm:$0xff]
        %s2265 = scalar_lea.vmem [#allocation6], 24
        %v2266 = vld [vmem:[%s2265] sm:$0x1]
        %v2268 = vperm.slane %v2266, 0
        %v2270 = vmul.f32 %v2249, %v2268
        %v2271 = vmul.f32 %v2250, %v2268
        %v2272 = vmul.f32 %v2251, %v2268
        %v2273 = vmul.f32 %v2252, %v2268
        %v2274 = vmul.f32 %v2253, %v2268
        %v2275 = vmul.f32 %v2254, %v2268
        %v2276 = vmul.f32 %v2255, %v2268
        %v2277 = vmul.f32 %v2256, %v2268
        %v2278 = vmul.f32 %v2257, %v2268
        %v2279 = vmul.f32 %v2258, %v2268
        %v2280 = vmul.f32 %v2259, %v2268
        %v2281 = vmul.f32 %v2260, %v2268
        %v2282 = vmul.f32 %v2261, %v2268
        %v2283 = vmul.f32 %v2262, %v2268
        %v2284 = vmul.f32 %v2263, %v2268
        %v2285 = vmul.f32 %v2264, %v2268
        %v2286 = vadd.f32 %v2233, %v2270
        %v2287 = vadd.f32 %v2234, %v2271
        %v2288 = vadd.f32 %v2235, %v2272
        %v2289 = vadd.f32 %v2236, %v2273
        %v2290 = vadd.f32 %v2237, %v2274
        %v2291 = vadd.f32 %v2238, %v2275
        %v2292 = vadd.f32 %v2239, %v2276
        %v2293 = vadd.f32 %v2240, %v2277
        %v2294 = vadd.f32 %v2241, %v2278
        %v2295 = vadd.f32 %v2242, %v2279
        %v2296 = vadd.f32 %v2243, %v2280
        %v2297 = vadd.f32 %v2244, %v2281
        %v2298 = vadd.f32 %v2245, %v2282
        %v2299 = vadd.f32 %v2246, %v2283
        %v2300 = vadd.f32 %v2247, %v2284
        %v2301 = vadd.f32 %v2248, %v2285
        %v2302 = vld [vmem:[%s359] sm:$0xff]
        %v2303 = vld [vmem:[%s359 + $0x8] sm:$0xff]
        %v2304 = vld [vmem:[%s359 + $0x10] sm:$0xff]
        %v2305 = vld [vmem:[%s359 + $0x18] sm:$0xff]
        %v2306 = vld [vmem:[%s359 + $0x20] sm:$0xff]
        %v2307 = vld [vmem:[%s359 + $0x28] sm:$0xff]
        %v2308 = vld [vmem:[%s359 + $0x30] sm:$0xff]
        %v2309 = vld [vmem:[%s359 + $0x38] sm:$0xff]
        %v2310 = vld [vmem:[%s359 + $0x40] sm:$0xff]
        %v2311 = vld [vmem:[%s359 + $0x48] sm:$0xff]
        %v2312 = vld [vmem:[%s359 + $0x50] sm:$0xff]
        %v2313 = vld [vmem:[%s359 + $0x58] sm:$0xff]
        %v2314 = vld [vmem:[%s359 + $0x60] sm:$0xff]
        %v2315 = vld [vmem:[%s359 + $0x68] sm:$0xff]
        %v2316 = vld [vmem:[%s359 + $0x70] sm:$0xff]
        %v2317 = vld [vmem:[%s359 + $0x78] sm:$0xff]
        %s2318 = scalar_lea.vmem [#allocation6], 25
        %v2319 = vld [vmem:[%s2318] sm:$0x1]
        %v2321 = vperm.slane %v2319, 0
        %v2323 = vmul.f32 %v2302, %v2321
        %v2324 = vmul.f32 %v2303, %v2321
        %v2325 = vmul.f32 %v2304, %v2321
        %v2326 = vmul.f32 %v2305, %v2321
        %v2327 = vmul.f32 %v2306, %v2321
        %v2328 = vmul.f32 %v2307, %v2321
        %v2329 = vmul.f32 %v2308, %v2321
        %v2330 = vmul.f32 %v2309, %v2321
        %v2331 = vmul.f32 %v2310, %v2321
        %v2332 = vmul.f32 %v2311, %v2321
        %v2333 = vmul.f32 %v2312, %v2321
        %v2334 = vmul.f32 %v2313, %v2321
        %v2335 = vmul.f32 %v2314, %v2321
        %v2336 = vmul.f32 %v2315, %v2321
        %v2337 = vmul.f32 %v2316, %v2321
        %v2338 = vmul.f32 %v2317, %v2321
        %v2339 = vadd.f32 %v2286, %v2323
        %v2340 = vadd.f32 %v2287, %v2324
        %v2341 = vadd.f32 %v2288, %v2325
        %v2342 = vadd.f32 %v2289, %v2326
        %v2343 = vadd.f32 %v2290, %v2327
        %v2344 = vadd.f32 %v2291, %v2328
        %v2345 = vadd.f32 %v2292, %v2329
        %v2346 = vadd.f32 %v2293, %v2330
        %v2347 = vadd.f32 %v2294, %v2331
        %v2348 = vadd.f32 %v2295, %v2332
        %v2349 = vadd.f32 %v2296, %v2333
        %v2350 = vadd.f32 %v2297, %v2334
        %v2351 = vadd.f32 %v2298, %v2335
        %v2352 = vadd.f32 %v2299, %v2336
        %v2353 = vadd.f32 %v2300, %v2337
        %v2354 = vadd.f32 %v2301, %v2338
        %v2355 = vld [vmem:[%s391] sm:$0xff]
        %v2356 = vld [vmem:[%s391 + $0x8] sm:$0xff]
        %v2357 = vld [vmem:[%s391 + $0x10] sm:$0xff]
        %v2358 = vld [vmem:[%s391 + $0x18] sm:$0xff]
        %v2359 = vld [vmem:[%s391 + $0x20] sm:$0xff]
        %v2360 = vld [vmem:[%s391 + $0x28] sm:$0xff]
        %v2361 = vld [vmem:[%s391 + $0x30] sm:$0xff]
        %v2362 = vld [vmem:[%s391 + $0x38] sm:$0xff]
        %v2363 = vld [vmem:[%s391 + $0x40] sm:$0xff]
        %v2364 = vld [vmem:[%s391 + $0x48] sm:$0xff]
        %v2365 = vld [vmem:[%s391 + $0x50] sm:$0xff]
        %v2366 = vld [vmem:[%s391 + $0x58] sm:$0xff]
        %v2367 = vld [vmem:[%s391 + $0x60] sm:$0xff]
        %v2368 = vld [vmem:[%s391 + $0x68] sm:$0xff]
        %v2369 = vld [vmem:[%s391 + $0x70] sm:$0xff]
        %v2370 = vld [vmem:[%s391 + $0x78] sm:$0xff]
        %s2371 = scalar_lea.vmem [#allocation6], 26
        %v2372 = vld [vmem:[%s2371] sm:$0x1]
        %v2374 = vperm.slane %v2372, 0
        %v2376 = vmul.f32 %v2355, %v2374
        %v2377 = vmul.f32 %v2356, %v2374
        %v2378 = vmul.f32 %v2357, %v2374
        %v2379 = vmul.f32 %v2358, %v2374
        %v2380 = vmul.f32 %v2359, %v2374
        %v2381 = vmul.f32 %v2360, %v2374
        %v2382 = vmul.f32 %v2361, %v2374
        %v2383 = vmul.f32 %v2362, %v2374
        %v2384 = vmul.f32 %v2363, %v2374
        %v2385 = vmul.f32 %v2364, %v2374
        %v2386 = vmul.f32 %v2365, %v2374
        %v2387 = vmul.f32 %v2366, %v2374
        %v2388 = vmul.f32 %v2367, %v2374
        %v2389 = vmul.f32 %v2368, %v2374
        %v2390 = vmul.f32 %v2369, %v2374
        %v2391 = vmul.f32 %v2370, %v2374
        %v2392 = vadd.f32 %v2339, %v2376
        %v2393 = vadd.f32 %v2340, %v2377
        %v2394 = vadd.f32 %v2341, %v2378
        %v2395 = vadd.f32 %v2342, %v2379
        %v2396 = vadd.f32 %v2343, %v2380
        %v2397 = vadd.f32 %v2344, %v2381
        %v2398 = vadd.f32 %v2345, %v2382
        %v2399 = vadd.f32 %v2346, %v2383
        %v2400 = vadd.f32 %v2347, %v2384
        %v2401 = vadd.f32 %v2348, %v2385
        %v2402 = vadd.f32 %v2349, %v2386
        %v2403 = vadd.f32 %v2350, %v2387
        %v2404 = vadd.f32 %v2351, %v2388
        %v2405 = vadd.f32 %v2352, %v2389
        %v2406 = vadd.f32 %v2353, %v2390
        %v2407 = vadd.f32 %v2354, %v2391
        %v2408 = vld [vmem:[%s423] sm:$0xff]
        %v2409 = vld [vmem:[%s423 + $0x8] sm:$0xff]
        %v2410 = vld [vmem:[%s423 + $0x10] sm:$0xff]
        %v2411 = vld [vmem:[%s423 + $0x18] sm:$0xff]
        %v2412 = vld [vmem:[%s423 + $0x20] sm:$0xff]
        %v2413 = vld [vmem:[%s423 + $0x28] sm:$0xff]
        %v2414 = vld [vmem:[%s423 + $0x30] sm:$0xff]
        %v2415 = vld [vmem:[%s423 + $0x38] sm:$0xff]
        %v2416 = vld [vmem:[%s423 + $0x40] sm:$0xff]
        %v2417 = vld [vmem:[%s423 + $0x48] sm:$0xff]
        %v2418 = vld [vmem:[%s423 + $0x50] sm:$0xff]
        %v2419 = vld [vmem:[%s423 + $0x58] sm:$0xff]
        %v2420 = vld [vmem:[%s423 + $0x60] sm:$0xff]
        %v2421 = vld [vmem:[%s423 + $0x68] sm:$0xff]
        %v2422 = vld [vmem:[%s423 + $0x70] sm:$0xff]
        %v2423 = vld [vmem:[%s423 + $0x78] sm:$0xff]
        %s2424 = scalar_lea.vmem [#allocation6], 27
        %v2425 = vld [vmem:[%s2424] sm:$0x1]
        %v2427 = vperm.slane %v2425, 0
        %v2429 = vmul.f32 %v2408, %v2427
        %v2430 = vmul.f32 %v2409, %v2427
        %v2431 = vmul.f32 %v2410, %v2427
        %v2432 = vmul.f32 %v2411, %v2427
        %v2433 = vmul.f32 %v2412, %v2427
        %v2434 = vmul.f32 %v2413, %v2427
        %v2435 = vmul.f32 %v2414, %v2427
        %v2436 = vmul.f32 %v2415, %v2427
        %v2437 = vmul.f32 %v2416, %v2427
        %v2438 = vmul.f32 %v2417, %v2427
        %v2439 = vmul.f32 %v2418, %v2427
        %v2440 = vmul.f32 %v2419, %v2427
        %v2441 = vmul.f32 %v2420, %v2427
        %v2442 = vmul.f32 %v2421, %v2427
        %v2443 = vmul.f32 %v2422, %v2427
        %v2444 = vmul.f32 %v2423, %v2427
        %v2445 = vadd.f32 %v2392, %v2429
        %v2446 = vadd.f32 %v2393, %v2430
        %v2447 = vadd.f32 %v2394, %v2431
        %v2448 = vadd.f32 %v2395, %v2432
        %v2449 = vadd.f32 %v2396, %v2433
        %v2450 = vadd.f32 %v2397, %v2434
        %v2451 = vadd.f32 %v2398, %v2435
        %v2452 = vadd.f32 %v2399, %v2436
        %v2453 = vadd.f32 %v2400, %v2437
        %v2454 = vadd.f32 %v2401, %v2438
        %v2455 = vadd.f32 %v2402, %v2439
        %v2456 = vadd.f32 %v2403, %v2440
        %v2457 = vadd.f32 %v2404, %v2441
        %v2458 = vadd.f32 %v2405, %v2442
        %v2459 = vadd.f32 %v2406, %v2443
        %v2460 = vadd.f32 %v2407, %v2444
        %s2461 = scalar_lea.vmem [#allocation2], 64
        %v2462 = vld [vmem:[%s2461] sm:$0xff]
        %v2463 = vld [vmem:[%s2461 + $0x8] sm:$0xff]
        %v2464 = vld [vmem:[%s2461 + $0x10] sm:$0xff]
        %v2465 = vld [vmem:[%s2461 + $0x18] sm:$0xff]
        %v2466 = vld [vmem:[%s2461 + $0x20] sm:$0xff]
        %v2467 = vld [vmem:[%s2461 + $0x28] sm:$0xff]
        %v2468 = vld [vmem:[%s2461 + $0x30] sm:$0xff]
        %v2469 = vld [vmem:[%s2461 + $0x38] sm:$0xff]
        %v2470 = vld [vmem:[%s2461 + $0x40] sm:$0xff]
        %v2471 = vld [vmem:[%s2461 + $0x48] sm:$0xff]
        %v2472 = vld [vmem:[%s2461 + $0x50] sm:$0xff]
        %v2473 = vld [vmem:[%s2461 + $0x58] sm:$0xff]
        %v2474 = vld [vmem:[%s2461 + $0x60] sm:$0xff]
        %v2475 = vld [vmem:[%s2461 + $0x68] sm:$0xff]
        %v2476 = vld [vmem:[%s2461 + $0x70] sm:$0xff]
        %v2477 = vld [vmem:[%s2461 + $0x78] sm:$0xff]
        %s2478 = scalar_lea.vmem [#allocation6], 28
        %v2479 = vld [vmem:[%s2478] sm:$0x1]
        %v2481 = vperm.slane %v2479, 0
        %v2483 = vmul.f32 %v2462, %v2481
        %v2484 = vmul.f32 %v2463, %v2481
        %v2485 = vmul.f32 %v2464, %v2481
        %v2486 = vmul.f32 %v2465, %v2481
        %v2487 = vmul.f32 %v2466, %v2481
        %v2488 = vmul.f32 %v2467, %v2481
        %v2489 = vmul.f32 %v2468, %v2481
        %v2490 = vmul.f32 %v2469, %v2481
        %v2491 = vmul.f32 %v2470, %v2481
        %v2492 = vmul.f32 %v2471, %v2481
        %v2493 = vmul.f32 %v2472, %v2481
        %v2494 = vmul.f32 %v2473, %v2481
        %v2495 = vmul.f32 %v2474, %v2481
        %v2496 = vmul.f32 %v2475, %v2481
        %v2497 = vmul.f32 %v2476, %v2481
        %v2498 = vmul.f32 %v2477, %v2481
        %v2499 = vadd.f32 %v2445, %v2483
        %v2500 = vadd.f32 %v2446, %v2484
        %v2501 = vadd.f32 %v2447, %v2485
        %v2502 = vadd.f32 %v2448, %v2486
        %v2503 = vadd.f32 %v2449, %v2487
        %v2504 = vadd.f32 %v2450, %v2488
        %v2505 = vadd.f32 %v2451, %v2489
        %v2506 = vadd.f32 %v2452, %v2490
        %v2507 = vadd.f32 %v2453, %v2491
        %v2508 = vadd.f32 %v2454, %v2492
        %v2509 = vadd.f32 %v2455, %v2493
        %v2510 = vadd.f32 %v2456, %v2494
        %v2511 = vadd.f32 %v2457, %v2495
        %v2512 = vadd.f32 %v2458, %v2496
        %v2513 = vadd.f32 %v2459, %v2497
        %v2514 = vadd.f32 %v2460, %v2498
        %s2515 = scalar_lea.vmem [#allocation2], 288
        %v2516 = vld [vmem:[%s2515] sm:$0xff]
        %v2517 = vld [vmem:[%s2515 + $0x8] sm:$0xff]
        %v2518 = vld [vmem:[%s2515 + $0x10] sm:$0xff]
        %v2519 = vld [vmem:[%s2515 + $0x18] sm:$0xff]
        %v2520 = vld [vmem:[%s2515 + $0x20] sm:$0xff]
        %v2521 = vld [vmem:[%s2515 + $0x28] sm:$0xff]
        %v2522 = vld [vmem:[%s2515 + $0x30] sm:$0xff]
        %v2523 = vld [vmem:[%s2515 + $0x38] sm:$0xff]
        %v2524 = vld [vmem:[%s2515 + $0x40] sm:$0xff]
        %v2525 = vld [vmem:[%s2515 + $0x48] sm:$0xff]
        %v2526 = vld [vmem:[%s2515 + $0x50] sm:$0xff]
        %v2527 = vld [vmem:[%s2515 + $0x58] sm:$0xff]
        %v2528 = vld [vmem:[%s2515 + $0x60] sm:$0xff]
        %v2529 = vld [vmem:[%s2515 + $0x68] sm:$0xff]
        %v2530 = vld [vmem:[%s2515 + $0x70] sm:$0xff]
        %v2531 = vld [vmem:[%s2515 + $0x78] sm:$0xff]
        %s2532 = scalar_lea.vmem [#allocation6], 29
        %v2533 = vld [vmem:[%s2532] sm:$0x1]
        %v2535 = vperm.slane %v2533, 0
        %v2537 = vmul.f32 %v2516, %v2535
        %v2538 = vmul.f32 %v2517, %v2535
        %v2539 = vmul.f32 %v2518, %v2535
        %v2540 = vmul.f32 %v2519, %v2535
        %v2541 = vmul.f32 %v2520, %v2535
        %v2542 = vmul.f32 %v2521, %v2535
        %v2543 = vmul.f32 %v2522, %v2535
        %v2544 = vmul.f32 %v2523, %v2535
        %v2545 = vmul.f32 %v2524, %v2535
        %v2546 = vmul.f32 %v2525, %v2535
        %v2547 = vmul.f32 %v2526, %v2535
        %v2548 = vmul.f32 %v2527, %v2535
        %v2549 = vmul.f32 %v2528, %v2535
        %v2550 = vmul.f32 %v2529, %v2535
        %v2551 = vmul.f32 %v2530, %v2535
        %v2552 = vmul.f32 %v2531, %v2535
        %v2553 = vadd.f32 %v2499, %v2537
        %v2554 = vadd.f32 %v2500, %v2538
        %v2555 = vadd.f32 %v2501, %v2539
        %v2556 = vadd.f32 %v2502, %v2540
        %v2557 = vadd.f32 %v2503, %v2541
        %v2558 = vadd.f32 %v2504, %v2542
        %v2559 = vadd.f32 %v2505, %v2543
        %v2560 = vadd.f32 %v2506, %v2544
        %v2561 = vadd.f32 %v2507, %v2545
        %v2562 = vadd.f32 %v2508, %v2546
        %v2563 = vadd.f32 %v2509, %v2547
        %v2564 = vadd.f32 %v2510, %v2548
        %v2565 = vadd.f32 %v2511, %v2549
        %v2566 = vadd.f32 %v2512, %v2550
        %v2567 = vadd.f32 %v2513, %v2551
        %v2568 = vadd.f32 %v2514, %v2552
        %s2569 = scalar_lea.vmem [#allocation2], 512
        %v2570 = vld [vmem:[%s2569] sm:$0xff]
        %v2571 = vld [vmem:[%s2569 + $0x8] sm:$0xff]
        %v2572 = vld [vmem:[%s2569 + $0x10] sm:$0xff]
        %v2573 = vld [vmem:[%s2569 + $0x18] sm:$0xff]
        %v2574 = vld [vmem:[%s2569 + $0x20] sm:$0xff]
        %v2575 = vld [vmem:[%s2569 + $0x28] sm:$0xff]
        %v2576 = vld [vmem:[%s2569 + $0x30] sm:$0xff]
        %v2577 = vld [vmem:[%s2569 + $0x38] sm:$0xff]
        %v2578 = vld [vmem:[%s2569 + $0x40] sm:$0xff]
        %v2579 = vld [vmem:[%s2569 + $0x48] sm:$0xff]
        %v2580 = vld [vmem:[%s2569 + $0x50] sm:$0xff]
        %v2581 = vld [vmem:[%s2569 + $0x58] sm:$0xff]
        %v2582 = vld [vmem:[%s2569 + $0x60] sm:$0xff]
        %v2583 = vld [vmem:[%s2569 + $0x68] sm:$0xff]
        %v2584 = vld [vmem:[%s2569 + $0x70] sm:$0xff]
        %v2585 = vld [vmem:[%s2569 + $0x78] sm:$0xff]
        %s2586 = scalar_lea.vmem [#allocation6], 30
        %v2587 = vld [vmem:[%s2586] sm:$0x1]
        %v2589 = vperm.slane %v2587, 0
        %v2591 = vmul.f32 %v2570, %v2589
        %v2592 = vmul.f32 %v2571, %v2589
        %v2593 = vmul.f32 %v2572, %v2589
        %v2594 = vmul.f32 %v2573, %v2589
        %v2595 = vmul.f32 %v2574, %v2589
        %v2596 = vmul.f32 %v2575, %v2589
        %v2597 = vmul.f32 %v2576, %v2589
        %v2598 = vmul.f32 %v2577, %v2589
        %v2599 = vmul.f32 %v2578, %v2589
        %v2600 = vmul.f32 %v2579, %v2589
        %v2601 = vmul.f32 %v2580, %v2589
        %v2602 = vmul.f32 %v2581, %v2589
        %v2603 = vmul.f32 %v2582, %v2589
        %v2604 = vmul.f32 %v2583, %v2589
        %v2605 = vmul.f32 %v2584, %v2589
        %v2606 = vmul.f32 %v2585, %v2589
        %v2607 = vadd.f32 %v2553, %v2591
        %v2608 = vadd.f32 %v2554, %v2592
        %v2609 = vadd.f32 %v2555, %v2593
        %v2610 = vadd.f32 %v2556, %v2594
        %v2611 = vadd.f32 %v2557, %v2595
        %v2612 = vadd.f32 %v2558, %v2596
        %v2613 = vadd.f32 %v2559, %v2597
        %v2614 = vadd.f32 %v2560, %v2598
        %v2615 = vadd.f32 %v2561, %v2599
        %v2616 = vadd.f32 %v2562, %v2600
        %v2617 = vadd.f32 %v2563, %v2601
        %v2618 = vadd.f32 %v2564, %v2602
        %v2619 = vadd.f32 %v2565, %v2603
        %v2620 = vadd.f32 %v2566, %v2604
        %v2621 = vadd.f32 %v2567, %v2605
        %v2622 = vadd.f32 %v2568, %v2606
        %s2623 = scalar_lea.vmem [#allocation2], 736
        %v2624 = vld [vmem:[%s2623] sm:$0xff]
        %v2625 = vld [vmem:[%s2623 + $0x8] sm:$0xff]
        %v2626 = vld [vmem:[%s2623 + $0x10] sm:$0xff]
        %v2627 = vld [vmem:[%s2623 + $0x18] sm:$0xff]
        %v2628 = vld [vmem:[%s2623 + $0x20] sm:$0xff]
        %v2629 = vld [vmem:[%s2623 + $0x28] sm:$0xff]
        %v2630 = vld [vmem:[%s2623 + $0x30] sm:$0xff]
        %v2631 = vld [vmem:[%s2623 + $0x38] sm:$0xff]
        %v2632 = vld [vmem:[%s2623 + $0x40] sm:$0xff]
        %v2633 = vld [vmem:[%s2623 + $0x48] sm:$0xff]
        %v2634 = vld [vmem:[%s2623 + $0x50] sm:$0xff]
        %v2635 = vld [vmem:[%s2623 + $0x58] sm:$0xff]
        %v2636 = vld [vmem:[%s2623 + $0x60] sm:$0xff]
        %v2637 = vld [vmem:[%s2623 + $0x68] sm:$0xff]
        %v2638 = vld [vmem:[%s2623 + $0x70] sm:$0xff]
        %v2639 = vld [vmem:[%s2623 + $0x78] sm:$0xff]
        %s2640 = scalar_lea.vmem [#allocation6], 31
        %v2641 = vld [vmem:[%s2640] sm:$0x1]
        %v2643 = vperm.slane %v2641, 0
        %v2645 = vmul.f32 %v2624, %v2643
        %v2646 = vmul.f32 %v2625, %v2643
        %v2647 = vmul.f32 %v2626, %v2643
        %v2648 = vmul.f32 %v2627, %v2643
        %v2649 = vmul.f32 %v2628, %v2643
        %v2650 = vmul.f32 %v2629, %v2643
        %v2651 = vmul.f32 %v2630, %v2643
        %v2652 = vmul.f32 %v2631, %v2643
        %v2653 = vmul.f32 %v2632, %v2643
        %v2654 = vmul.f32 %v2633, %v2643
        %v2655 = vmul.f32 %v2634, %v2643
        %v2656 = vmul.f32 %v2635, %v2643
        %v2657 = vmul.f32 %v2636, %v2643
        %v2658 = vmul.f32 %v2637, %v2643
        %v2659 = vmul.f32 %v2638, %v2643
        %v2660 = vmul.f32 %v2639, %v2643
        %v2661 = vadd.f32 %v2607, %v2645
        %v2662 = vadd.f32 %v2608, %v2646
        %v2663 = vadd.f32 %v2609, %v2647
        %v2664 = vadd.f32 %v2610, %v2648
        %v2665 = vadd.f32 %v2611, %v2649
        %v2666 = vadd.f32 %v2612, %v2650
        %v2667 = vadd.f32 %v2613, %v2651
        %v2668 = vadd.f32 %v2614, %v2652
        %v2669 = vadd.f32 %v2615, %v2653
        %v2670 = vadd.f32 %v2616, %v2654
        %v2671 = vadd.f32 %v2617, %v2655
        %v2672 = vadd.f32 %v2618, %v2656
        %v2673 = vadd.f32 %v2619, %v2657
        %v2674 = vadd.f32 %v2620, %v2658
        %v2675 = vadd.f32 %v2621, %v2659
        %v2676 = vadd.f32 %v2622, %v2660
        %s2677 = scalar_lea.vmem [#allocation2], 960
        %v2678 = vld [vmem:[%s2677] sm:$0xff]
        %v2679 = vld [vmem:[%s2677 + $0x8] sm:$0xff]
        %v2680 = vld [vmem:[%s2677 + $0x10] sm:$0xff]
        %v2681 = vld [vmem:[%s2677 + $0x18] sm:$0xff]
        %v2682 = vld [vmem:[%s2677 + $0x20] sm:$0xff]
        %v2683 = vld [vmem:[%s2677 + $0x28] sm:$0xff]
        %v2684 = vld [vmem:[%s2677 + $0x30] sm:$0xff]
        %v2685 = vld [vmem:[%s2677 + $0x38] sm:$0xff]
        %v2686 = vld [vmem:[%s2677 + $0x40] sm:$0xff]
        %v2687 = vld [vmem:[%s2677 + $0x48] sm:$0xff]
        %v2688 = vld [vmem:[%s2677 + $0x50] sm:$0xff]
        %v2689 = vld [vmem:[%s2677 + $0x58] sm:$0xff]
        %v2690 = vld [vmem:[%s2677 + $0x60] sm:$0xff]
        %v2691 = vld [vmem:[%s2677 + $0x68] sm:$0xff]
        %v2692 = vld [vmem:[%s2677 + $0x70] sm:$0xff]
        %v2693 = vld [vmem:[%s2677 + $0x78] sm:$0xff]
        %s2694 = scalar_lea.vmem [#allocation6], 32
        %v2695 = vld [vmem:[%s2694] sm:$0x1]
        %v2697 = vperm.slane %v2695, 0
        %v2699 = vmul.f32 %v2678, %v2697
        %v2700 = vmul.f32 %v2679, %v2697
        %v2701 = vmul.f32 %v2680, %v2697
        %v2702 = vmul.f32 %v2681, %v2697
        %v2703 = vmul.f32 %v2682, %v2697
        %v2704 = vmul.f32 %v2683, %v2697
        %v2705 = vmul.f32 %v2684, %v2697
        %v2706 = vmul.f32 %v2685, %v2697
        %v2707 = vmul.f32 %v2686, %v2697
        %v2708 = vmul.f32 %v2687, %v2697
        %v2709 = vmul.f32 %v2688, %v2697
        %v2710 = vmul.f32 %v2689, %v2697
        %v2711 = vmul.f32 %v2690, %v2697
        %v2712 = vmul.f32 %v2691, %v2697
        %v2713 = vmul.f32 %v2692, %v2697
        %v2714 = vmul.f32 %v2693, %v2697
        %v2715 = vadd.f32 %v2661, %v2699
        %v2716 = vadd.f32 %v2662, %v2700
        %v2717 = vadd.f32 %v2663, %v2701
        %v2718 = vadd.f32 %v2664, %v2702
        %v2719 = vadd.f32 %v2665, %v2703
        %v2720 = vadd.f32 %v2666, %v2704
        %v2721 = vadd.f32 %v2667, %v2705
        %v2722 = vadd.f32 %v2668, %v2706
        %v2723 = vadd.f32 %v2669, %v2707
        %v2724 = vadd.f32 %v2670, %v2708
        %v2725 = vadd.f32 %v2671, %v2709
        %v2726 = vadd.f32 %v2672, %v2710
        %v2727 = vadd.f32 %v2673, %v2711
        %v2728 = vadd.f32 %v2674, %v2712
        %v2729 = vadd.f32 %v2675, %v2713
        %v2730 = vadd.f32 %v2676, %v2714
        %s2731 = scalar_lea.vmem [#allocation2], 1184
        %v2732 = vld [vmem:[%s2731] sm:$0xff]
        %v2733 = vld [vmem:[%s2731 + $0x8] sm:$0xff]
        %v2734 = vld [vmem:[%s2731 + $0x10] sm:$0xff]
        %v2735 = vld [vmem:[%s2731 + $0x18] sm:$0xff]
        %v2736 = vld [vmem:[%s2731 + $0x20] sm:$0xff]
        %v2737 = vld [vmem:[%s2731 + $0x28] sm:$0xff]
        %v2738 = vld [vmem:[%s2731 + $0x30] sm:$0xff]
        %v2739 = vld [vmem:[%s2731 + $0x38] sm:$0xff]
        %v2740 = vld [vmem:[%s2731 + $0x40] sm:$0xff]
        %v2741 = vld [vmem:[%s2731 + $0x48] sm:$0xff]
        %v2742 = vld [vmem:[%s2731 + $0x50] sm:$0xff]
        %v2743 = vld [vmem:[%s2731 + $0x58] sm:$0xff]
        %v2744 = vld [vmem:[%s2731 + $0x60] sm:$0xff]
        %v2745 = vld [vmem:[%s2731 + $0x68] sm:$0xff]
        %v2746 = vld [vmem:[%s2731 + $0x70] sm:$0xff]
        %v2747 = vld [vmem:[%s2731 + $0x78] sm:$0xff]
        %s2748 = scalar_lea.vmem [#allocation6], 33
        %v2749 = vld [vmem:[%s2748] sm:$0x1]
        %v2751 = vperm.slane %v2749, 0
        %v2753 = vmul.f32 %v2732, %v2751
        %v2754 = vmul.f32 %v2733, %v2751
        %v2755 = vmul.f32 %v2734, %v2751
        %v2756 = vmul.f32 %v2735, %v2751
        %v2757 = vmul.f32 %v2736, %v2751
        %v2758 = vmul.f32 %v2737, %v2751
        %v2759 = vmul.f32 %v2738, %v2751
        %v2760 = vmul.f32 %v2739, %v2751
        %v2761 = vmul.f32 %v2740, %v2751
        %v2762 = vmul.f32 %v2741, %v2751
        %v2763 = vmul.f32 %v2742, %v2751
        %v2764 = vmul.f32 %v2743, %v2751
        %v2765 = vmul.f32 %v2744, %v2751
        %v2766 = vmul.f32 %v2745, %v2751
        %v2767 = vmul.f32 %v2746, %v2751
        %v2768 = vmul.f32 %v2747, %v2751
        %v2769 = vadd.f32 %v2715, %v2753
        %v2770 = vadd.f32 %v2716, %v2754
        %v2771 = vadd.f32 %v2717, %v2755
        %v2772 = vadd.f32 %v2718, %v2756
        %v2773 = vadd.f32 %v2719, %v2757
        %v2774 = vadd.f32 %v2720, %v2758
        %v2775 = vadd.f32 %v2721, %v2759
        %v2776 = vadd.f32 %v2722, %v2760
        %v2777 = vadd.f32 %v2723, %v2761
        %v2778 = vadd.f32 %v2724, %v2762
        %v2779 = vadd.f32 %v2725, %v2763
        %v2780 = vadd.f32 %v2726, %v2764
        %v2781 = vadd.f32 %v2727, %v2765
        %v2782 = vadd.f32 %v2728, %v2766
        %v2783 = vadd.f32 %v2729, %v2767
        %v2784 = vadd.f32 %v2730, %v2768
        %s2785 = scalar_lea.vmem [#allocation2], 1408
        %v2786 = vld [vmem:[%s2785] sm:$0xff]
        %v2787 = vld [vmem:[%s2785 + $0x8] sm:$0xff]
        %v2788 = vld [vmem:[%s2785 + $0x10] sm:$0xff]
        %v2789 = vld [vmem:[%s2785 + $0x18] sm:$0xff]
        %v2790 = vld [vmem:[%s2785 + $0x20] sm:$0xff]
        %v2791 = vld [vmem:[%s2785 + $0x28] sm:$0xff]
        %v2792 = vld [vmem:[%s2785 + $0x30] sm:$0xff]
        %v2793 = vld [vmem:[%s2785 + $0x38] sm:$0xff]
        %v2794 = vld [vmem:[%s2785 + $0x40] sm:$0xff]
        %v2795 = vld [vmem:[%s2785 + $0x48] sm:$0xff]
        %v2796 = vld [vmem:[%s2785 + $0x50] sm:$0xff]
        %v2797 = vld [vmem:[%s2785 + $0x58] sm:$0xff]
        %v2798 = vld [vmem:[%s2785 + $0x60] sm:$0xff]
        %v2799 = vld [vmem:[%s2785 + $0x68] sm:$0xff]
        %v2800 = vld [vmem:[%s2785 + $0x70] sm:$0xff]
        %v2801 = vld [vmem:[%s2785 + $0x78] sm:$0xff]
        %s2802 = scalar_lea.vmem [#allocation6], 34
        %v2803 = vld [vmem:[%s2802] sm:$0x1]
        %v2805 = vperm.slane %v2803, 0
        %v2807 = vmul.f32 %v2786, %v2805
        %v2808 = vmul.f32 %v2787, %v2805
        %v2809 = vmul.f32 %v2788, %v2805
        %v2810 = vmul.f32 %v2789, %v2805
        %v2811 = vmul.f32 %v2790, %v2805
        %v2812 = vmul.f32 %v2791, %v2805
        %v2813 = vmul.f32 %v2792, %v2805
        %v2814 = vmul.f32 %v2793, %v2805
        %v2815 = vmul.f32 %v2794, %v2805
        %v2816 = vmul.f32 %v2795, %v2805
        %v2817 = vmul.f32 %v2796, %v2805
        %v2818 = vmul.f32 %v2797, %v2805
        %v2819 = vmul.f32 %v2798, %v2805
        %v2820 = vmul.f32 %v2799, %v2805
        %v2821 = vmul.f32 %v2800, %v2805
        %v2822 = vmul.f32 %v2801, %v2805
        %v2823 = vadd.f32 %v2769, %v2807
        %v2824 = vadd.f32 %v2770, %v2808
        %v2825 = vadd.f32 %v2771, %v2809
        %v2826 = vadd.f32 %v2772, %v2810
        %v2827 = vadd.f32 %v2773, %v2811
        %v2828 = vadd.f32 %v2774, %v2812
        %v2829 = vadd.f32 %v2775, %v2813
        %v2830 = vadd.f32 %v2776, %v2814
        %v2831 = vadd.f32 %v2777, %v2815
        %v2832 = vadd.f32 %v2778, %v2816
        %v2833 = vadd.f32 %v2779, %v2817
        %v2834 = vadd.f32 %v2780, %v2818
        %v2835 = vadd.f32 %v2781, %v2819
        %v2836 = vadd.f32 %v2782, %v2820
        %v2837 = vadd.f32 %v2783, %v2821
        %v2838 = vadd.f32 %v2784, %v2822
        %s2839 = scalar_lea.vmem [#allocation2], 80
        %v2840 = vld [vmem:[%s2839] sm:$0xff]
        %v2841 = vld [vmem:[%s2839 + $0x8] sm:$0xff]
        %v2842 = vld [vmem:[%s2839 + $0x10] sm:$0xff]
        %v2843 = vld [vmem:[%s2839 + $0x18] sm:$0xff]
        %v2844 = vld [vmem:[%s2839 + $0x20] sm:$0xff]
        %v2845 = vld [vmem:[%s2839 + $0x28] sm:$0xff]
        %v2846 = vld [vmem:[%s2839 + $0x30] sm:$0xff]
        %v2847 = vld [vmem:[%s2839 + $0x38] sm:$0xff]
        %v2848 = vld [vmem:[%s2839 + $0x40] sm:$0xff]
        %v2849 = vld [vmem:[%s2839 + $0x48] sm:$0xff]
        %v2850 = vld [vmem:[%s2839 + $0x50] sm:$0xff]
        %v2851 = vld [vmem:[%s2839 + $0x58] sm:$0xff]
        %v2852 = vld [vmem:[%s2839 + $0x60] sm:$0xff]
        %v2853 = vld [vmem:[%s2839 + $0x68] sm:$0xff]
        %v2854 = vld [vmem:[%s2839 + $0x70] sm:$0xff]
        %v2855 = vld [vmem:[%s2839 + $0x78] sm:$0xff]
        %s2856 = scalar_lea.vmem [#allocation6], 35
        %v2857 = vld [vmem:[%s2856] sm:$0x1]
        %v2859 = vperm.slane %v2857, 0
        %v2861 = vmul.f32 %v2840, %v2859
        %v2862 = vmul.f32 %v2841, %v2859
        %v2863 = vmul.f32 %v2842, %v2859
        %v2864 = vmul.f32 %v2843, %v2859
        %v2865 = vmul.f32 %v2844, %v2859
        %v2866 = vmul.f32 %v2845, %v2859
        %v2867 = vmul.f32 %v2846, %v2859
        %v2868 = vmul.f32 %v2847, %v2859
        %v2869 = vmul.f32 %v2848, %v2859
        %v2870 = vmul.f32 %v2849, %v2859
        %v2871 = vmul.f32 %v2850, %v2859
        %v2872 = vmul.f32 %v2851, %v2859
        %v2873 = vmul.f32 %v2852, %v2859
        %v2874 = vmul.f32 %v2853, %v2859
        %v2875 = vmul.f32 %v2854, %v2859
        %v2876 = vmul.f32 %v2855, %v2859
        %v2877 = vadd.f32 %v2823, %v2861
        %v2878 = vadd.f32 %v2824, %v2862
        %v2879 = vadd.f32 %v2825, %v2863
        %v2880 = vadd.f32 %v2826, %v2864
        %v2881 = vadd.f32 %v2827, %v2865
        %v2882 = vadd.f32 %v2828, %v2866
        %v2883 = vadd.f32 %v2829, %v2867
        %v2884 = vadd.f32 %v2830, %v2868
        %v2885 = vadd.f32 %v2831, %v2869
        %v2886 = vadd.f32 %v2832, %v2870
        %v2887 = vadd.f32 %v2833, %v2871
        %v2888 = vadd.f32 %v2834, %v2872
        %v2889 = vadd.f32 %v2835, %v2873
        %v2890 = vadd.f32 %v2836, %v2874
        %v2891 = vadd.f32 %v2837, %v2875
        %v2892 = vadd.f32 %v2838, %v2876
        %s2893 = scalar_lea.vmem [#allocation2], 304
        %v2894 = vld [vmem:[%s2893] sm:$0xff]
        %v2895 = vld [vmem:[%s2893 + $0x8] sm:$0xff]
        %v2896 = vld [vmem:[%s2893 + $0x10] sm:$0xff]
        %v2897 = vld [vmem:[%s2893 + $0x18] sm:$0xff]
        %v2898 = vld [vmem:[%s2893 + $0x20] sm:$0xff]
        %v2899 = vld [vmem:[%s2893 + $0x28] sm:$0xff]
        %v2900 = vld [vmem:[%s2893 + $0x30] sm:$0xff]
        %v2901 = vld [vmem:[%s2893 + $0x38] sm:$0xff]
        %v2902 = vld [vmem:[%s2893 + $0x40] sm:$0xff]
        %v2903 = vld [vmem:[%s2893 + $0x48] sm:$0xff]
        %v2904 = vld [vmem:[%s2893 + $0x50] sm:$0xff]
        %v2905 = vld [vmem:[%s2893 + $0x58] sm:$0xff]
        %v2906 = vld [vmem:[%s2893 + $0x60] sm:$0xff]
        %v2907 = vld [vmem:[%s2893 + $0x68] sm:$0xff]
        %v2908 = vld [vmem:[%s2893 + $0x70] sm:$0xff]
        %v2909 = vld [vmem:[%s2893 + $0x78] sm:$0xff]
        %s2910 = scalar_lea.vmem [#allocation6], 36
        %v2911 = vld [vmem:[%s2910] sm:$0x1]
        %v2913 = vperm.slane %v2911, 0
        %v2915 = vmul.f32 %v2894, %v2913
        %v2916 = vmul.f32 %v2895, %v2913
        %v2917 = vmul.f32 %v2896, %v2913
        %v2918 = vmul.f32 %v2897, %v2913
        %v2919 = vmul.f32 %v2898, %v2913
        %v2920 = vmul.f32 %v2899, %v2913
        %v2921 = vmul.f32 %v2900, %v2913
        %v2922 = vmul.f32 %v2901, %v2913
        %v2923 = vmul.f32 %v2902, %v2913
        %v2924 = vmul.f32 %v2903, %v2913
        %v2925 = vmul.f32 %v2904, %v2913
        %v2926 = vmul.f32 %v2905, %v2913
        %v2927 = vmul.f32 %v2906, %v2913
        %v2928 = vmul.f32 %v2907, %v2913
        %v2929 = vmul.f32 %v2908, %v2913
        %v2930 = vmul.f32 %v2909, %v2913
        %v2931 = vadd.f32 %v2877, %v2915
        %v2932 = vadd.f32 %v2878, %v2916
        %v2933 = vadd.f32 %v2879, %v2917
        %v2934 = vadd.f32 %v2880, %v2918
        %v2935 = vadd.f32 %v2881, %v2919
        %v2936 = vadd.f32 %v2882, %v2920
        %v2937 = vadd.f32 %v2883, %v2921
        %v2938 = vadd.f32 %v2884, %v2922
        %v2939 = vadd.f32 %v2885, %v2923
        %v2940 = vadd.f32 %v2886, %v2924
        %v2941 = vadd.f32 %v2887, %v2925
        %v2942 = vadd.f32 %v2888, %v2926
        %v2943 = vadd.f32 %v2889, %v2927
        %v2944 = vadd.f32 %v2890, %v2928
        %v2945 = vadd.f32 %v2891, %v2929
        %v2946 = vadd.f32 %v2892, %v2930
        %s2947 = scalar_lea.vmem [#allocation2], 528
        %v2948 = vld [vmem:[%s2947] sm:$0xff]
        %v2949 = vld [vmem:[%s2947 + $0x8] sm:$0xff]
        %v2950 = vld [vmem:[%s2947 + $0x10] sm:$0xff]
        %v2951 = vld [vmem:[%s2947 + $0x18] sm:$0xff]
        %v2952 = vld [vmem:[%s2947 + $0x20] sm:$0xff]
        %v2953 = vld [vmem:[%s2947 + $0x28] sm:$0xff]
        %v2954 = vld [vmem:[%s2947 + $0x30] sm:$0xff]
        %v2955 = vld [vmem:[%s2947 + $0x38] sm:$0xff]
        %v2956 = vld [vmem:[%s2947 + $0x40] sm:$0xff]
        %v2957 = vld [vmem:[%s2947 + $0x48] sm:$0xff]
        %v2958 = vld [vmem:[%s2947 + $0x50] sm:$0xff]
        %v2959 = vld [vmem:[%s2947 + $0x58] sm:$0xff]
        %v2960 = vld [vmem:[%s2947 + $0x60] sm:$0xff]
        %v2961 = vld [vmem:[%s2947 + $0x68] sm:$0xff]
        %v2962 = vld [vmem:[%s2947 + $0x70] sm:$0xff]
        %v2963 = vld [vmem:[%s2947 + $0x78] sm:$0xff]
        %s2964 = scalar_lea.vmem [#allocation6], 37
        %v2965 = vld [vmem:[%s2964] sm:$0x1]
        %v2967 = vperm.slane %v2965, 0
        %v2969 = vmul.f32 %v2948, %v2967
        %v2970 = vmul.f32 %v2949, %v2967
        %v2971 = vmul.f32 %v2950, %v2967
        %v2972 = vmul.f32 %v2951, %v2967
        %v2973 = vmul.f32 %v2952, %v2967
        %v2974 = vmul.f32 %v2953, %v2967
        %v2975 = vmul.f32 %v2954, %v2967
        %v2976 = vmul.f32 %v2955, %v2967
        %v2977 = vmul.f32 %v2956, %v2967
        %v2978 = vmul.f32 %v2957, %v2967
        %v2979 = vmul.f32 %v2958, %v2967
        %v2980 = vmul.f32 %v2959, %v2967
        %v2981 = vmul.f32 %v2960, %v2967
        %v2982 = vmul.f32 %v2961, %v2967
        %v2983 = vmul.f32 %v2962, %v2967
        %v2984 = vmul.f32 %v2963, %v2967
        %v2985 = vadd.f32 %v2931, %v2969
        %v2986 = vadd.f32 %v2932, %v2970
        %v2987 = vadd.f32 %v2933, %v2971
        %v2988 = vadd.f32 %v2934, %v2972
        %v2989 = vadd.f32 %v2935, %v2973
        %v2990 = vadd.f32 %v2936, %v2974
        %v2991 = vadd.f32 %v2937, %v2975
        %v2992 = vadd.f32 %v2938, %v2976
        %v2993 = vadd.f32 %v2939, %v2977
        %v2994 = vadd.f32 %v2940, %v2978
        %v2995 = vadd.f32 %v2941, %v2979
        %v2996 = vadd.f32 %v2942, %v2980
        %v2997 = vadd.f32 %v2943, %v2981
        %v2998 = vadd.f32 %v2944, %v2982
        %v2999 = vadd.f32 %v2945, %v2983
        %v3000 = vadd.f32 %v2946, %v2984
        %s3001 = scalar_lea.vmem [#allocation2], 752
        %v3002 = vld [vmem:[%s3001] sm:$0xff]
        %v3003 = vld [vmem:[%s3001 + $0x8] sm:$0xff]
        %v3004 = vld [vmem:[%s3001 + $0x10] sm:$0xff]
        %v3005 = vld [vmem:[%s3001 + $0x18] sm:$0xff]
        %v3006 = vld [vmem:[%s3001 + $0x20] sm:$0xff]
        %v3007 = vld [vmem:[%s3001 + $0x28] sm:$0xff]
        %v3008 = vld [vmem:[%s3001 + $0x30] sm:$0xff]
        %v3009 = vld [vmem:[%s3001 + $0x38] sm:$0xff]
        %v3010 = vld [vmem:[%s3001 + $0x40] sm:$0xff]
        %v3011 = vld [vmem:[%s3001 + $0x48] sm:$0xff]
        %v3012 = vld [vmem:[%s3001 + $0x50] sm:$0xff]
        %v3013 = vld [vmem:[%s3001 + $0x58] sm:$0xff]
        %v3014 = vld [vmem:[%s3001 + $0x60] sm:$0xff]
        %v3015 = vld [vmem:[%s3001 + $0x68] sm:$0xff]
        %v3016 = vld [vmem:[%s3001 + $0x70] sm:$0xff]
        %v3017 = vld [vmem:[%s3001 + $0x78] sm:$0xff]
        %s3018 = scalar_lea.vmem [#allocation6], 38
        %v3019 = vld [vmem:[%s3018] sm:$0x1]
        %v3021 = vperm.slane %v3019, 0
        %v3023 = vmul.f32 %v3002, %v3021
        %v3024 = vmul.f32 %v3003, %v3021
        %v3025 = vmul.f32 %v3004, %v3021
        %v3026 = vmul.f32 %v3005, %v3021
        %v3027 = vmul.f32 %v3006, %v3021
        %v3028 = vmul.f32 %v3007, %v3021
        %v3029 = vmul.f32 %v3008, %v3021
        %v3030 = vmul.f32 %v3009, %v3021
        %v3031 = vmul.f32 %v3010, %v3021
        %v3032 = vmul.f32 %v3011, %v3021
        %v3033 = vmul.f32 %v3012, %v3021
        %v3034 = vmul.f32 %v3013, %v3021
        %v3035 = vmul.f32 %v3014, %v3021
        %v3036 = vmul.f32 %v3015, %v3021
        %v3037 = vmul.f32 %v3016, %v3021
        %v3038 = vmul.f32 %v3017, %v3021
        %v3039 = vadd.f32 %v2985, %v3023
        %v3040 = vadd.f32 %v2986, %v3024
        %v3041 = vadd.f32 %v2987, %v3025
        %v3042 = vadd.f32 %v2988, %v3026
        %v3043 = vadd.f32 %v2989, %v3027
        %v3044 = vadd.f32 %v2990, %v3028
        %v3045 = vadd.f32 %v2991, %v3029
        %v3046 = vadd.f32 %v2992, %v3030
        %v3047 = vadd.f32 %v2993, %v3031
        %v3048 = vadd.f32 %v2994, %v3032
        %v3049 = vadd.f32 %v2995, %v3033
        %v3050 = vadd.f32 %v2996, %v3034
        %v3051 = vadd.f32 %v2997, %v3035
        %v3052 = vadd.f32 %v2998, %v3036
        %v3053 = vadd.f32 %v2999, %v3037
        %v3054 = vadd.f32 %v3000, %v3038
        %s3055 = scalar_lea.vmem [#allocation2], 976
        %v3056 = vld [vmem:[%s3055] sm:$0xff]
        %v3057 = vld [vmem:[%s3055 + $0x8] sm:$0xff]
        %v3058 = vld [vmem:[%s3055 + $0x10] sm:$0xff]
        %v3059 = vld [vmem:[%s3055 + $0x18] sm:$0xff]
        %v3060 = vld [vmem:[%s3055 + $0x20] sm:$0xff]
        %v3061 = vld [vmem:[%s3055 + $0x28] sm:$0xff]
        %v3062 = vld [vmem:[%s3055 + $0x30] sm:$0xff]
        %v3063 = vld [vmem:[%s3055 + $0x38] sm:$0xff]
        %v3064 = vld [vmem:[%s3055 + $0x40] sm:$0xff]
        %v3065 = vld [vmem:[%s3055 + $0x48] sm:$0xff]
        %v3066 = vld [vmem:[%s3055 + $0x50] sm:$0xff]
        %v3067 = vld [vmem:[%s3055 + $0x58] sm:$0xff]
        %v3068 = vld [vmem:[%s3055 + $0x60] sm:$0xff]
        %v3069 = vld [vmem:[%s3055 + $0x68] sm:$0xff]
        %v3070 = vld [vmem:[%s3055 + $0x70] sm:$0xff]
        %v3071 = vld [vmem:[%s3055 + $0x78] sm:$0xff]
        %s3072 = scalar_lea.vmem [#allocation6], 39
        %v3073 = vld [vmem:[%s3072] sm:$0x1]
        %v3075 = vperm.slane %v3073, 0
        %v3077 = vmul.f32 %v3056, %v3075
        %v3078 = vmul.f32 %v3057, %v3075
        %v3079 = vmul.f32 %v3058, %v3075
        %v3080 = vmul.f32 %v3059, %v3075
        %v3081 = vmul.f32 %v3060, %v3075
        %v3082 = vmul.f32 %v3061, %v3075
        %v3083 = vmul.f32 %v3062, %v3075
        %v3084 = vmul.f32 %v3063, %v3075
        %v3085 = vmul.f32 %v3064, %v3075
        %v3086 = vmul.f32 %v3065, %v3075
        %v3087 = vmul.f32 %v3066, %v3075
        %v3088 = vmul.f32 %v3067, %v3075
        %v3089 = vmul.f32 %v3068, %v3075
        %v3090 = vmul.f32 %v3069, %v3075
        %v3091 = vmul.f32 %v3070, %v3075
        %v3092 = vmul.f32 %v3071, %v3075
        %v3093 = vadd.f32 %v3039, %v3077
        %v3094 = vadd.f32 %v3040, %v3078
        %v3095 = vadd.f32 %v3041, %v3079
        %v3096 = vadd.f32 %v3042, %v3080
        %v3097 = vadd.f32 %v3043, %v3081
        %v3098 = vadd.f32 %v3044, %v3082
        %v3099 = vadd.f32 %v3045, %v3083
        %v3100 = vadd.f32 %v3046, %v3084
        %v3101 = vadd.f32 %v3047, %v3085
        %v3102 = vadd.f32 %v3048, %v3086
        %v3103 = vadd.f32 %v3049, %v3087
        %v3104 = vadd.f32 %v3050, %v3088
        %v3105 = vadd.f32 %v3051, %v3089
        %v3106 = vadd.f32 %v3052, %v3090
        %v3107 = vadd.f32 %v3053, %v3091
        %v3108 = vadd.f32 %v3054, %v3092
        %s3109 = scalar_lea.vmem [#allocation2], 1200
        %v3110 = vld [vmem:[%s3109] sm:$0xff]
        %v3111 = vld [vmem:[%s3109 + $0x8] sm:$0xff]
        %v3112 = vld [vmem:[%s3109 + $0x10] sm:$0xff]
        %v3113 = vld [vmem:[%s3109 + $0x18] sm:$0xff]
        %v3114 = vld [vmem:[%s3109 + $0x20] sm:$0xff]
        %v3115 = vld [vmem:[%s3109 + $0x28] sm:$0xff]
        %v3116 = vld [vmem:[%s3109 + $0x30] sm:$0xff]
        %v3117 = vld [vmem:[%s3109 + $0x38] sm:$0xff]
        %v3118 = vld [vmem:[%s3109 + $0x40] sm:$0xff]
        %v3119 = vld [vmem:[%s3109 + $0x48] sm:$0xff]
        %v3120 = vld [vmem:[%s3109 + $0x50] sm:$0xff]
        %v3121 = vld [vmem:[%s3109 + $0x58] sm:$0xff]
        %v3122 = vld [vmem:[%s3109 + $0x60] sm:$0xff]
        %v3123 = vld [vmem:[%s3109 + $0x68] sm:$0xff]
        %v3124 = vld [vmem:[%s3109 + $0x70] sm:$0xff]
        %v3125 = vld [vmem:[%s3109 + $0x78] sm:$0xff]
        %s3126 = scalar_lea.vmem [#allocation6], 40
        %v3127 = vld [vmem:[%s3126] sm:$0x1]
        %v3129 = vperm.slane %v3127, 0
        %v3131 = vmul.f32 %v3110, %v3129
        %v3132 = vmul.f32 %v3111, %v3129
        %v3133 = vmul.f32 %v3112, %v3129
        %v3134 = vmul.f32 %v3113, %v3129
        %v3135 = vmul.f32 %v3114, %v3129
        %v3136 = vmul.f32 %v3115, %v3129
        %v3137 = vmul.f32 %v3116, %v3129
        %v3138 = vmul.f32 %v3117, %v3129
        %v3139 = vmul.f32 %v3118, %v3129
        %v3140 = vmul.f32 %v3119, %v3129
        %v3141 = vmul.f32 %v3120, %v3129
        %v3142 = vmul.f32 %v3121, %v3129
        %v3143 = vmul.f32 %v3122, %v3129
        %v3144 = vmul.f32 %v3123, %v3129
        %v3145 = vmul.f32 %v3124, %v3129
        %v3146 = vmul.f32 %v3125, %v3129
        %v3147 = vadd.f32 %v3093, %v3131
        %v3148 = vadd.f32 %v3094, %v3132
        %v3149 = vadd.f32 %v3095, %v3133
        %v3150 = vadd.f32 %v3096, %v3134
        %v3151 = vadd.f32 %v3097, %v3135
        %v3152 = vadd.f32 %v3098, %v3136
        %v3153 = vadd.f32 %v3099, %v3137
        %v3154 = vadd.f32 %v3100, %v3138
        %v3155 = vadd.f32 %v3101, %v3139
        %v3156 = vadd.f32 %v3102, %v3140
        %v3157 = vadd.f32 %v3103, %v3141
        %v3158 = vadd.f32 %v3104, %v3142
        %v3159 = vadd.f32 %v3105, %v3143
        %v3160 = vadd.f32 %v3106, %v3144
        %v3161 = vadd.f32 %v3107, %v3145
        %v3162 = vadd.f32 %v3108, %v3146
        %s3163 = scalar_lea.vmem [#allocation2], 1424
        %v3164 = vld [vmem:[%s3163] sm:$0xff]
        %v3165 = vld [vmem:[%s3163 + $0x8] sm:$0xff]
        %v3166 = vld [vmem:[%s3163 + $0x10] sm:$0xff]
        %v3167 = vld [vmem:[%s3163 + $0x18] sm:$0xff]
        %v3168 = vld [vmem:[%s3163 + $0x20] sm:$0xff]
        %v3169 = vld [vmem:[%s3163 + $0x28] sm:$0xff]
        %v3170 = vld [vmem:[%s3163 + $0x30] sm:$0xff]
        %v3171 = vld [vmem:[%s3163 + $0x38] sm:$0xff]
        %v3172 = vld [vmem:[%s3163 + $0x40] sm:$0xff]
        %v3173 = vld [vmem:[%s3163 + $0x48] sm:$0xff]
        %v3174 = vld [vmem:[%s3163 + $0x50] sm:$0xff]
        %v3175 = vld [vmem:[%s3163 + $0x58] sm:$0xff]
        %v3176 = vld [vmem:[%s3163 + $0x60] sm:$0xff]
        %v3177 = vld [vmem:[%s3163 + $0x68] sm:$0xff]
        %v3178 = vld [vmem:[%s3163 + $0x70] sm:$0xff]
        %v3179 = vld [vmem:[%s3163 + $0x78] sm:$0xff]
        %s3180 = scalar_lea.vmem [#allocation6], 41
        %v3181 = vld [vmem:[%s3180] sm:$0x1]
        %v3183 = vperm.slane %v3181, 0
        %v3185 = vmul.f32 %v3164, %v3183
        %v3186 = vmul.f32 %v3165, %v3183
        %v3187 = vmul.f32 %v3166, %v3183
        %v3188 = vmul.f32 %v3167, %v3183
        %v3189 = vmul.f32 %v3168, %v3183
        %v3190 = vmul.f32 %v3169, %v3183
        %v3191 = vmul.f32 %v3170, %v3183
        %v3192 = vmul.f32 %v3171, %v3183
        %v3193 = vmul.f32 %v3172, %v3183
        %v3194 = vmul.f32 %v3173, %v3183
        %v3195 = vmul.f32 %v3174, %v3183
        %v3196 = vmul.f32 %v3175, %v3183
        %v3197 = vmul.f32 %v3176, %v3183
        %v3198 = vmul.f32 %v3177, %v3183
        %v3199 = vmul.f32 %v3178, %v3183
        %v3200 = vmul.f32 %v3179, %v3183
        %v3201 = vadd.f32 %v3147, %v3185
        %v3202 = vadd.f32 %v3148, %v3186
        %v3203 = vadd.f32 %v3149, %v3187
        %v3204 = vadd.f32 %v3150, %v3188
        %v3205 = vadd.f32 %v3151, %v3189
        %v3206 = vadd.f32 %v3152, %v3190
        %v3207 = vadd.f32 %v3153, %v3191
        %v3208 = vadd.f32 %v3154, %v3192
        %v3209 = vadd.f32 %v3155, %v3193
        %v3210 = vadd.f32 %v3156, %v3194
        %v3211 = vadd.f32 %v3157, %v3195
        %v3212 = vadd.f32 %v3158, %v3196
        %v3213 = vadd.f32 %v3159, %v3197
        %v3214 = vadd.f32 %v3160, %v3198
        %v3215 = vadd.f32 %v3161, %v3199
        %v3216 = vadd.f32 %v3162, %v3200
        %s3217 = scalar_lea.vmem [#allocation2], 96
        %v3218 = vld [vmem:[%s3217] sm:$0xff]
        %v3219 = vld [vmem:[%s3217 + $0x8] sm:$0xff]
        %v3220 = vld [vmem:[%s3217 + $0x10] sm:$0xff]
        %v3221 = vld [vmem:[%s3217 + $0x18] sm:$0xff]
        %v3222 = vld [vmem:[%s3217 + $0x20] sm:$0xff]
        %v3223 = vld [vmem:[%s3217 + $0x28] sm:$0xff]
        %v3224 = vld [vmem:[%s3217 + $0x30] sm:$0xff]
        %v3225 = vld [vmem:[%s3217 + $0x38] sm:$0xff]
        %v3226 = vld [vmem:[%s3217 + $0x40] sm:$0xff]
        %v3227 = vld [vmem:[%s3217 + $0x48] sm:$0xff]
        %v3228 = vld [vmem:[%s3217 + $0x50] sm:$0xff]
        %v3229 = vld [vmem:[%s3217 + $0x58] sm:$0xff]
        %v3230 = vld [vmem:[%s3217 + $0x60] sm:$0xff]
        %v3231 = vld [vmem:[%s3217 + $0x68] sm:$0xff]
        %v3232 = vld [vmem:[%s3217 + $0x70] sm:$0xff]
        %v3233 = vld [vmem:[%s3217 + $0x78] sm:$0xff]
        %s3234 = scalar_lea.vmem [#allocation6], 42
        %v3235 = vld [vmem:[%s3234] sm:$0x1]
        %v3237 = vperm.slane %v3235, 0
        %v3239 = vmul.f32 %v3218, %v3237
        %v3240 = vmul.f32 %v3219, %v3237
        %v3241 = vmul.f32 %v3220, %v3237
        %v3242 = vmul.f32 %v3221, %v3237
        %v3243 = vmul.f32 %v3222, %v3237
        %v3244 = vmul.f32 %v3223, %v3237
        %v3245 = vmul.f32 %v3224, %v3237
        %v3246 = vmul.f32 %v3225, %v3237
        %v3247 = vmul.f32 %v3226, %v3237
        %v3248 = vmul.f32 %v3227, %v3237
        %v3249 = vmul.f32 %v3228, %v3237
        %v3250 = vmul.f32 %v3229, %v3237
        %v3251 = vmul.f32 %v3230, %v3237
        %v3252 = vmul.f32 %v3231, %v3237
        %v3253 = vmul.f32 %v3232, %v3237
        %v3254 = vmul.f32 %v3233, %v3237
        %v3255 = vadd.f32 %v3201, %v3239
        %v3256 = vadd.f32 %v3202, %v3240
        %v3257 = vadd.f32 %v3203, %v3241
        %v3258 = vadd.f32 %v3204, %v3242
        %v3259 = vadd.f32 %v3205, %v3243
        %v3260 = vadd.f32 %v3206, %v3244
        %v3261 = vadd.f32 %v3207, %v3245
        %v3262 = vadd.f32 %v3208, %v3246
        %v3263 = vadd.f32 %v3209, %v3247
        %v3264 = vadd.f32 %v3210, %v3248
        %v3265 = vadd.f32 %v3211, %v3249
        %v3266 = vadd.f32 %v3212, %v3250
        %v3267 = vadd.f32 %v3213, %v3251
        %v3268 = vadd.f32 %v3214, %v3252
        %v3269 = vadd.f32 %v3215, %v3253
        %v3270 = vadd.f32 %v3216, %v3254
        %s3271 = scalar_lea.vmem [#allocation2], 320
        %v3272 = vld [vmem:[%s3271] sm:$0xff]
        %v3273 = vld [vmem:[%s3271 + $0x8] sm:$0xff]
        %v3274 = vld [vmem:[%s3271 + $0x10] sm:$0xff]
        %v3275 = vld [vmem:[%s3271 + $0x18] sm:$0xff]
        %v3276 = vld [vmem:[%s3271 + $0x20] sm:$0xff]
        %v3277 = vld [vmem:[%s3271 + $0x28] sm:$0xff]
        %v3278 = vld [vmem:[%s3271 + $0x30] sm:$0xff]
        %v3279 = vld [vmem:[%s3271 + $0x38] sm:$0xff]
        %v3280 = vld [vmem:[%s3271 + $0x40] sm:$0xff]
        %v3281 = vld [vmem:[%s3271 + $0x48] sm:$0xff]
        %v3282 = vld [vmem:[%s3271 + $0x50] sm:$0xff]
        %v3283 = vld [vmem:[%s3271 + $0x58] sm:$0xff]
        %v3284 = vld [vmem:[%s3271 + $0x60] sm:$0xff]
        %v3285 = vld [vmem:[%s3271 + $0x68] sm:$0xff]
        %v3286 = vld [vmem:[%s3271 + $0x70] sm:$0xff]
        %v3287 = vld [vmem:[%s3271 + $0x78] sm:$0xff]
        %s3288 = scalar_lea.vmem [#allocation6], 43
        %v3289 = vld [vmem:[%s3288] sm:$0x1]
        %v3291 = vperm.slane %v3289, 0
        %v3293 = vmul.f32 %v3272, %v3291
        %v3294 = vmul.f32 %v3273, %v3291
        %v3295 = vmul.f32 %v3274, %v3291
        %v3296 = vmul.f32 %v3275, %v3291
        %v3297 = vmul.f32 %v3276, %v3291
        %v3298 = vmul.f32 %v3277, %v3291
        %v3299 = vmul.f32 %v3278, %v3291
        %v3300 = vmul.f32 %v3279, %v3291
        %v3301 = vmul.f32 %v3280, %v3291
        %v3302 = vmul.f32 %v3281, %v3291
        %v3303 = vmul.f32 %v3282, %v3291
        %v3304 = vmul.f32 %v3283, %v3291
        %v3305 = vmul.f32 %v3284, %v3291
        %v3306 = vmul.f32 %v3285, %v3291
        %v3307 = vmul.f32 %v3286, %v3291
        %v3308 = vmul.f32 %v3287, %v3291
        %v3309 = vadd.f32 %v3255, %v3293
        %v3310 = vadd.f32 %v3256, %v3294
        %v3311 = vadd.f32 %v3257, %v3295
        %v3312 = vadd.f32 %v3258, %v3296
        %v3313 = vadd.f32 %v3259, %v3297
        %v3314 = vadd.f32 %v3260, %v3298
        %v3315 = vadd.f32 %v3261, %v3299
        %v3316 = vadd.f32 %v3262, %v3300
        %v3317 = vadd.f32 %v3263, %v3301
        %v3318 = vadd.f32 %v3264, %v3302
        %v3319 = vadd.f32 %v3265, %v3303
        %v3320 = vadd.f32 %v3266, %v3304
        %v3321 = vadd.f32 %v3267, %v3305
        %v3322 = vadd.f32 %v3268, %v3306
        %v3323 = vadd.f32 %v3269, %v3307
        %v3324 = vadd.f32 %v3270, %v3308
        %s3325 = scalar_lea.vmem [#allocation2], 544
        %v3326 = vld [vmem:[%s3325] sm:$0xff]
        %v3327 = vld [vmem:[%s3325 + $0x8] sm:$0xff]
        %v3328 = vld [vmem:[%s3325 + $0x10] sm:$0xff]
        %v3329 = vld [vmem:[%s3325 + $0x18] sm:$0xff]
        %v3330 = vld [vmem:[%s3325 + $0x20] sm:$0xff]
        %v3331 = vld [vmem:[%s3325 + $0x28] sm:$0xff]
        %v3332 = vld [vmem:[%s3325 + $0x30] sm:$0xff]
        %v3333 = vld [vmem:[%s3325 + $0x38] sm:$0xff]
        %v3334 = vld [vmem:[%s3325 + $0x40] sm:$0xff]
        %v3335 = vld [vmem:[%s3325 + $0x48] sm:$0xff]
        %v3336 = vld [vmem:[%s3325 + $0x50] sm:$0xff]
        %v3337 = vld [vmem:[%s3325 + $0x58] sm:$0xff]
        %v3338 = vld [vmem:[%s3325 + $0x60] sm:$0xff]
        %v3339 = vld [vmem:[%s3325 + $0x68] sm:$0xff]
        %v3340 = vld [vmem:[%s3325 + $0x70] sm:$0xff]
        %v3341 = vld [vmem:[%s3325 + $0x78] sm:$0xff]
        %s3342 = scalar_lea.vmem [#allocation6], 44
        %v3343 = vld [vmem:[%s3342] sm:$0x1]
        %v3345 = vperm.slane %v3343, 0
        %v3347 = vmul.f32 %v3326, %v3345
        %v3348 = vmul.f32 %v3327, %v3345
        %v3349 = vmul.f32 %v3328, %v3345
        %v3350 = vmul.f32 %v3329, %v3345
        %v3351 = vmul.f32 %v3330, %v3345
        %v3352 = vmul.f32 %v3331, %v3345
        %v3353 = vmul.f32 %v3332, %v3345
        %v3354 = vmul.f32 %v3333, %v3345
        %v3355 = vmul.f32 %v3334, %v3345
        %v3356 = vmul.f32 %v3335, %v3345
        %v3357 = vmul.f32 %v3336, %v3345
        %v3358 = vmul.f32 %v3337, %v3345
        %v3359 = vmul.f32 %v3338, %v3345
        %v3360 = vmul.f32 %v3339, %v3345
        %v3361 = vmul.f32 %v3340, %v3345
        %v3362 = vmul.f32 %v3341, %v3345
        %v3363 = vadd.f32 %v3309, %v3347
        %v3364 = vadd.f32 %v3310, %v3348
        %v3365 = vadd.f32 %v3311, %v3349
        %v3366 = vadd.f32 %v3312, %v3350
        %v3367 = vadd.f32 %v3313, %v3351
        %v3368 = vadd.f32 %v3314, %v3352
        %v3369 = vadd.f32 %v3315, %v3353
        %v3370 = vadd.f32 %v3316, %v3354
        %v3371 = vadd.f32 %v3317, %v3355
        %v3372 = vadd.f32 %v3318, %v3356
        %v3373 = vadd.f32 %v3319, %v3357
        %v3374 = vadd.f32 %v3320, %v3358
        %v3375 = vadd.f32 %v3321, %v3359
        %v3376 = vadd.f32 %v3322, %v3360
        %v3377 = vadd.f32 %v3323, %v3361
        %v3378 = vadd.f32 %v3324, %v3362
        %s3379 = scalar_lea.vmem [#allocation2], 768
        %v3380 = vld [vmem:[%s3379] sm:$0xff]
        %v3381 = vld [vmem:[%s3379 + $0x8] sm:$0xff]
        %v3382 = vld [vmem:[%s3379 + $0x10] sm:$0xff]
        %v3383 = vld [vmem:[%s3379 + $0x18] sm:$0xff]
        %v3384 = vld [vmem:[%s3379 + $0x20] sm:$0xff]
        %v3385 = vld [vmem:[%s3379 + $0x28] sm:$0xff]
        %v3386 = vld [vmem:[%s3379 + $0x30] sm:$0xff]
        %v3387 = vld [vmem:[%s3379 + $0x38] sm:$0xff]
        %v3388 = vld [vmem:[%s3379 + $0x40] sm:$0xff]
        %v3389 = vld [vmem:[%s3379 + $0x48] sm:$0xff]
        %v3390 = vld [vmem:[%s3379 + $0x50] sm:$0xff]
        %v3391 = vld [vmem:[%s3379 + $0x58] sm:$0xff]
        %v3392 = vld [vmem:[%s3379 + $0x60] sm:$0xff]
        %v3393 = vld [vmem:[%s3379 + $0x68] sm:$0xff]
        %v3394 = vld [vmem:[%s3379 + $0x70] sm:$0xff]
        %v3395 = vld [vmem:[%s3379 + $0x78] sm:$0xff]
        %s3396 = scalar_lea.vmem [#allocation6], 45
        %v3397 = vld [vmem:[%s3396] sm:$0x1]
        %v3399 = vperm.slane %v3397, 0
        %v3401 = vmul.f32 %v3380, %v3399
        %v3402 = vmul.f32 %v3381, %v3399
        %v3403 = vmul.f32 %v3382, %v3399
        %v3404 = vmul.f32 %v3383, %v3399
        %v3405 = vmul.f32 %v3384, %v3399
        %v3406 = vmul.f32 %v3385, %v3399
        %v3407 = vmul.f32 %v3386, %v3399
        %v3408 = vmul.f32 %v3387, %v3399
        %v3409 = vmul.f32 %v3388, %v3399
        %v3410 = vmul.f32 %v3389, %v3399
        %v3411 = vmul.f32 %v3390, %v3399
        %v3412 = vmul.f32 %v3391, %v3399
        %v3413 = vmul.f32 %v3392, %v3399
        %v3414 = vmul.f32 %v3393, %v3399
        %v3415 = vmul.f32 %v3394, %v3399
        %v3416 = vmul.f32 %v3395, %v3399
        %v3417 = vadd.f32 %v3363, %v3401
        %v3418 = vadd.f32 %v3364, %v3402
        %v3419 = vadd.f32 %v3365, %v3403
        %v3420 = vadd.f32 %v3366, %v3404
        %v3421 = vadd.f32 %v3367, %v3405
        %v3422 = vadd.f32 %v3368, %v3406
        %v3423 = vadd.f32 %v3369, %v3407
        %v3424 = vadd.f32 %v3370, %v3408
        %v3425 = vadd.f32 %v3371, %v3409
        %v3426 = vadd.f32 %v3372, %v3410
        %v3427 = vadd.f32 %v3373, %v3411
        %v3428 = vadd.f32 %v3374, %v3412
        %v3429 = vadd.f32 %v3375, %v3413
        %v3430 = vadd.f32 %v3376, %v3414
        %v3431 = vadd.f32 %v3377, %v3415
        %v3432 = vadd.f32 %v3378, %v3416
        %s3433 = scalar_lea.vmem [#allocation2], 992
        %v3434 = vld [vmem:[%s3433] sm:$0xff]
        %v3435 = vld [vmem:[%s3433 + $0x8] sm:$0xff]
        %v3436 = vld [vmem:[%s3433 + $0x10] sm:$0xff]
        %v3437 = vld [vmem:[%s3433 + $0x18] sm:$0xff]
        %v3438 = vld [vmem:[%s3433 + $0x20] sm:$0xff]
        %v3439 = vld [vmem:[%s3433 + $0x28] sm:$0xff]
        %v3440 = vld [vmem:[%s3433 + $0x30] sm:$0xff]
        %v3441 = vld [vmem:[%s3433 + $0x38] sm:$0xff]
        %v3442 = vld [vmem:[%s3433 + $0x40] sm:$0xff]
        %v3443 = vld [vmem:[%s3433 + $0x48] sm:$0xff]
        %v3444 = vld [vmem:[%s3433 + $0x50] sm:$0xff]
        %v3445 = vld [vmem:[%s3433 + $0x58] sm:$0xff]
        %v3446 = vld [vmem:[%s3433 + $0x60] sm:$0xff]
        %v3447 = vld [vmem:[%s3433 + $0x68] sm:$0xff]
        %v3448 = vld [vmem:[%s3433 + $0x70] sm:$0xff]
        %v3449 = vld [vmem:[%s3433 + $0x78] sm:$0xff]
        %s3450 = scalar_lea.vmem [#allocation6], 46
        %v3451 = vld [vmem:[%s3450] sm:$0x1]
        %v3453 = vperm.slane %v3451, 0
        %v3455 = vmul.f32 %v3434, %v3453
        %v3456 = vmul.f32 %v3435, %v3453
        %v3457 = vmul.f32 %v3436, %v3453
        %v3458 = vmul.f32 %v3437, %v3453
        %v3459 = vmul.f32 %v3438, %v3453
        %v3460 = vmul.f32 %v3439, %v3453
        %v3461 = vmul.f32 %v3440, %v3453
        %v3462 = vmul.f32 %v3441, %v3453
        %v3463 = vmul.f32 %v3442, %v3453
        %v3464 = vmul.f32 %v3443, %v3453
        %v3465 = vmul.f32 %v3444, %v3453
        %v3466 = vmul.f32 %v3445, %v3453
        %v3467 = vmul.f32 %v3446, %v3453
        %v3468 = vmul.f32 %v3447, %v3453
        %v3469 = vmul.f32 %v3448, %v3453
        %v3470 = vmul.f32 %v3449, %v3453
        %v3471 = vadd.f32 %v3417, %v3455
        %v3472 = vadd.f32 %v3418, %v3456
        %v3473 = vadd.f32 %v3419, %v3457
        %v3474 = vadd.f32 %v3420, %v3458
        %v3475 = vadd.f32 %v3421, %v3459
        %v3476 = vadd.f32 %v3422, %v3460
        %v3477 = vadd.f32 %v3423, %v3461
        %v3478 = vadd.f32 %v3424, %v3462
        %v3479 = vadd.f32 %v3425, %v3463
        %v3480 = vadd.f32 %v3426, %v3464
        %v3481 = vadd.f32 %v3427, %v3465
        %v3482 = vadd.f32 %v3428, %v3466
        %v3483 = vadd.f32 %v3429, %v3467
        %v3484 = vadd.f32 %v3430, %v3468
        %v3485 = vadd.f32 %v3431, %v3469
        %v3486 = vadd.f32 %v3432, %v3470
        %s3487 = scalar_lea.vmem [#allocation2], 1216
        %v3488 = vld [vmem:[%s3487] sm:$0xff]
        %v3489 = vld [vmem:[%s3487 + $0x8] sm:$0xff]
        %v3490 = vld [vmem:[%s3487 + $0x10] sm:$0xff]
        %v3491 = vld [vmem:[%s3487 + $0x18] sm:$0xff]
        %v3492 = vld [vmem:[%s3487 + $0x20] sm:$0xff]
        %v3493 = vld [vmem:[%s3487 + $0x28] sm:$0xff]
        %v3494 = vld [vmem:[%s3487 + $0x30] sm:$0xff]
        %v3495 = vld [vmem:[%s3487 + $0x38] sm:$0xff]
        %v3496 = vld [vmem:[%s3487 + $0x40] sm:$0xff]
        %v3497 = vld [vmem:[%s3487 + $0x48] sm:$0xff]
        %v3498 = vld [vmem:[%s3487 + $0x50] sm:$0xff]
        %v3499 = vld [vmem:[%s3487 + $0x58] sm:$0xff]
        %v3500 = vld [vmem:[%s3487 + $0x60] sm:$0xff]
        %v3501 = vld [vmem:[%s3487 + $0x68] sm:$0xff]
        %v3502 = vld [vmem:[%s3487 + $0x70] sm:$0xff]
        %v3503 = vld [vmem:[%s3487 + $0x78] sm:$0xff]
        %s3504 = scalar_lea.vmem [#allocation6], 47
        %v3505 = vld [vmem:[%s3504] sm:$0x1]
        %v3507 = vperm.slane %v3505, 0
        %v3509 = vmul.f32 %v3488, %v3507
        %v3510 = vmul.f32 %v3489, %v3507
        %v3511 = vmul.f32 %v3490, %v3507
        %v3512 = vmul.f32 %v3491, %v3507
        %v3513 = vmul.f32 %v3492, %v3507
        %v3514 = vmul.f32 %v3493, %v3507
        %v3515 = vmul.f32 %v3494, %v3507
        %v3516 = vmul.f32 %v3495, %v3507
        %v3517 = vmul.f32 %v3496, %v3507
        %v3518 = vmul.f32 %v3497, %v3507
        %v3519 = vmul.f32 %v3498, %v3507
        %v3520 = vmul.f32 %v3499, %v3507
        %v3521 = vmul.f32 %v3500, %v3507
        %v3522 = vmul.f32 %v3501, %v3507
        %v3523 = vmul.f32 %v3502, %v3507
        %v3524 = vmul.f32 %v3503, %v3507
        %v3525 = vadd.f32 %v3471, %v3509
        %v3526 = vadd.f32 %v3472, %v3510
        %v3527 = vadd.f32 %v3473, %v3511
        %v3528 = vadd.f32 %v3474, %v3512
        %v3529 = vadd.f32 %v3475, %v3513
        %v3530 = vadd.f32 %v3476, %v3514
        %v3531 = vadd.f32 %v3477, %v3515
        %v3532 = vadd.f32 %v3478, %v3516
        %v3533 = vadd.f32 %v3479, %v3517
        %v3534 = vadd.f32 %v3480, %v3518
        %v3535 = vadd.f32 %v3481, %v3519
        %v3536 = vadd.f32 %v3482, %v3520
        %v3537 = vadd.f32 %v3483, %v3521
        %v3538 = vadd.f32 %v3484, %v3522
        %v3539 = vadd.f32 %v3485, %v3523
        %v3540 = vadd.f32 %v3486, %v3524
        %s3541 = scalar_lea.vmem [#allocation2], 1440
        %v3542 = vld [vmem:[%s3541] sm:$0xff]
        %v3543 = vld [vmem:[%s3541 + $0x8] sm:$0xff]
        %v3544 = vld [vmem:[%s3541 + $0x10] sm:$0xff]
        %v3545 = vld [vmem:[%s3541 + $0x18] sm:$0xff]
        %v3546 = vld [vmem:[%s3541 + $0x20] sm:$0xff]
        %v3547 = vld [vmem:[%s3541 + $0x28] sm:$0xff]
        %v3548 = vld [vmem:[%s3541 + $0x30] sm:$0xff]
        %v3549 = vld [vmem:[%s3541 + $0x38] sm:$0xff]
        %v3550 = vld [vmem:[%s3541 + $0x40] sm:$0xff]
        %v3551 = vld [vmem:[%s3541 + $0x48] sm:$0xff]
        %v3552 = vld [vmem:[%s3541 + $0x50] sm:$0xff]
        %v3553 = vld [vmem:[%s3541 + $0x58] sm:$0xff]
        %v3554 = vld [vmem:[%s3541 + $0x60] sm:$0xff]
        %v3555 = vld [vmem:[%s3541 + $0x68] sm:$0xff]
        %v3556 = vld [vmem:[%s3541 + $0x70] sm:$0xff]
        %v3557 = vld [vmem:[%s3541 + $0x78] sm:$0xff]
        %s3558 = scalar_lea.vmem [#allocation6], 48
        %v3559 = vld [vmem:[%s3558] sm:$0x1]
        %v3561 = vperm.slane %v3559, 0
        %v3563 = vmul.f32 %v3542, %v3561
        %v3564 = vmul.f32 %v3543, %v3561
        %v3565 = vmul.f32 %v3544, %v3561
        %v3566 = vmul.f32 %v3545, %v3561
        %v3567 = vmul.f32 %v3546, %v3561
        %v3568 = vmul.f32 %v3547, %v3561
        %v3569 = vmul.f32 %v3548, %v3561
        %v3570 = vmul.f32 %v3549, %v3561
        %v3571 = vmul.f32 %v3550, %v3561
        %v3572 = vmul.f32 %v3551, %v3561
        %v3573 = vmul.f32 %v3552, %v3561
        %v3574 = vmul.f32 %v3553, %v3561
        %v3575 = vmul.f32 %v3554, %v3561
        %v3576 = vmul.f32 %v3555, %v3561
        %v3577 = vmul.f32 %v3556, %v3561
        %v3578 = vmul.f32 %v3557, %v3561
        %v3579 = vadd.f32 %v3525, %v3563
        %v3580 = vadd.f32 %v3526, %v3564
        %v3581 = vadd.f32 %v3527, %v3565
        %v3582 = vadd.f32 %v3528, %v3566
        %v3583 = vadd.f32 %v3529, %v3567
        %v3584 = vadd.f32 %v3530, %v3568
        %v3585 = vadd.f32 %v3531, %v3569
        %v3586 = vadd.f32 %v3532, %v3570
        %v3587 = vadd.f32 %v3533, %v3571
        %v3588 = vadd.f32 %v3534, %v3572
        %v3589 = vadd.f32 %v3535, %v3573
        %v3590 = vadd.f32 %v3536, %v3574
        %v3591 = vadd.f32 %v3537, %v3575
        %v3592 = vadd.f32 %v3538, %v3576
        %v3593 = vadd.f32 %v3539, %v3577
        %v3594 = vadd.f32 %v3540, %v3578
        %v3595 = vxor.u32 %v3579, 2147483648
        %v3596 = vxor.u32 %v3580, 2147483648
        %v3597 = vxor.u32 %v3581, 2147483648
        %v3598 = vxor.u32 %v3582, 2147483648
        %v3599 = vxor.u32 %v3583, 2147483648
        %v3600 = vxor.u32 %v3584, 2147483648
        %v3601 = vxor.u32 %v3585, 2147483648
        %v3602 = vxor.u32 %v3586, 2147483648
        %v3603 = vxor.u32 %v3587, 2147483648
        %v3604 = vxor.u32 %v3588, 2147483648
        %v3605 = vxor.u32 %v3589, 2147483648
        %v3606 = vxor.u32 %v3590, 2147483648
        %v3607 = vxor.u32 %v3591, 2147483648
        %v3608 = vxor.u32 %v3592, 2147483648
        %v3609 = vxor.u32 %v3593, 2147483648
        %v3610 = vxor.u32 %v3594, 2147483648
        %v3611 = vmul.f32 %v3595, 1.442695
        %v3612 = vpow.pop %v3611
        %v3613 = vmul.f32 %v3596, 1.442695
        %v3614 = vpow.pop %v3613
        %v3615 = vmul.f32 %v3597, 1.442695
        %v3616 = vpow.pop %v3615
        %v3617 = vmul.f32 %v3598, 1.442695
        %v3618 = vpow.pop %v3617
        %v3619 = vmul.f32 %v3599, 1.442695
        %v3620 = vpow.pop %v3619
        %v3621 = vmul.f32 %v3600, 1.442695
        %v3622 = vpow.pop %v3621
        %v3623 = vmul.f32 %v3601, 1.442695
        %v3624 = vpow.pop %v3623
        %v3625 = vmul.f32 %v3602, 1.442695
        %v3626 = vpow.pop %v3625
        %v3627 = vmul.f32 %v3603, 1.442695
        %v3628 = vpow.pop %v3627
        %v3629 = vmul.f32 %v3604, 1.442695
        %v3630 = vpow.pop %v3629
        %v3631 = vmul.f32 %v3605, 1.442695
        %v3632 = vpow.pop %v3631
        %v3633 = vmul.f32 %v3606, 1.442695
        %v3634 = vpow.pop %v3633
        %v3635 = vmul.f32 %v3607, 1.442695
        %v3636 = vpow.pop %v3635
        %v3637 = vmul.f32 %v3608, 1.442695
        %v3638 = vpow.pop %v3637
        %v3639 = vmul.f32 %v3609, 1.442695
        %v3640 = vpow.pop %v3639
        %v3641 = vmul.f32 %v3610, 1.442695
        %v3642 = vpow.pop %v3641
        %v3643 = vadd.f32 %v3612, 1.0
        %v3644 = vadd.f32 %v3614, 1.0
        %v3645 = vadd.f32 %v3616, 1.0
        %v3646 = vadd.f32 %v3618, 1.0
        %v3647 = vadd.f32 %v3620, 1.0
        %v3648 = vadd.f32 %v3622, 1.0
        %v3649 = vadd.f32 %v3624, 1.0
        %v3650 = vadd.f32 %v3626, 1.0
        %v3651 = vadd.f32 %v3628, 1.0
        %v3652 = vadd.f32 %v3630, 1.0
        %v3653 = vadd.f32 %v3632, 1.0
        %v3654 = vadd.f32 %v3634, 1.0
        %v3655 = vadd.f32 %v3636, 1.0
        %v3656 = vadd.f32 %v3638, 1.0
        %v3657 = vadd.f32 %v3640, 1.0
        %v3658 = vadd.f32 %v3642, 1.0
        %v3659 = vrcp.pop %v3643
        %v3660 = vmul.f32 %v3643, %v3659
        %v3661 = vsub.f32 1.0, %v3660
        %v3662 = vmul.f32 %v3659, %v3661
        %v3663 = vadd.f32 %v3659, %v3662
        %vm3664 = vweird.f32 %v3643
        %vm3665 = vweird.f32 %v3659
        %vm3666 = vmor %vm3664, %vm3665
        %v3667 = vsel %vm3666, %v3659, %v3663
        %v3668 = vand.u32 2147483647, %v3643
        %vm3669 = vcmp.eq.f32.partialorder %v3668, 8.507059e+37
        %v3670 = vand.u32 %v3643, 2147483648
        %v3671 = vor.u32 1.1754944e-38, %v3670
        %v3672 = vsel %vm3669, %v3671, %v3667
        %v3673 = vmul.f32 1.0, %v3672
        %v3674 = vrcp.pop %v3644
        %v3675 = vmul.f32 %v3644, %v3674
        %v3676 = vsub.f32 1.0, %v3675
        %v3677 = vmul.f32 %v3674, %v3676
        %v3678 = vadd.f32 %v3674, %v3677
        %vm3679 = vweird.f32 %v3644
        %vm3680 = vweird.f32 %v3674
        %vm3681 = vmor %vm3679, %vm3680
        %v3682 = vsel %vm3681, %v3674, %v3678
        %v3683 = vand.u32 2147483647, %v3644
        %vm3684 = vcmp.eq.f32.partialorder %v3683, 8.507059e+37
        %v3685 = vand.u32 %v3644, 2147483648
        %v3686 = vor.u32 1.1754944e-38, %v3685
        %v3687 = vsel %vm3684, %v3686, %v3682
        %v3688 = vmul.f32 1.0, %v3687
        %v3689 = vrcp.pop %v3645
        %v3690 = vmul.f32 %v3645, %v3689
        %v3691 = vsub.f32 1.0, %v3690
        %v3692 = vmul.f32 %v3689, %v3691
        %v3693 = vadd.f32 %v3689, %v3692
        %vm3694 = vweird.f32 %v3645
        %vm3695 = vweird.f32 %v3689
        %vm3696 = vmor %vm3694, %vm3695
        %v3697 = vsel %vm3696, %v3689, %v3693
        %v3698 = vand.u32 2147483647, %v3645
        %vm3699 = vcmp.eq.f32.partialorder %v3698, 8.507059e+37
        %v3700 = vand.u32 %v3645, 2147483648
        %v3701 = vor.u32 1.1754944e-38, %v3700
        %v3702 = vsel %vm3699, %v3701, %v3697
        %v3703 = vmul.f32 1.0, %v3702
        %v3704 = vrcp.pop %v3646
        %v3705 = vmul.f32 %v3646, %v3704
        %v3706 = vsub.f32 1.0, %v3705
        %v3707 = vmul.f32 %v3704, %v3706
        %v3708 = vadd.f32 %v3704, %v3707
        %vm3709 = vweird.f32 %v3646
        %vm3710 = vweird.f32 %v3704
        %vm3711 = vmor %vm3709, %vm3710
        %v3712 = vsel %vm3711, %v3704, %v3708
        %v3713 = vand.u32 2147483647, %v3646
        %vm3714 = vcmp.eq.f32.partialorder %v3713, 8.507059e+37
        %v3715 = vand.u32 %v3646, 2147483648
        %v3716 = vor.u32 1.1754944e-38, %v3715
        %v3717 = vsel %vm3714, %v3716, %v3712
        %v3718 = vmul.f32 1.0, %v3717
        %v3719 = vrcp.pop %v3647
        %v3720 = vmul.f32 %v3647, %v3719
        %v3721 = vsub.f32 1.0, %v3720
        %v3722 = vmul.f32 %v3719, %v3721
        %v3723 = vadd.f32 %v3719, %v3722
        %vm3724 = vweird.f32 %v3647
        %vm3725 = vweird.f32 %v3719
        %vm3726 = vmor %vm3724, %vm3725
        %v3727 = vsel %vm3726, %v3719, %v3723
        %v3728 = vand.u32 2147483647, %v3647
        %vm3729 = vcmp.eq.f32.partialorder %v3728, 8.507059e+37
        %v3730 = vand.u32 %v3647, 2147483648
        %v3731 = vor.u32 1.1754944e-38, %v3730
        %v3732 = vsel %vm3729, %v3731, %v3727
        %v3733 = vmul.f32 1.0, %v3732
        %v3734 = vrcp.pop %v3648
        %v3735 = vmul.f32 %v3648, %v3734
        %v3736 = vsub.f32 1.0, %v3735
        %v3737 = vmul.f32 %v3734, %v3736
        %v3738 = vadd.f32 %v3734, %v3737
        %vm3739 = vweird.f32 %v3648
        %vm3740 = vweird.f32 %v3734
        %vm3741 = vmor %vm3739, %vm3740
        %v3742 = vsel %vm3741, %v3734, %v3738
        %v3743 = vand.u32 2147483647, %v3648
        %vm3744 = vcmp.eq.f32.partialorder %v3743, 8.507059e+37
        %v3745 = vand.u32 %v3648, 2147483648
        %v3746 = vor.u32 1.1754944e-38, %v3745
        %v3747 = vsel %vm3744, %v3746, %v3742
        %v3748 = vmul.f32 1.0, %v3747
        %v3749 = vrcp.pop %v3649
        %v3750 = vmul.f32 %v3649, %v3749
        %v3751 = vsub.f32 1.0, %v3750
        %v3752 = vmul.f32 %v3749, %v3751
        %v3753 = vadd.f32 %v3749, %v3752
        %vm3754 = vweird.f32 %v3649
        %vm3755 = vweird.f32 %v3749
        %vm3756 = vmor %vm3754, %vm3755
        %v3757 = vsel %vm3756, %v3749, %v3753
        %v3758 = vand.u32 2147483647, %v3649
        %vm3759 = vcmp.eq.f32.partialorder %v3758, 8.507059e+37
        %v3760 = vand.u32 %v3649, 2147483648
        %v3761 = vor.u32 1.1754944e-38, %v3760
        %v3762 = vsel %vm3759, %v3761, %v3757
        %v3763 = vmul.f32 1.0, %v3762
        %v3764 = vrcp.pop %v3650
        %v3765 = vmul.f32 %v3650, %v3764
        %v3766 = vsub.f32 1.0, %v3765
        %v3767 = vmul.f32 %v3764, %v3766
        %v3768 = vadd.f32 %v3764, %v3767
        %vm3769 = vweird.f32 %v3650
        %vm3770 = vweird.f32 %v3764
        %vm3771 = vmor %vm3769, %vm3770
        %v3772 = vsel %vm3771, %v3764, %v3768
        %v3773 = vand.u32 2147483647, %v3650
        %vm3774 = vcmp.eq.f32.partialorder %v3773, 8.507059e+37
        %v3775 = vand.u32 %v3650, 2147483648
        %v3776 = vor.u32 1.1754944e-38, %v3775
        %v3777 = vsel %vm3774, %v3776, %v3772
        %v3778 = vmul.f32 1.0, %v3777
        %v3779 = vrcp.pop %v3651
        %v3780 = vmul.f32 %v3651, %v3779
        %v3781 = vsub.f32 1.0, %v3780
        %v3782 = vmul.f32 %v3779, %v3781
        %v3783 = vadd.f32 %v3779, %v3782
        %vm3784 = vweird.f32 %v3651
        %vm3785 = vweird.f32 %v3779
        %vm3786 = vmor %vm3784, %vm3785
        %v3787 = vsel %vm3786, %v3779, %v3783
        %v3788 = vand.u32 2147483647, %v3651
        %vm3789 = vcmp.eq.f32.partialorder %v3788, 8.507059e+37
        %v3790 = vand.u32 %v3651, 2147483648
        %v3791 = vor.u32 1.1754944e-38, %v3790
        %v3792 = vsel %vm3789, %v3791, %v3787
        %v3793 = vmul.f32 1.0, %v3792
        %v3794 = vrcp.pop %v3652
        %v3795 = vmul.f32 %v3652, %v3794
        %v3796 = vsub.f32 1.0, %v3795
        %v3797 = vmul.f32 %v3794, %v3796
        %v3798 = vadd.f32 %v3794, %v3797
        %vm3799 = vweird.f32 %v3652
        %vm3800 = vweird.f32 %v3794
        %vm3801 = vmor %vm3799, %vm3800
        %v3802 = vsel %vm3801, %v3794, %v3798
        %v3803 = vand.u32 2147483647, %v3652
        %vm3804 = vcmp.eq.f32.partialorder %v3803, 8.507059e+37
        %v3805 = vand.u32 %v3652, 2147483648
        %v3806 = vor.u32 1.1754944e-38, %v3805
        %v3807 = vsel %vm3804, %v3806, %v3802
        %v3808 = vmul.f32 1.0, %v3807
        %v3809 = vrcp.pop %v3653
        %v3810 = vmul.f32 %v3653, %v3809
        %v3811 = vsub.f32 1.0, %v3810
        %v3812 = vmul.f32 %v3809, %v3811
        %v3813 = vadd.f32 %v3809, %v3812
        %vm3814 = vweird.f32 %v3653
        %vm3815 = vweird.f32 %v3809
        %vm3816 = vmor %vm3814, %vm3815
        %v3817 = vsel %vm3816, %v3809, %v3813
        %v3818 = vand.u32 2147483647, %v3653
        %vm3819 = vcmp.eq.f32.partialorder %v3818, 8.507059e+37
        %v3820 = vand.u32 %v3653, 2147483648
        %v3821 = vor.u32 1.1754944e-38, %v3820
        %v3822 = vsel %vm3819, %v3821, %v3817
        %v3823 = vmul.f32 1.0, %v3822
        %v3824 = vrcp.pop %v3654
        %v3825 = vmul.f32 %v3654, %v3824
        %v3826 = vsub.f32 1.0, %v3825
        %v3827 = vmul.f32 %v3824, %v3826
        %v3828 = vadd.f32 %v3824, %v3827
        %vm3829 = vweird.f32 %v3654
        %vm3830 = vweird.f32 %v3824
        %vm3831 = vmor %vm3829, %vm3830
        %v3832 = vsel %vm3831, %v3824, %v3828
        %v3833 = vand.u32 2147483647, %v3654
        %vm3834 = vcmp.eq.f32.partialorder %v3833, 8.507059e+37
        %v3835 = vand.u32 %v3654, 2147483648
        %v3836 = vor.u32 1.1754944e-38, %v3835
        %v3837 = vsel %vm3834, %v3836, %v3832
        %v3838 = vmul.f32 1.0, %v3837
        %v3839 = vrcp.pop %v3655
        %v3840 = vmul.f32 %v3655, %v3839
        %v3841 = vsub.f32 1.0, %v3840
        %v3842 = vmul.f32 %v3839, %v3841
        %v3843 = vadd.f32 %v3839, %v3842
        %vm3844 = vweird.f32 %v3655
        %vm3845 = vweird.f32 %v3839
        %vm3846 = vmor %vm3844, %vm3845
        %v3847 = vsel %vm3846, %v3839, %v3843
        %v3848 = vand.u32 2147483647, %v3655
        %vm3849 = vcmp.eq.f32.partialorder %v3848, 8.507059e+37
        %v3850 = vand.u32 %v3655, 2147483648
        %v3851 = vor.u32 1.1754944e-38, %v3850
        %v3852 = vsel %vm3849, %v3851, %v3847
        %v3853 = vmul.f32 1.0, %v3852
        %v3854 = vrcp.pop %v3656
        %v3855 = vmul.f32 %v3656, %v3854
        %v3856 = vsub.f32 1.0, %v3855
        %v3857 = vmul.f32 %v3854, %v3856
        %v3858 = vadd.f32 %v3854, %v3857
        %vm3859 = vweird.f32 %v3656
        %vm3860 = vweird.f32 %v3854
        %vm3861 = vmor %vm3859, %vm3860
        %v3862 = vsel %vm3861, %v3854, %v3858
        %v3863 = vand.u32 2147483647, %v3656
        %vm3864 = vcmp.eq.f32.partialorder %v3863, 8.507059e+37
        %v3865 = vand.u32 %v3656, 2147483648
        %v3866 = vor.u32 1.1754944e-38, %v3865
        %v3867 = vsel %vm3864, %v3866, %v3862
        %v3868 = vmul.f32 1.0, %v3867
        %v3869 = vrcp.pop %v3657
        %v3870 = vmul.f32 %v3657, %v3869
        %v3871 = vsub.f32 1.0, %v3870
        %v3872 = vmul.f32 %v3869, %v3871
        %v3873 = vadd.f32 %v3869, %v3872
        %vm3874 = vweird.f32 %v3657
        %vm3875 = vweird.f32 %v3869
        %vm3876 = vmor %vm3874, %vm3875
        %v3877 = vsel %vm3876, %v3869, %v3873
        %v3878 = vand.u32 2147483647, %v3657
        %vm3879 = vcmp.eq.f32.partialorder %v3878, 8.507059e+37
        %v3880 = vand.u32 %v3657, 2147483648
        %v3881 = vor.u32 1.1754944e-38, %v3880
        %v3882 = vsel %vm3879, %v3881, %v3877
        %v3883 = vmul.f32 1.0, %v3882
        %v3884 = vrcp.pop %v3658
        %v3885 = vmul.f32 %v3658, %v3884
        %v3886 = vsub.f32 1.0, %v3885
        %v3887 = vmul.f32 %v3884, %v3886
        %v3888 = vadd.f32 %v3884, %v3887
        %vm3889 = vweird.f32 %v3658
        %vm3890 = vweird.f32 %v3884
        %vm3891 = vmor %vm3889, %vm3890
        %v3892 = vsel %vm3891, %v3884, %v3888
        %v3893 = vand.u32 2147483647, %v3658
        %vm3894 = vcmp.eq.f32.partialorder %v3893, 8.507059e+37
        %v3895 = vand.u32 %v3658, 2147483648
        %v3896 = vor.u32 1.1754944e-38, %v3895
        %v3897 = vsel %vm3894, %v3896, %v3892
        %v3898 = vmul.f32 1.0, %v3897
        %v3899 = vld [vmem:[%s208] sm:$0xff]
        %v3900 = vld [vmem:[%s208 + $0x8] sm:$0xff]
        %v3901 = vld [vmem:[%s208 + $0x10] sm:$0xff]
        %v3902 = vld [vmem:[%s208 + $0x18] sm:$0xff]
        %v3903 = vld [vmem:[%s208 + $0x20] sm:$0xff]
        %v3904 = vld [vmem:[%s208 + $0x28] sm:$0xff]
        %v3905 = vld [vmem:[%s208 + $0x30] sm:$0xff]
        %v3906 = vld [vmem:[%s208 + $0x38] sm:$0xff]
        %v3907 = vld [vmem:[%s208 + $0x40] sm:$0xff]
        %v3908 = vld [vmem:[%s208 + $0x48] sm:$0xff]
        %v3909 = vld [vmem:[%s208 + $0x50] sm:$0xff]
        %v3910 = vld [vmem:[%s208 + $0x58] sm:$0xff]
        %v3911 = vld [vmem:[%s208 + $0x60] sm:$0xff]
        %v3912 = vld [vmem:[%s208 + $0x68] sm:$0xff]
        %v3913 = vld [vmem:[%s208 + $0x70] sm:$0xff]
        %v3914 = vld [vmem:[%s208 + $0x78] sm:$0xff]
        %v3915 = vmul.f32 %v3899, %v3673
        %v3916 = vmul.f32 %v3900, %v3688
        %v3917 = vmul.f32 %v3901, %v3703
        %v3918 = vmul.f32 %v3902, %v3718
        %v3919 = vmul.f32 %v3903, %v3733
        %v3920 = vmul.f32 %v3904, %v3748
        %v3921 = vmul.f32 %v3905, %v3763
        %v3922 = vmul.f32 %v3906, %v3778
        %v3923 = vmul.f32 %v3907, %v3793
        %v3924 = vmul.f32 %v3908, %v3808
        %v3925 = vmul.f32 %v3909, %v3823
        %v3926 = vmul.f32 %v3910, %v3838
        %v3927 = vmul.f32 %v3911, %v3853
        %v3928 = vmul.f32 %v3912, %v3868
        %v3929 = vmul.f32 %v3913, %v3883
        %v3930 = vmul.f32 %v3914, %v3898
        %3931 = vst [vmem:[%s204] sm:$0xff] %v3915
        %3932 = vst [vmem:[%s204 + $0x8] sm:$0xff] %v3916
        %3933 = vst [vmem:[%s204 + $0x10] sm:$0xff] %v3917
        %3934 = vst [vmem:[%s204 + $0x18] sm:$0xff] %v3918
        %3935 = vst [vmem:[%s204 + $0x20] sm:$0xff] %v3919
        %3936 = vst [vmem:[%s204 + $0x28] sm:$0xff] %v3920
        %3937 = vst [vmem:[%s204 + $0x30] sm:$0xff] %v3921
        %3938 = vst [vmem:[%s204 + $0x38] sm:$0xff] %v3922
        %3939 = vst [vmem:[%s204 + $0x40] sm:$0xff] %v3923
        %3940 = vst [vmem:[%s204 + $0x48] sm:$0xff] %v3924
        %3941 = vst [vmem:[%s204 + $0x50] sm:$0xff] %v3925
        %3942 = vst [vmem:[%s204 + $0x58] sm:$0xff] %v3926
        %3943 = vst [vmem:[%s204 + $0x60] sm:$0xff] %v3927
        %3944 = vst [vmem:[%s204 + $0x68] sm:$0xff] %v3928
        %3945 = vst [vmem:[%s204 + $0x70] sm:$0xff] %v3929
        %3946 = vst [vmem:[%s204 + $0x78] sm:$0xff] %v3930
        %s3947 = sand.u32 %s109, 1
        %s3948 = scalar_lea.sflag [#allocation5], %s3947
        %s3949 = sand.u32 %s109, 1
        %s3950 = smul.addr %s3949, 128
        %s3951 = scalar_lea.vmem [#allocation8], %s3950
        // Predicated region
        $region57: #{tpu_custom_call.1} parent=31 // pred_check
          %p3952 = pneg %p119
        $region58: #{tpu_custom_call.1} parent=31 // pred_check_branch
          %3954 = sbr.rel (%p3952) target = $region60
        $region59: #{tpu_custom_call.1} parent=31 // pred_region
          %s3955 = smul.u32 8, %s24
          %3957 = vsyncadd %s3948, 0
          %s3958 = smul.addr %s3955, 2
          %s3959 = smul.addr %s23, 32
          %s3960 = sadd.s32 %s3958, %s3959
          %s3961 = smul.addr %s3960, 8
          %s3962 = scalar_lea.hbm %s3, %s3961
          %s3963 = sshll.u32 %s3951, 4
          %s3964 = int_to_ptr.vmem [resolvable:$true] %s3963
          %s3965 = sshll.u32 %s3962, 4
          %s3966 = int_to_ptr.hbm [resolvable:$true] %s3965
          %3971 = dma.vmem_to_hbm [thread:$0]  %s3964, 2048, %s3966, %s3948, 128, 128, 8
        $region60: #{tpu_custom_call.1} parent=31 // pred_fallthru
          _
      $region32: #{tpu_custom_call.1} parent=5 // pred_fallthru
        _
      %p3972 = scmp.le.s32.totalorder 2, %s14
      // Predicated region
      $region61: #{tpu_custom_call.1} parent=5 // pred_check
        %p3973 = pneg %p3972
      $region62: #{tpu_custom_call.1} parent=5 // pred_check_branch
        %3975 = sbr.rel (%p3973) target = $region64
      $region63: #{tpu_custom_call.1} parent=5 // pred_region
        %s3976 = ssub.s32 %s14, 2
        // Predicated region
        $region65: #{tpu_custom_call.1} parent=63 // pred_check
          %p3977 = pneg %p125
        $region66: #{tpu_custom_call.1} parent=63 // pred_check_branch
          %3979 = sbr.rel (%p3977) target = $region68
        $region67: #{tpu_custom_call.1} parent=63 // pred_region
          %s3980 = sand.u32 %s110, 1
          %s3981 = scalar_lea.sflag [#allocation5], %s3980
          %s3982 = sand.u32 %s110, 1
          %s3983 = smul.addr %s3982, 128
          %s3984 = scalar_lea.vmem [#allocation8], %s3983
          %3986 = dma.done %s3981, 2048
        $region68: #{tpu_custom_call.1} parent=63 // pred_fallthru
          _
      $region64: #{tpu_custom_call.1} parent=5 // pred_fallthru
        _
    $region6: #{tpu_custom_call.1} parent=1 // loop_footer
      %s18 = sadd.s32 1, %s14
    $region7: #{tpu_custom_call.1} parent=1 // loop_footer_branch
      %13 = sbr.rel target = $region3
    $region8: #{tpu_custom_call.1} parent=1 // loop_exit
      _
    %3987 = vsyncpa [#allocation4], 1
    %s3988 = scalar_lea.sflag [#allocation4], 1
    %3989 = vsyncpa %s3988, 1
    %3990 = vsyncpa [#allocation7], 1
    %3991 = vsyncpa [#allocation5], 1
    %s3992 = scalar_lea.sflag [#allocation5], 1
    %3993 = vsyncpa %s3992, 1

</llo_original>
